<compile_context>
chip_gen: v7x
topology: tpu7x:2x2x1
jax: 0.10.0
libtpu: 0.0.40
codegen_flags: <defaults>
</compile_context>

<pallas_src>
import functools

import jax
import jax.numpy as jnp
from jax.experimental import pallas as pl
from jax.experimental.pallas import tpu as pltpu


# ----------------------------------------------------------------------------
# Pallas kernels
# ----------------------------------------------------------------------------
def _conv1_kernel(p_ref, w_ref, b_ref, o_ref):
    # conv1 as GEMM over im2col patches; bias + ReLU fused.  bf16 operands,
    # f32 accumulation, bf16 output (halves intermediate HBM traffic).
    y = jnp.dot(p_ref[...], w_ref[...], preferred_element_type=jnp.float32)
    y = jnp.maximum(y + b_ref[...], 0.0)
    o_ref[...] = y.astype(o_ref.dtype)


def pallas_conv1(patches, w, b):
    """patches: [M, K] bf16, w: [K, N] bf16, b: [1, N] f32 -> [M, N] bf16."""
    M, K = patches.shape
    _, N = w.shape
    return pl.pallas_call(
        _conv1_kernel,
        out_shape=jax.ShapeDtypeStruct((M, N), jnp.bfloat16),
        grid=(1,),
        in_specs=[
            pl.BlockSpec((M, K), lambda i: (0, 0)),
            pl.BlockSpec((K, N), lambda i: (0, 0)),
            pl.BlockSpec((1, N), lambda i: (0, 0)),
        ],
        out_specs=pl.BlockSpec((M, N), lambda i: (0, 0)),
        compiler_params=pltpu.CompilerParams(
            dimension_semantics=("arbitrary",)),
    )(patches, w, b)


def _fused_tail_kernel(p2_ref, w2_ref, b2_ref, fcw_ref, fcb_ref,
                       m1w_ref, m1b_ref, m2w_ref, m2b_ref, m3w_ref, m3b_ref,
                       s1w_ref, s1b_ref, s2w_ref, s2b_ref,
                       mean_ref, std_ref, *, b_pad, n_patch, c2dim):
    # ---- conv2 GEMM (bias + ReLU fused), all output positions at once ------
    c2 = jnp.dot(p2_ref[...], w2_ref[...], preferred_element_type=jnp.float32)
    c2 = jnp.maximum(c2 + b2_ref[...], 0.0)            # [n_patch*b_pad, C2] f32

    # ---- fc layer -----------------------------------------------------------
    # The NCHW flatten between conv2 and fc is folded into the row ordering of
    # fcw (rows = p*C2 + c), so fc is accumulated per conv2 output position p.
    # Rows of c2 are patch-major (p*b_pad + b) with b_pad a multiple of 8, so
    # every slice below is tile-aligned.
    feat = None
    for p in range(n_patch):
        lhs = c2[p * b_pad:(p + 1) * b_pad, :].astype(jnp.bfloat16)
        rhs = fcw_ref[p * c2dim:(p + 1) * c2dim, :]
        part = jnp.dot(lhs, rhs, preferred_element_type=jnp.float32)
        feat = part if feat is None else feat + part
    feat = jnp.maximum(feat + fcb_ref[...], 0.0).astype(jnp.bfloat16)  # [b_pad, F]

    def dense(x, w_ref, b_ref, relu):
        y = jnp.dot(x, w_ref[...], preferred_element_type=jnp.float32)
        y = y + b_ref[...]
        if relu:
            y = jnp.maximum(y, 0.0)
        return y

    # ---- mean head ----------------------------------------------------------
    m = dense(feat, m1w_ref, m1b_ref, True).astype(jnp.bfloat16)
    m = dense(m, m2w_ref, m2b_ref, True).astype(jnp.bfloat16)
    m = dense(m, m3w_ref, m3b_ref, True)                       # [b_pad, A] f32

    # ---- log_std head -------------------------------------------------------
    s = dense(feat, s1w_ref, s1b_ref, True).astype(jnp.bfloat16)
    s = dense(s, s2w_ref, s2b_ref, False)                      # [b_pad, A] f32

    # ---- tanh / sigmoid / clamp / exp (EUP; essentially free while fused) ---
    col = jax.lax.broadcasted_iota(jnp.int32, m.shape, 1)
    mean_ref[...] = jnp.where(col == 0, jnp.tanh(m), jax.nn.sigmoid(m))
    std_ref[...] = jnp.exp(jnp.clip(s, -20.0, 2.0))


def pallas_fused_tail(p2, kp, *, b_pad, n_patch):
    """p2: [n_patch*b_pad, C1*k*k] bf16 (patch-major rows) -> (mean, std)."""
    c2dim = kp["w2"].shape[1]
    action_dim = kp["m3w"].shape[1]
    kernel = functools.partial(_fused_tail_kernel, b_pad=b_pad,
                               n_patch=n_patch, c2dim=c2dim)
    args = (p2, kp["w2"], kp["b2"], kp["fcw"], kp["fcb"],
            kp["m1w"], kp["m1b"], kp["m2w"], kp["m2b"], kp["m3w"], kp["m3b"],
            kp["s1w"], kp["s1b"], kp["s2w"], kp["s2b"])

    def full(shape):
        return pl.BlockSpec(shape, lambda i: (0, 0))

    return pl.pallas_call(
        kernel,
        out_shape=(
            jax.ShapeDtypeStruct((b_pad, action_dim), jnp.float32),
            jax.ShapeDtypeStruct((b_pad, action_dim), jnp.float32),
        ),
        grid=(1,),
        in_specs=[full(a.shape) for a in args],
        out_specs=[full((b_pad, action_dim)), full((b_pad, action_dim))],
        compiler_params=pltpu.CompilerParams(
            dimension_semantics=("arbitrary",)),
    )(*args)


# ----------------------------------------------------------------------------
# Plain-JAX glue: im2col (reshape / strided slicing only, no heavy compute)
# ----------------------------------------------------------------------------
def im2col(x_nchw, k, stride, pad):
    B, C, H, W = x_nchw.shape
    x = jnp.pad(x_nchw, ((0, 0), (0, 0), (pad, pad), (pad, pad)))
    Ho = (H + 2 * pad - k) // stride + 1
    Wo = (W + 2 * pad - k) // stride + 1
    patches = []
    for i in range(k):
        for j in range(k):
            patches.append(
                x[:, :, i:i + Ho * stride:stride, j:j + Wo * stride:stride])
    # column index = c*(k*k) + kh*k + kw  (matches PyTorch (Cout,Cin,kh,kw))
    p = jnp.stack(patches, axis=2)
    p = p.transpose(0, 3, 4, 1, 2).reshape(B * Ho * Wo, C * k * k)
    return p, Ho, Wo


# ----------------------------------------------------------------------------
# One-time parameter preparation (done outside the per-call forward)
# ----------------------------------------------------------------------------
def prepare_kernel_params(params):
    """PyTorch-layout f32 params -> kernel layout: [K, N] bf16 weights,
    [1, N] f32 biases, conv weights flattened, and the NCHW flatten
    permutation between conv2 and fc folded into the fc weight rows."""
    cdt = jnp.bfloat16
    c1o = params["conv1_w"].shape[0]
    c2o = params["conv2_w"].shape[0]
    feat_dim, flat = params["fc_w"].shape
    hw = flat // c2o                    # number of conv2 output positions

    # fc flat index = c*hw + p (NCHW); kernel wants rows ordered p*C2 + c.
    fcw = params["fc_w"].reshape(feat_dim, c2o, hw)            # [N, c, p]
    fcw = fcw.transpose(2, 1, 0).reshape(hw * c2o, feat_dim)   # [p*C2 + c, N]

    def w2d(w):   # PyTorch [out, in] -> [in, out], bf16
        return w.T.astype(cdt)

    def b2d(b):
        return b.reshape(1, -1).astype(jnp.float32)

    return {
        "w1": params["conv1_w"].reshape(c1o, -1).T.astype(cdt),
        "b1": b2d(params["conv1_b"]),
        "w2": params["conv2_w"].reshape(c2o, -1).T.astype(cdt),
        "b2": b2d(params["conv2_b"]),
        "fcw": fcw.astype(cdt), "fcb": b2d(params["fc_b"]),
        "m1w": w2d(params["m1_w"]), "m1b": b2d(params["m1_b"]),
        "m2w": w2d(params["m2_w"]), "m2b": b2d(params["m2_b"]),
        "m3w": w2d(params["m3_w"]), "m3b": b2d(params["m3_b"]),
        "s1w": w2d(params["s1_w"]), "s1b": b2d(params["s1_b"]),
        "s2w": w2d(params["s2_w"]), "s2b": b2d(params["s2_b"]),
    }


def make_params(key, feature_dim=512, action_dim=3, hidden_dim=256,
                input_channels=12, spatial=16):
    def nrm(key, shape, scale):
        return (scale * jax.random.normal(key, shape)).astype(jnp.float32)

    ks = jax.random.split(key, 16)
    s4 = spatial // 4
    flat = 64 * s4 * s4
    return {
        "conv1_w": nrm(ks[0], (32, input_channels, 3, 3), 0.05),
        "conv1_b": jnp.zeros((32,), jnp.float32),
        "conv2_w": nrm(ks[1], (64, 32, 3, 3), 0.05),
        "conv2_b": jnp.zeros((64,), jnp.float32),
        "fc_w": nrm(ks[2], (feature_dim, flat), 0.02),           # PyTorch [out, in]
        "fc_b": jnp.zeros((feature_dim,), jnp.float32),
        "m1_w": nrm(ks[3], (hidden_dim, feature_dim), 0.05),
        "m1_b": jnp.zeros((hidden_dim,), jnp.float32),
        "m2_w": nrm(ks[4], (hidden_dim, hidden_dim), 0.05),
        "m2_b": jnp.zeros((hidden_dim,), jnp.float32),
        "m3_w": nrm(ks[5], (action_dim, hidden_dim), 0.05),
        "m3_b": jnp.zeros((action_dim,), jnp.float32),
        "s1_w": nrm(ks[6], (hidden_dim, feature_dim), 0.05),
        "s1_b": jnp.zeros((hidden_dim,), jnp.float32),
        "s2_w": nrm(ks[7], (action_dim, hidden_dim), 0.05),
        "s2_b": jnp.zeros((action_dim,), jnp.float32),
    }


# ----------------------------------------------------------------------------
# Forward pass (mirrors PolicyNetwork.forward)
# ----------------------------------------------------------------------------
def policy_forward(kparams, state_nchw):
    B = state_nchw.shape[0]
    b_pad = max(8, ((B + 7) // 8) * 8)      # sublane-align the batch

    # conv1: im2col glue + Pallas GEMM (bias + ReLU fused).
    p1, H1, W1 = im2col(state_nchw, k=3, stride=2, pad=1)
    y1 = pallas_conv1(p1.astype(jnp.bfloat16), kparams["w1"], kparams["b1"])

    # conv2 patch extraction (layout-only glue).  Rows become patch-major
    # (p * b_pad + b) with the batch zero-padded to b_pad so the fused kernel
    # slices them at aligned static offsets.
    C1 = y1.shape[-1]
    x1 = y1.reshape(B, H1, W1, C1).transpose(0, 3, 1, 2)         # NCHW
    p2, H2, W2 = im2col(x1, k=3, stride=2, pad=1)                # [B*H2*W2, C1*9]
    P = H2 * W2
    p2 = p2.reshape(B, P, C1 * 9)
    p2 = jnp.pad(p2, ((0, b_pad - B), (0, 0), (0, 0)))
    p2 = p2.transpose(1, 0, 2).reshape(P * b_pad, C1 * 9)

    # Fused: conv2 GEMM -> fc -> mean head -> log_std head -> postprocess.
    mean, std = pallas_fused_tail(p2, kparams, b_pad=b_pad, n_patch=P)
    return mean[:B], std[:B]


# ----------------------------------------------------------------------------
# Reference (pure f32 plain JAX) for a sanity check
# ----------------------------------------------------------------------------
def policy_forward_ref(params, state_nchw):
    def conv(x, w, b):
        y = jax.lax.conv_general_dilated(
            x, w, window_strides=(2, 2), padding=((1, 1), (1, 1)),
            dimension_numbers=("NCHW", "OIHW", "NCHW"))
        return jax.nn.relu(y + b[None, :, None, None])

    B = state_nchw.shape[0]
    h = conv(state_nchw, params["conv1_w"], params["conv1_b"])
    h = conv(h, params["conv2_w"], params["conv2_b"]).reshape(B, -1)
    feat = jax.nn.relu(h @ params["fc_w"].T + params["fc_b"])
    m = jax.nn.relu(feat @ params["m1_w"].T + params["m1_b"])
    m = jax.nn.relu(m @ params["m2_w"].T + params["m2_b"])
    m = jax.nn.relu(m @ params["m3_w"].T + params["m3_b"])
    s = jax.nn.relu(feat @ params["s1_w"].T + params["s1_b"])
    s = s @ params["s2_w"].T + params["s2_b"]
    mean = jnp.concatenate(
        [jnp.tanh(m[:, 0:1]), jax.nn.sigmoid(m[:, 1:3])], axis=1)
    std = jnp.exp(jnp.clip(s, -20.0, 2.0))
    return mean, std


if __name__ == "__main__":
    key = jax.random.PRNGKey(0)
    pkey, xkey = jax.random.split(key)

    B, C, H, W = 2, 12, 16, 16
    params = make_params(pkey, spatial=H)
    kparams = prepare_kernel_params(params)     # one-time layout/dtype prep
    state = jax.random.normal(xkey, (B, C, H, W), dtype=jnp.float32)

    fwd = jax.jit(policy_forward)
    mean, std = jax.block_until_ready(fwd(kparams, state))
    mean_ref, std_ref = policy_forward_ref(params, state)

    assert mean.shape == (B, 3) and std.shape == (B, 3)
    # Kernel path uses bf16 MXU operands (f32 accumulation); compare against
    # the pure-f32 reference with a bf16-appropriate tolerance.
    assert jnp.allclose(mean, mean_ref, atol=5e-2, rtol=5e-2)
    assert jnp.allclose(std, std_ref, atol=5e-2, rtol=5e-2)

    print("KERNEL_OK")
</pallas_src>

<mosaic_0001>
module attributes {stable_mosaic.version = 11 : i64} {
  func.func @_conv1_kernel(%arg0: i32, %arg1: memref<128x108xbf16, #tpu.memory_space<vmem>>, %arg2: memref<108x32xbf16, #tpu.memory_space<vmem>>, %arg3: memref<1x32xf32, #tpu.memory_space<vmem>>, %arg4: memref<128x32xbf16, #tpu.memory_space<vmem>>) attributes {dimension_semantics = [#tpu.dimension_semantics<arbitrary>], iteration_bounds = array<i64: 1>, scalar_prefetch = 0 : i64, scratch_operands = 0 : i64, tpu.core_type = #tpu.core_type<tc>, window_params = [{pipeline_mode = #tpu.pipeline_mode<synchronous>, transform_indices = @transform_0, window_bounds = array<i64: 128, 108>}, {pipeline_mode = #tpu.pipeline_mode<synchronous>, transform_indices = @transform_1, window_bounds = array<i64: 108, 32>}, {pipeline_mode = #tpu.pipeline_mode<synchronous>, transform_indices = @transform_2, window_bounds = array<i64: 1, 32>}, {pipeline_mode = #tpu.pipeline_mode<synchronous>, transform_indices = @transform_3, window_bounds = array<i64: 128, 32>}]} {
    %c0 = arith.constant 0 : index
    %c0_0 = arith.constant 0 : index
    %0 = vector.load %arg1[%c0, %c0_0] : memref<128x108xbf16, #tpu.memory_space<vmem>>, vector<128x108xbf16>
    %c0_1 = arith.constant 0 : index
    %c0_2 = arith.constant 0 : index
    %1 = vector.load %arg2[%c0_1, %c0_2] : memref<108x32xbf16, #tpu.memory_space<vmem>>, vector<108x32xbf16>
    %cst = arith.constant dense<0.000000e+00> : vector<128x32xf32>
    %2 = tpu.matmul %0, %1, %cst {dimension_numbers = #tpu.dot_dimension_numbers<[1], [0], [0], [1], [0, 0, 1, 1], [], []>} : vector<128x108xbf16>, vector<108x32xbf16>, vector<128x32xf32> -> vector<128x32xf32>
    %c0_3 = arith.constant 0 : index
    %c0_4 = arith.constant 0 : index
    %3 = vector.load %arg3[%c0_3, %c0_4] : memref<1x32xf32, #tpu.memory_space<vmem>>, vector<1x32xf32>
    %4 = vector.broadcast %3 : vector<1x32xf32> to vector<128x32xf32>
    %5 = arith.addf %2, %4 : vector<128x32xf32>
    %cst_5 = arith.constant 0.000000e+00 : f32
    %6 = vector.broadcast %cst_5 : f32 to vector<128x32xf32>
    %7 = arith.maximumf %5, %6 : vector<128x32xf32>
    %8 = arith.truncf %7 : vector<128x32xf32> to vector<128x32xbf16>
    %c0_6 = arith.constant 0 : index
    %c0_7 = arith.constant 0 : index
    %9 = vector.load %arg4[%c0_6, %c0_7] : memref<128x32xbf16, #tpu.memory_space<vmem>>, vector<128x32xbf16>
    tpu.vector_store %arg4[%c0_6, %c0_7], %8 {strides = array<i32>} : memref<128x32xbf16, #tpu.memory_space<vmem>>, vector<128x32xbf16>,
    return
  }
  func.func @transform_0(%arg0: i32) -> (i32, i32) {
    %c0_i32 = arith.constant 0 : i32
    %c0_i32_0 = arith.constant 0 : i32
    %c0_i32_1 = arith.constant 0 : i32
    return %c0_i32, %c0_i32_0 : i32, i32
  }
  func.func @transform_1(%arg0: i32) -> (i32, i32) {
    %c0_i32 = arith.constant 0 : i32
    %c0_i32_0 = arith.constant 0 : i32
    %c0_i32_1 = arith.constant 0 : i32
    return %c0_i32, %c0_i32_0 : i32, i32
  }
  func.func @transform_2(%arg0: i32) -> (i32, i32) {
    %c0_i32 = arith.constant 0 : i32
    %c0_i32_0 = arith.constant 0 : i32
    %c0_i32_1 = arith.constant 0 : i32
    return %c0_i32, %c0_i32_0 : i32, i32
  }
  func.func @transform_3(%arg0: i32) -> (i32, i32) {
    %c0_i32 = arith.constant 0 : i32
    %c0_i32_0 = arith.constant 0 : i32
    %c0_i32_1 = arith.constant 0 : i32
    return %c0_i32, %c0_i32_0 : i32, i32
  }
}

module attributes {stable_mosaic.version = 11 : i64} {
  func.func @_fused_tail_kernel(%arg0: i32, %arg1: memref<128x288xbf16, #tpu.memory_space<vmem>>, %arg2: memref<288x64xbf16, #tpu.memory_space<vmem>>, %arg3: memref<1x64xf32, #tpu.memory_space<vmem>>, %arg4: memref<1024x512xbf16, #tpu.memory_space<vmem>>, %arg5: memref<1x512xf32, #tpu.memory_space<vmem>>, %arg6: memref<512x256xbf16, #tpu.memory_space<vmem>>, %arg7: memref<1x256xf32, #tpu.memory_space<vmem>>, %arg8: memref<256x256xbf16, #tpu.memory_space<vmem>>, %arg9: memref<1x256xf32, #tpu.memory_space<vmem>>, %arg10: memref<256x3xbf16, #tpu.memory_space<vmem>>, %arg11: memref<1x3xf32, #tpu.memory_space<vmem>>, %arg12: memref<512x256xbf16, #tpu.memory_space<vmem>>, %arg13: memref<1x256xf32, #tpu.memory_space<vmem>>, %arg14: memref<256x3xbf16, #tpu.memory_space<vmem>>, %arg15: memref<1x3xf32, #tpu.memory_space<vmem>>, %arg16: memref<8x3xf32, #tpu.memory_space<vmem>>, %arg17: memref<8x3xf32, #tpu.memory_space<vmem>>) attributes {dimension_semantics = [#tpu.dimension_semantics<arbitrary>], iteration_bounds = array<i64: 1>, scalar_prefetch = 0 : i64, scratch_operands = 0 : i64, tpu.core_type = #tpu.core_type<tc>, window_params = [{pipeline_mode = #tpu.pipeline_mode<synchronous>, transform_indices = @transform_0, window_bounds = array<i64: 128, 288>}, {pipeline_mode = #tpu.pipeline_mode<synchronous>, transform_indices = @transform_1, window_bounds = array<i64: 288, 64>}, {pipeline_mode = #tpu.pipeline_mode<synchronous>, transform_indices = @transform_2, window_bounds = array<i64: 1, 64>}, {pipeline_mode = #tpu.pipeline_mode<synchronous>, transform_indices = @transform_3, window_bounds = array<i64: 1024, 512>}, {pipeline_mode = #tpu.pipeline_mode<synchronous>, transform_indices = @transform_4, window_bounds = array<i64: 1, 512>}, {pipeline_mode = #tpu.pipeline_mode<synchronous>, transform_indices = @transform_5, window_bounds = array<i64: 512, 256>}, {pipeline_mode = #tpu.pipeline_mode<synchronous>, transform_indices = @transform_6, window_bounds = array<i64: 1, 256>}, {pipeline_mode = #tpu.pipeline_mode<synchronous>, transform_indices = @transform_7, window_bounds = array<i64: 256, 256>}, {pipeline_mode = #tpu.pipeline_mode<synchronous>, transform_indices = @transform_8, window_bounds = array<i64: 1, 256>}, {pipeline_mode = #tpu.pipeline_mode<synchronous>, transform_indices = @transform_9, window_bounds = array<i64: 256, 3>}, {pipeline_mode = #tpu.pipeline_mode<synchronous>, transform_indices = @transform_10, window_bounds = array<i64: 1, 3>}, {pipeline_mode = #tpu.pipeline_mode<synchronous>, transform_indices = @transform_11, window_bounds = array<i64: 512, 256>}, {pipeline_mode = #tpu.pipeline_mode<synchronous>, transform_indices = @transform_12, window_bounds = array<i64: 1, 256>}, {pipeline_mode = #tpu.pipeline_mode<synchronous>, transform_indices = @transform_13, window_bounds = array<i64: 256, 3>}, {pipeline_mode = #tpu.pipeline_mode<synchronous>, transform_indices = @transform_14, window_bounds = array<i64: 1, 3>}, {pipeline_mode = #tpu.pipeline_mode<synchronous>, transform_indices = @transform_15, window_bounds = array<i64: 8, 3>}, {pipeline_mode = #tpu.pipeline_mode<synchronous>, transform_indices = @transform_16, window_bounds = array<i64: 8, 3>}]} {
    %c0 = arith.constant 0 : index
    %c0_0 = arith.constant 0 : index
    %0 = vector.load %arg1[%c0, %c0_0] : memref<128x288xbf16, #tpu.memory_space<vmem>>, vector<128x288xbf16>
    %c0_1 = arith.constant 0 : index
    %c0_2 = arith.constant 0 : index
    %1 = vector.load %arg2[%c0_1, %c0_2] : memref<288x64xbf16, #tpu.memory_space<vmem>>, vector<288x64xbf16>
    %cst = arith.constant dense<0.000000e+00> : vector<128x64xf32>
    %2 = tpu.matmul %0, %1, %cst {dimension_numbers = #tpu.dot_dimension_numbers<[1], [0], [0], [1], [0, 0, 1, 1], [], []>} : vector<128x288xbf16>, vector<288x64xbf16>, vector<128x64xf32> -> vector<128x64xf32>
    %c0_3 = arith.constant 0 : index
    %c0_4 = arith.constant 0 : index
    %3 = vector.load %arg3[%c0_3, %c0_4] : memref<1x64xf32, #tpu.memory_space<vmem>>, vector<1x64xf32>
    %4 = vector.broadcast %3 : vector<1x64xf32> to vector<128x64xf32>
    %5 = arith.addf %2, %4 : vector<128x64xf32>
    %cst_5 = arith.constant 0.000000e+00 : f32
    %6 = vector.broadcast %cst_5 : f32 to vector<128x64xf32>
    %7 = arith.maximumf %5, %6 : vector<128x64xf32>
    %8 = vector.extract_strided_slice %7 {offsets = [0, 0], sizes = [8, 64], strides = [1, 1]} : vector<128x64xf32> to vector<8x64xf32>
    %9 = arith.truncf %8 : vector<8x64xf32> to vector<8x64xbf16>
    %c0_6 = arith.constant 0 : index
    %c0_7 = arith.constant 0 : index
    %10 = vector.load %arg4[%c0_6, %c0_7] : memref<1024x512xbf16, #tpu.memory_space<vmem>>, vector<64x512xbf16>
    %cst_8 = arith.constant dense<0.000000e+00> : vector<8x512xf32>
    %11 = tpu.matmul %9, %10, %cst_8 {dimension_numbers = #tpu.dot_dimension_numbers<[1], [0], [0], [1], [0, 0, 1, 1], [], []>} : vector<8x64xbf16>, vector<64x512xbf16>, vector<8x512xf32> -> vector<8x512xf32>
    %12 = vector.extract_strided_slice %7 {offsets = [8, 0], sizes = [8, 64], strides = [1, 1]} : vector<128x64xf32> to vector<8x64xf32>
    %13 = arith.truncf %12 : vector<8x64xf32> to vector<8x64xbf16>
    %c64 = arith.constant 64 : index
    %c0_9 = arith.constant 0 : index
    %14 = vector.load %arg4[%c64, %c0_9] : memref<1024x512xbf16, #tpu.memory_space<vmem>>, vector<64x512xbf16>
    %cst_10 = arith.constant dense<0.000000e+00> : vector<8x512xf32>
    %15 = tpu.matmul %13, %14, %cst_10 {dimension_numbers = #tpu.dot_dimension_numbers<[1], [0], [0], [1], [0, 0, 1, 1], [], []>} : vector<8x64xbf16>, vector<64x512xbf16>, vector<8x512xf32> -> vector<8x512xf32>
    %16 = arith.addf %11, %15 : vector<8x512xf32>
    %17 = vector.extract_strided_slice %7 {offsets = [16, 0], sizes = [8, 64], strides = [1, 1]} : vector<128x64xf32> to vector<8x64xf32>
    %18 = arith.truncf %17 : vector<8x64xf32> to vector<8x64xbf16>
    %c128 = arith.constant 128 : index
    %c0_11 = arith.constant 0 : index
    %19 = vector.load %arg4[%c128, %c0_11] : memref<1024x512xbf16, #tpu.memory_space<vmem>>, vector<64x512xbf16>
    %cst_12 = arith.constant dense<0.000000e+00> : vector<8x512xf32>
    %20 = tpu.matmul %18, %19, %cst_12 {dimension_numbers = #tpu.dot_dimension_numbers<[1], [0], [0], [1], [0, 0, 1, 1], [], []>} : vector<8x64xbf16>, vector<64x512xbf16>, vector<8x512xf32> -> vector<8x512xf32>
    %21 = arith.addf %16, %20 : vector<8x512xf32>
    %22 = vector.extract_strided_slice %7 {offsets = [24, 0], sizes = [8, 64], strides = [1, 1]} : vector<128x64xf32> to vector<8x64xf32>
    %23 = arith.truncf %22 : vector<8x64xf32> to vector<8x64xbf16>
    %c192 = arith.constant 192 : index
    %c0_13 = arith.constant 0 : index
    %24 = vector.load %arg4[%c192, %c0_13] : memref<1024x512xbf16, #tpu.memory_space<vmem>>, vector<64x512xbf16>
    %cst_14 = arith.constant dense<0.000000e+00> : vector<8x512xf32>
    %25 = tpu.matmul %23, %24, %cst_14 {dimension_numbers = #tpu.dot_dimension_numbers<[1], [0], [0], [1], [0, 0, 1, 1], [], []>} : vector<8x64xbf16>, vector<64x512xbf16>, vector<8x512xf32> -> vector<8x512xf32>
    %26 = arith.addf %21, %25 : vector<8x512xf32>
    %27 = vector.extract_strided_slice %7 {offsets = [32, 0], sizes = [8, 64], strides = [1, 1]} : vector<128x64xf32> to vector<8x64xf32>
    %28 = arith.truncf %27 : vector<8x64xf32> to vector<8x64xbf16>
    %c256 = arith.constant 256 : index
    %c0_15 = arith.constant 0 : index
    %29 = vector.load %arg4[%c256, %c0_15] : memref<1024x512xbf16, #tpu.memory_space<vmem>>, vector<64x512xbf16>
    %cst_16 = arith.constant dense<0.000000e+00> : vector<8x512xf32>
    %30 = tpu.matmul %28, %29, %cst_16 {dimension_numbers = #tpu.dot_dimension_numbers<[1], [0], [0], [1], [0, 0, 1, 1], [], []>} : vector<8x64xbf16>, vector<64x512xbf16>, vector<8x512xf32> -> vector<8x512xf32>
    %31 = arith.addf %26, %30 : vector<8x512xf32>
    %32 = vector.extract_strided_slice %7 {offsets = [40, 0], sizes = [8, 64], strides = [1, 1]} : vector<128x64xf32> to vector<8x64xf32>
    %33 = arith.truncf %32 : vector<8x64xf32> to vector<8x64xbf16>
    %c320 = arith.constant 320 : index
    %c0_17 = arith.constant 0 : index
    %34 = vector.load %arg4[%c320, %c0_17] : memref<1024x512xbf16, #tpu.memory_space<vmem>>, vector<64x512xbf16>
    %cst_18 = arith.constant dense<0.000000e+00> : vector<8x512xf32>
    %35 = tpu.matmul %33, %34, %cst_18 {dimension_numbers = #tpu.dot_dimension_numbers<[1], [0], [0], [1], [0, 0, 1, 1], [], []>} : vector<8x64xbf16>, vector<64x512xbf16>, vector<8x512xf32> -> vector<8x512xf32>
    %36 = arith.addf %31, %35 : vector<8x512xf32>
    %37 = vector.extract_strided_slice %7 {offsets = [48, 0], sizes = [8, 64], strides = [1, 1]} : vector<128x64xf32> to vector<8x64xf32>
    %38 = arith.truncf %37 : vector<8x64xf32> to vector<8x64xbf16>
    %c384 = arith.constant 384 : index
    %c0_19 = arith.constant 0 : index
    %39 = vector.load %arg4[%c384, %c0_19] : memref<1024x512xbf16, #tpu.memory_space<vmem>>, vector<64x512xbf16>
    %cst_20 = arith.constant dense<0.000000e+00> : vector<8x512xf32>
    %40 = tpu.matmul %38, %39, %cst_20 {dimension_numbers = #tpu.dot_dimension_numbers<[1], [0], [0], [1], [0, 0, 1, 1], [], []>} : vector<8x64xbf16>, vector<64x512xbf16>, vector<8x512xf32> -> vector<8x512xf32>
    %41 = arith.addf %36, %40 : vector<8x512xf32>
    %42 = vector.extract_strided_slice %7 {offsets = [56, 0], sizes = [8, 64], strides = [1, 1]} : vector<128x64xf32> to vector<8x64xf32>
    %43 = arith.truncf %42 : vector<8x64xf32> to vector<8x64xbf16>
    %c448 = arith.constant 448 : index
    %c0_21 = arith.constant 0 : index
    %44 = vector.load %arg4[%c448, %c0_21] : memref<1024x512xbf16, #tpu.memory_space<vmem>>, vector<64x512xbf16>
    %cst_22 = arith.constant dense<0.000000e+00> : vector<8x512xf32>
    %45 = tpu.matmul %43, %44, %cst_22 {dimension_numbers = #tpu.dot_dimension_numbers<[1], [0], [0], [1], [0, 0, 1, 1], [], []>} : vector<8x64xbf16>, vector<64x512xbf16>, vector<8x512xf32> -> vector<8x512xf32>
    %46 = arith.addf %41, %45 : vector<8x512xf32>
    %47 = vector.extract_strided_slice %7 {offsets = [64, 0], sizes = [8, 64], strides = [1, 1]} : vector<128x64xf32> to vector<8x64xf32>
    %48 = arith.truncf %47 : vector<8x64xf32> to vector<8x64xbf16>
    %c512 = arith.constant 512 : index
    %c0_23 = arith.constant 0 : index
    %49 = vector.load %arg4[%c512, %c0_23] : memref<1024x512xbf16, #tpu.memory_space<vmem>>, vector<64x512xbf16>
    %cst_24 = arith.constant dense<0.000000e+00> : vector<8x512xf32>
    %50 = tpu.matmul %48, %49, %cst_24 {dimension_numbers = #tpu.dot_dimension_numbers<[1], [0], [0], [1], [0, 0, 1, 1], [], []>} : vector<8x64xbf16>, vector<64x512xbf16>, vector<8x512xf32> -> vector<8x512xf32>
    %51 = arith.addf %46, %50 : vector<8x512xf32>
    %52 = vector.extract_strided_slice %7 {offsets = [72, 0], sizes = [8, 64], strides = [1, 1]} : vector<128x64xf32> to vector<8x64xf32>
    %53 = arith.truncf %52 : vector<8x64xf32> to vector<8x64xbf16>
    %c576 = arith.constant 576 : index
    %c0_25 = arith.constant 0 : index
    %54 = vector.load %arg4[%c576, %c0_25] : memref<1024x512xbf16, #tpu.memory_space<vmem>>, vector<64x512xbf16>
    %cst_26 = arith.constant dense<0.000000e+00> : vector<8x512xf32>
    %55 = tpu.matmul %53, %54, %cst_26 {dimension_numbers = #tpu.dot_dimension_numbers<[1], [0], [0], [1], [0, 0, 1, 1], [], []>} : vector<8x64xbf16>, vector<64x512xbf16>, vector<8x512xf32> -> vector<8x512xf32>
    %56 = arith.addf %51, %55 : vector<8x512xf32>
    %57 = vector.extract_strided_slice %7 {offsets = [80, 0], sizes = [8, 64], strides = [1, 1]} : vector<128x64xf32> to vector<8x64xf32>
    %58 = arith.truncf %57 : vector<8x64xf32> to vector<8x64xbf16>
    %c640 = arith.constant 640 : index
    %c0_27 = arith.constant 0 : index
    %59 = vector.load %arg4[%c640, %c0_27] : memref<1024x512xbf16, #tpu.memory_space<vmem>>, vector<64x512xbf16>
    %cst_28 = arith.constant dense<0.000000e+00> : vector<8x512xf32>
    %60 = tpu.matmul %58, %59, %cst_28 {dimension_numbers = #tpu.dot_dimension_numbers<[1], [0], [0], [1], [0, 0, 1, 1], [], []>} : vector<8x64xbf16>, vector<64x512xbf16>, vector<8x512xf32> -> vector<8x512xf32>
    %61 = arith.addf %56, %60 : vector<8x512xf32>
    %62 = vector.extract_strided_slice %7 {offsets = [88, 0], sizes = [8, 64], strides = [1, 1]} : vector<128x64xf32> to vector<8x64xf32>
    %63 = arith.truncf %62 : vector<8x64xf32> to vector<8x64xbf16>
    %c704 = arith.constant 704 : index
    %c0_29 = arith.constant 0 : index
    %64 = vector.load %arg4[%c704, %c0_29] : memref<1024x512xbf16, #tpu.memory_space<vmem>>, vector<64x512xbf16>
    %cst_30 = arith.constant dense<0.000000e+00> : vector<8x512xf32>
    %65 = tpu.matmul %63, %64, %cst_30 {dimension_numbers = #tpu.dot_dimension_numbers<[1], [0], [0], [1], [0, 0, 1, 1], [], []>} : vector<8x64xbf16>, vector<64x512xbf16>, vector<8x512xf32> -> vector<8x512xf32>
    %66 = arith.addf %61, %65 : vector<8x512xf32>
    %67 = vector.extract_strided_slice %7 {offsets = [96, 0], sizes = [8, 64], strides = [1, 1]} : vector<128x64xf32> to vector<8x64xf32>
    %68 = arith.truncf %67 : vector<8x64xf32> to vector<8x64xbf16>
    %c768 = arith.constant 768 : index
    %c0_31 = arith.constant 0 : index
    %69 = vector.load %arg4[%c768, %c0_31] : memref<1024x512xbf16, #tpu.memory_space<vmem>>, vector<64x512xbf16>
    %cst_32 = arith.constant dense<0.000000e+00> : vector<8x512xf32>
    %70 = tpu.matmul %68, %69, %cst_32 {dimension_numbers = #tpu.dot_dimension_numbers<[1], [0], [0], [1], [0, 0, 1, 1], [], []>} : vector<8x64xbf16>, vector<64x512xbf16>, vector<8x512xf32> -> vector<8x512xf32>
    %71 = arith.addf %66, %70 : vector<8x512xf32>
    %72 = vector.extract_strided_slice %7 {offsets = [104, 0], sizes = [8, 64], strides = [1, 1]} : vector<128x64xf32> to vector<8x64xf32>
    %73 = arith.truncf %72 : vector<8x64xf32> to vector<8x64xbf16>
    %c832 = arith.constant 832 : index
    %c0_33 = arith.constant 0 : index
    %74 = vector.load %arg4[%c832, %c0_33] : memref<1024x512xbf16, #tpu.memory_space<vmem>>, vector<64x512xbf16>
    %cst_34 = arith.constant dense<0.000000e+00> : vector<8x512xf32>
    %75 = tpu.matmul %73, %74, %cst_34 {dimension_numbers = #tpu.dot_dimension_numbers<[1], [0], [0], [1], [0, 0, 1, 1], [], []>} : vector<8x64xbf16>, vector<64x512xbf16>, vector<8x512xf32> -> vector<8x512xf32>
    %76 = arith.addf %71, %75 : vector<8x512xf32>
    %77 = vector.extract_strided_slice %7 {offsets = [112, 0], sizes = [8, 64], strides = [1, 1]} : vector<128x64xf32> to vector<8x64xf32>
    %78 = arith.truncf %77 : vector<8x64xf32> to vector<8x64xbf16>
    %c896 = arith.constant 896 : index
    %c0_35 = arith.constant 0 : index
    %79 = vector.load %arg4[%c896, %c0_35] : memref<1024x512xbf16, #tpu.memory_space<vmem>>, vector<64x512xbf16>
    %cst_36 = arith.constant dense<0.000000e+00> : vector<8x512xf32>
    %80 = tpu.matmul %78, %79, %cst_36 {dimension_numbers = #tpu.dot_dimension_numbers<[1], [0], [0], [1], [0, 0, 1, 1], [], []>} : vector<8x64xbf16>, vector<64x512xbf16>, vector<8x512xf32> -> vector<8x512xf32>
    %81 = arith.addf %76, %80 : vector<8x512xf32>
    %82 = vector.extract_strided_slice %7 {offsets = [120, 0], sizes = [8, 64], strides = [1, 1]} : vector<128x64xf32> to vector<8x64xf32>
    %83 = arith.truncf %82 : vector<8x64xf32> to vector<8x64xbf16>
    %c960 = arith.constant 960 : index
    %c0_37 = arith.constant 0 : index
    %84 = vector.load %arg4[%c960, %c0_37] : memref<1024x512xbf16, #tpu.memory_space<vmem>>, vector<64x512xbf16>
    %cst_38 = arith.constant dense<0.000000e+00> : vector<8x512xf32>
    %85 = tpu.matmul %83, %84, %cst_38 {dimension_numbers = #tpu.dot_dimension_numbers<[1], [0], [0], [1], [0, 0, 1, 1], [], []>} : vector<8x64xbf16>, vector<64x512xbf16>, vector<8x512xf32> -> vector<8x512xf32>
    %86 = arith.addf %81, %85 : vector<8x512xf32>
    %c0_39 = arith.constant 0 : index
    %c0_40 = arith.constant 0 : index
    %87 = vector.load %arg5[%c0_39, %c0_40] : memref<1x512xf32, #tpu.memory_space<vmem>>, vector<1x512xf32>
    %88 = vector.broadcast %87 : vector<1x512xf32> to vector<8x512xf32>
    %89 = arith.addf %86, %88 : vector<8x512xf32>
    %cst_41 = arith.constant 0.000000e+00 : f32
    %90 = vector.broadcast %cst_41 : f32 to vector<8x512xf32>
    %91 = arith.maximumf %89, %90 : vector<8x512xf32>
    %92 = arith.truncf %91 : vector<8x512xf32> to vector<8x512xbf16>
    %c0_42 = arith.constant 0 : index
    %c0_43 = arith.constant 0 : index
    %93 = vector.load %arg6[%c0_42, %c0_43] : memref<512x256xbf16, #tpu.memory_space<vmem>>, vector<512x256xbf16>
    %cst_44 = arith.constant dense<0.000000e+00> : vector<8x256xf32>
    %94 = tpu.matmul %92, %93, %cst_44 {dimension_numbers = #tpu.dot_dimension_numbers<[1], [0], [0], [1], [0, 0, 1, 1], [], []>} : vector<8x512xbf16>, vector<512x256xbf16>, vector<8x256xf32> -> vector<8x256xf32>
    %c0_45 = arith.constant 0 : index
    %c0_46 = arith.constant 0 : index
    %95 = vector.load %arg7[%c0_45, %c0_46] : memref<1x256xf32, #tpu.memory_space<vmem>>, vector<1x256xf32>
    %96 = vector.broadcast %95 : vector<1x256xf32> to vector<8x256xf32>
    %97 = arith.addf %94, %96 : vector<8x256xf32>
    %cst_47 = arith.constant 0.000000e+00 : f32
    %98 = vector.broadcast %cst_47 : f32 to vector<8x256xf32>
    %99 = arith.maximumf %97, %98 : vector<8x256xf32>
    %100 = arith.truncf %99 : vector<8x256xf32> to vector<8x256xbf16>
    %c0_48 = arith.constant 0 : index
    %c0_49 = arith.constant 0 : index
    %101 = vector.load %arg8[%c0_48, %c0_49] : memref<256x256xbf16, #tpu.memory_space<vmem>>, vector<256x256xbf16>
    %cst_50 = arith.constant dense<0.000000e+00> : vector<8x256xf32>
    %102 = tpu.matmul %100, %101, %cst_50 {dimension_numbers = #tpu.dot_dimension_numbers<[1], [0], [0], [1], [0, 0, 1, 1], [], []>} : vector<8x256xbf16>, vector<256x256xbf16>, vector<8x256xf32> -> vector<8x256xf32>
    %c0_51 = arith.constant 0 : index
    %c0_52 = arith.constant 0 : index
    %103 = vector.load %arg9[%c0_51, %c0_52] : memref<1x256xf32, #tpu.memory_space<vmem>>, vector<1x256xf32>
    %104 = vector.broadcast %103 : vector<1x256xf32> to vector<8x256xf32>
    %105 = arith.addf %102, %104 : vector<8x256xf32>
    %cst_53 = arith.constant 0.000000e+00 : f32
    %106 = vector.broadcast %cst_53 : f32 to vector<8x256xf32>
    %107 = arith.maximumf %105, %106 : vector<8x256xf32>
    %108 = arith.truncf %107 : vector<8x256xf32> to vector<8x256xbf16>
    %c0_54 = arith.constant 0 : index
    %c0_55 = arith.constant 0 : index
    %109 = vector.load %arg10[%c0_54, %c0_55] : memref<256x3xbf16, #tpu.memory_space<vmem>>, vector<256x3xbf16>
    %cst_56 = arith.constant dense<0.000000e+00> : vector<8x3xf32>
    %110 = tpu.matmul %108, %109, %cst_56 {dimension_numbers = #tpu.dot_dimension_numbers<[1], [0], [0], [1], [0, 0, 1, 1], [], []>} : vector<8x256xbf16>, vector<256x3xbf16>, vector<8x3xf32> -> vector<8x3xf32>
    %c0_57 = arith.constant 0 : index
    %c0_58 = arith.constant 0 : index
    %111 = vector.load %arg11[%c0_57, %c0_58] : memref<1x3xf32, #tpu.memory_space<vmem>>, vector<1x3xf32>
    %112 = vector.broadcast %111 : vector<1x3xf32> to vector<8x3xf32>
    %113 = arith.addf %110, %112 : vector<8x3xf32>
    %cst_59 = arith.constant 0.000000e+00 : f32
    %114 = vector.broadcast %cst_59 : f32 to vector<8x3xf32>
    %115 = arith.maximumf %113, %114 : vector<8x3xf32>
    %c0_60 = arith.constant 0 : index
    %c0_61 = arith.constant 0 : index
    %116 = vector.load %arg12[%c0_60, %c0_61] : memref<512x256xbf16, #tpu.memory_space<vmem>>, vector<512x256xbf16>
    %cst_62 = arith.constant dense<0.000000e+00> : vector<8x256xf32>
    %117 = tpu.matmul %92, %116, %cst_62 {dimension_numbers = #tpu.dot_dimension_numbers<[1], [0], [0], [1], [0, 0, 1, 1], [], []>} : vector<8x512xbf16>, vector<512x256xbf16>, vector<8x256xf32> -> vector<8x256xf32>
    %c0_63 = arith.constant 0 : index
    %c0_64 = arith.constant 0 : index
    %118 = vector.load %arg13[%c0_63, %c0_64] : memref<1x256xf32, #tpu.memory_space<vmem>>, vector<1x256xf32>
    %119 = vector.broadcast %118 : vector<1x256xf32> to vector<8x256xf32>
    %120 = arith.addf %117, %119 : vector<8x256xf32>
    %cst_65 = arith.constant 0.000000e+00 : f32
    %121 = vector.broadcast %cst_65 : f32 to vector<8x256xf32>
    %122 = arith.maximumf %120, %121 : vector<8x256xf32>
    %123 = arith.truncf %122 : vector<8x256xf32> to vector<8x256xbf16>
    %c0_66 = arith.constant 0 : index
    %c0_67 = arith.constant 0 : index
    %124 = vector.load %arg14[%c0_66, %c0_67] : memref<256x3xbf16, #tpu.memory_space<vmem>>, vector<256x3xbf16>
    %cst_68 = arith.constant dense<0.000000e+00> : vector<8x3xf32>
    %125 = tpu.matmul %123, %124, %cst_68 {dimension_numbers = #tpu.dot_dimension_numbers<[1], [0], [0], [1], [0, 0, 1, 1], [], []>} : vector<8x256xbf16>, vector<256x3xbf16>, vector<8x3xf32> -> vector<8x3xf32>
    %c0_69 = arith.constant 0 : index
    %c0_70 = arith.constant 0 : index
    %126 = vector.load %arg15[%c0_69, %c0_70] : memref<1x3xf32, #tpu.memory_space<vmem>>, vector<1x3xf32>
    %127 = vector.broadcast %126 : vector<1x3xf32> to vector<8x3xf32>
    %128 = arith.addf %125, %127 : vector<8x3xf32>
    %129 = tpu.iota {dimensions = array<i32: 1>} : vector<8x3xi32>
    %c0_i32 = arith.constant 0 : i32
    %130 = vector.broadcast %c0_i32 : i32 to vector<8x3xi32>
    %131 = arith.cmpi eq, %129, %130 : vector<8x3xi32>
    %132 = math.tanh %115 : vector<8x3xf32>
    %133 = arith.negf %115 : vector<8x3xf32>
    %134 = math.exp %133 : vector<8x3xf32>
    %cst_71 = arith.constant 1.000000e+00 : f32
    %135 = vector.broadcast %cst_71 : f32 to vector<8x3xf32>
    %136 = arith.addf %135, %134 : vector<8x3xf32>
    %137 = arith.divf %135, %136 : vector<8x3xf32>
    %138 = arith.select %131, %132, %137 : vector<8x3xi1>, vector<8x3xf32>
    %c0_72 = arith.constant 0 : index
    %c0_73 = arith.constant 0 : index
    %139 = vector.load %arg16[%c0_72, %c0_73] : memref<8x3xf32, #tpu.memory_space<vmem>>, vector<8x3xf32>
    tpu.vector_store %arg16[%c0_72, %c0_73], %138 {strides = array<i32>} : memref<8x3xf32, #tpu.memory_space<vmem>>, vector<8x3xf32>,
    %cst_74 = arith.constant -2.000000e+01 : f32
    %cst_75 = arith.constant 2.000000e+00 : f32
    %140 = vector.broadcast %cst_74 : f32 to vector<8x3xf32>
    %141 = arith.maximumf %140, %128 : vector<8x3xf32>
    %142 = vector.broadcast %cst_75 : f32 to vector<8x3xf32>
    %143 = arith.minimumf %142, %141 : vector<8x3xf32>
    %144 = math.exp %143 : vector<8x3xf32>
    %c0_76 = arith.constant 0 : index
    %c0_77 = arith.constant 0 : index
    %145 = vector.load %arg17[%c0_76, %c0_77] : memref<8x3xf32, #tpu.memory_space<vmem>>, vector<8x3xf32>
    tpu.vector_store %arg17[%c0_76, %c0_77], %144 {strides = array<i32>} : memref<8x3xf32, #tpu.memory_space<vmem>>, vector<8x3xf32>,
    return
  }
  func.func @transform_0(%arg0: i32) -> (i32, i32) {
    %c0_i32 = arith.constant 0 : i32
    %c0_i32_0 = arith.constant 0 : i32
    %c0_i32_1 = arith.constant 0 : i32
    return %c0_i32, %c0_i32_0 : i32, i32
  }
  func.func @transform_1(%arg0: i32) -> (i32, i32) {
    %c0_i32 = arith.constant 0 : i32
    %c0_i32_0 = arith.constant 0 : i32
    %c0_i32_1 = arith.constant 0 : i32
    return %c0_i32, %c0_i32_0 : i32, i32
  }
  func.func @transform_2(%arg0: i32) -> (i32, i32) {
    %c0_i32 = arith.constant 0 : i32
    %c0_i32_0 = arith.constant 0 : i32
    %c0_i32_1 = arith.constant 0 : i32
    return %c0_i32, %c0_i32_0 : i32, i32
  }
  func.func @transform_3(%arg0: i32) -> (i32, i32) {
    %c0_i32 = arith.constant 0 : i32
    %c0_i32_0 = arith.constant 0 : i32
    %c0_i32_1 = arith.constant 0 : i32
    return %c0_i32, %c0_i32_0 : i32, i32
  }
  func.func @transform_4(%arg0: i32) -> (i32, i32) {
    %c0_i32 = arith.constant 0 : i32
    %c0_i32_0 = arith.constant 0 : i32
    %c0_i32_1 = arith.constant 0 : i32
    return %c0_i32, %c0_i32_0 : i32, i32
  }
  func.func @transform_5(%arg0: i32) -> (i32, i32) {
    %c0_i32 = arith.constant 0 : i32
    %c0_i32_0 = arith.constant 0 : i32
    %c0_i32_1 = arith.constant 0 : i32
    return %c0_i32, %c0_i32_0 : i32, i32
  }
  func.func @transform_6(%arg0: i32) -> (i32, i32) {
    %c0_i32 = arith.constant 0 : i32
    %c0_i32_0 = arith.constant 0 : i32
    %c0_i32_1 = arith.constant 0 : i32
    return %c0_i32, %c0_i32_0 : i32, i32
  }
  func.func @transform_7(%arg0: i32) -> (i32, i32) {
    %c0_i32 = arith.constant 0 : i32
    %c0_i32_0 = arith.constant 0 : i32
    %c0_i32_1 = arith.constant 0 : i32
    return %c0_i32, %c0_i32_0 : i32, i32
  }
  func.func @transform_8(%arg0: i32) -> (i32, i32) {
    %c0_i32 = arith.constant 0 : i32
    %c0_i32_0 = arith.constant 0 : i32
    %c0_i32_1 = arith.constant 0 : i32
    return %c0_i32, %c0_i32_0 : i32, i32
  }
  func.func @transform_9(%arg0: i32) -> (i32, i32) {
    %c0_i32 = arith.constant 0 : i32
    %c0_i32_0 = arith.constant 0 : i32
    %c0_i32_1 = arith.constant 0 : i32
    return %c0_i32, %c0_i32_0 : i32, i32
  }
  func.func @transform_10(%arg0: i32) -> (i32, i32) {
    %c0_i32 = arith.constant 0 : i32
    %c0_i32_0 = arith.constant 0 : i32
    %c0_i32_1 = arith.constant 0 : i32
    return %c0_i32, %c0_i32_0 : i32, i32
  }
  func.func @transform_11(%arg0: i32) -> (i32, i32) {
    %c0_i32 = arith.constant 0 : i32
    %c0_i32_0 = arith.constant 0 : i32
    %c0_i32_1 = arith.constant 0 : i32
    return %c0_i32, %c0_i32_0 : i32, i32
  }
  func.func @transform_12(%arg0: i32) -> (i32, i32) {
    %c0_i32 = arith.constant 0 : i32
    %c0_i32_0 = arith.constant 0 : i32
    %c0_i32_1 = arith.constant 0 : i32
    return %c0_i32, %c0_i32_0 : i32, i32
  }
  func.func @transform_13(%arg0: i32) -> (i32, i32) {
    %c0_i32 = arith.constant 0 : i32
    %c0_i32_0 = arith.constant 0 : i32
    %c0_i32_1 = arith.constant 0 : i32
    return %c0_i32, %c0_i32_0 : i32, i32
  }
  func.func @transform_14(%arg0: i32) -> (i32, i32) {
    %c0_i32 = arith.constant 0 : i32
    %c0_i32_0 = arith.constant 0 : i32
    %c0_i32_1 = arith.constant 0 : i32
    return %c0_i32, %c0_i32_0 : i32, i32
  }
  func.func @transform_15(%arg0: i32) -> (i32, i32) {
    %c0_i32 = arith.constant 0 : i32
    %c0_i32_0 = arith.constant 0 : i32
    %c0_i32_1 = arith.constant 0 : i32
    return %c0_i32, %c0_i32_0 : i32, i32
  }
  func.func @transform_16(%arg0: i32) -> (i32, i32) {
    %c0_i32 = arith.constant 0 : i32
    %c0_i32_0 = arith.constant 0 : i32
    %c0_i32_1 = arith.constant 0 : i32
    return %c0_i32, %c0_i32_0 : i32, i32
  }
}

</mosaic_0001>

<llo_original>
// kernel: policy_forward.2
$region0: #{policy_forward.2}
  #allocation0 [shape = 'u32[]', space=smem, size = 0x4, offset = 0x4, fixed_abs, tag = 'smem constant byte address 0x4 - core index']
  #allocation1 [shape = 'u32[144,128]{1,0:T(1,128)}', space=vmem, size = 0x12000, scoped, tag = 'internal scratch']
  %s0 = inlined_call_operand.vmem [shape: bf16[128,108], index: 0, kind: input, shape index: {}]
  %s1 = inlined_call_operand.vmem [shape: bf16[108,32], index: 1, kind: input, shape index: {}]
  %s2 = inlined_call_operand.vmem [shape: f32[1,32], index: 2, kind: input, shape index: {}]
  %s3 = inlined_call_operand.vmem [shape: bf16[128,32], index: 3, kind: output, shape index: {}]
  %s4 = sld [smem:[#allocation0]]
  $region22: #{policy_forward.2} parent=0
    _
  %s6 = ssub.s32 1, %s4
  %s7 = scalar_select 0, %s6, %s4
  // Predicated region
  $region2: #{policy_forward.2} parent=0 // pred_check
    _
  $region3: #{policy_forward.2} parent=0 // pred_check_branch
    %9 = sbr.rel (0) target = $region5
  $region4: #{policy_forward.2} parent=0 // pred_region
    _
  $region5: #{policy_forward.2} parent=0 // pred_fallthru
    _
  // Predicated region
  $region6: #{policy_forward.2} parent=0 // pred_check
    _
  $region7: #{policy_forward.2} parent=0 // pred_check_branch
    %11 = sbr.rel (0) target = $region9
  $region8: #{policy_forward.2} parent=0 // pred_region
    _
  $region9: #{policy_forward.2} parent=0 // pred_fallthru
    _
  // Predicated region
  $region10: #{policy_forward.2} parent=0 // pred_check
    _
  $region11: #{policy_forward.2} parent=0 // pred_check_branch
    %13 = sbr.rel (0) target = $region13
  $region12: #{policy_forward.2} parent=0 // pred_region
    _
  $region13: #{policy_forward.2} parent=0 // pred_fallthru
    _
  %v15 = vld [vmem:[%s0] sm:$0xf]
  %v16 = vld [vmem:[%s0 + $0x4] sm:$0xf]
  %v17 = vld [vmem:[%s0 + $0x8] sm:$0xf]
  %v18 = vld [vmem:[%s0 + $0xc] sm:$0xf]
  %v19 = vld [vmem:[%s0 + $0x10] sm:$0xf]
  %v20 = vld [vmem:[%s0 + $0x14] sm:$0xf]
  %v21 = vld [vmem:[%s0 + $0x18] sm:$0xf]
  %v22 = vld [vmem:[%s0 + $0x1c] sm:$0xf]
  %v23 = vld [vmem:[%s0 + $0x20] sm:$0xf]
  %v24 = vld [vmem:[%s0 + $0x24] sm:$0xf]
  %v25 = vld [vmem:[%s0 + $0x28] sm:$0xf]
  %v26 = vld [vmem:[%s0 + $0x2c] sm:$0xf]
  %v27 = vld [vmem:[%s0 + $0x30] sm:$0xf]
  %v28 = vld [vmem:[%s0 + $0x34] sm:$0xf]
  %v29 = vld [vmem:[%s0 + $0x38] sm:$0xf]
  %v30 = vld [vmem:[%s0 + $0x3c] sm:$0xf]
  %v31 = vld [vmem:[%s1] sm:$0xf]
  %v32 = vld [vmem:[%s1 + $0x4] sm:$0xf]
  %v33 = vld [vmem:[%s1 + $0x8] sm:$0xf]
  %v34 = vld [vmem:[%s1 + $0xc] sm:$0xf]
  %v35 = vld [vmem:[%s1 + $0x10] sm:$0xf]
  %v36 = vld [vmem:[%s1 + $0x14] sm:$0xf]
  %v37 = vld [vmem:[%s1 + $0x18] sm:$0xf]
  %v38 = vld [vmem:[%s1 + $0x1c] sm:$0xf]
  %v39 = vld [vmem:[%s1 + $0x20] sm:$0xf]
  %v40 = vld [vmem:[%s1 + $0x24] sm:$0xf]
  %v41 = vld [vmem:[%s1 + $0x28] sm:$0xf]
  %v42 = vld [vmem:[%s1 + $0x2c] sm:$0xf]
  %v43 = vld [vmem:[%s1 + $0x30] sm:$0xf]
  %v44 = vld [vmem:[%s1 + $0x34] sm:$0x3]
  %v45 = vld [vmem:[%s2] sm:$0x1]
  %v47 = vlaneseq
  %v48 = vshrl.u32 %v47, 7
  %v49 = vsub.s32 0, %v48
  %v50 = vrot.slane %v45, %v49
  %v68 = vunpack.c.l.b16 %v15
  %v69 = vunpack.c.l.b16 %v16
  %v70 = vunpack.c.l.b16 %v17
  %v71 = vunpack.c.l.b16 %v18
  %v72 = vunpack.c.l.b16 %v19
  %v73 = vunpack.c.l.b16 %v20
  %v74 = vunpack.c.l.b16 %v21
  %v75 = vunpack.c.l.b16 %v22
  %v76 = vunpack.c.l.b16 %v23
  %v77 = vunpack.c.l.b16 %v24
  %v78 = vunpack.c.l.b16 %v25
  %v79 = vunpack.c.l.b16 %v26
  %v80 = vunpack.c.l.b16 %v27
  %v81 = vunpack.c.l.b16 %v28
  %v82 = vunpack.c.l.b16 %v29
  %v83 = vunpack.c.l.b16 %v30
  %v84 = vpack.c.b16 %v69, %v68
  %v85 = vpack.c.b16 %v71, %v70
  %v86 = vpack.c.b16 %v73, %v72
  %v87 = vpack.c.b16 %v75, %v74
  %v88 = vpack.c.b16 %v77, %v76
  %v89 = vpack.c.b16 %v79, %v78
  %v90 = vpack.c.b16 %v81, %v80
  %v91 = vpack.c.b16 %v83, %v82
  %v106 = vunpack.c.l.b16 %v31
  %v107 = vunpack.c.l.b16 %v32
  %v108 = vunpack.c.l.b16 %v33
  %v109 = vunpack.c.l.b16 %v34
  %v110 = vunpack.c.l.b16 %v35
  %v111 = vunpack.c.l.b16 %v36
  %v112 = vunpack.c.l.b16 %v37
  %v113 = vunpack.c.l.b16 %v38
  %v114 = vunpack.c.l.b16 %v39
  %v115 = vunpack.c.l.b16 %v40
  %v116 = vunpack.c.l.b16 %v41
  %v117 = vunpack.c.l.b16 %v42
  %v118 = vunpack.c.l.b16 %v43
  %v119 = vunpack.c.l.b16 %v44
  %v120 = vpack.c.b16 %v107, %v106
  %v121 = vpack.c.b16 %v109, %v108
  %v122 = vpack.c.b16 %v111, %v110
  %v123 = vpack.c.b16 %v113, %v112
  %v124 = vpack.c.b16 %v115, %v114
  %v125 = vpack.c.b16 %v117, %v116
  %v126 = vpack.c.b16 %v119, %v118
  %vm133 = vcmask 883712
  %v135 = vsel %vm133, %v84, 0
  %v138 = vsel %vm133, %v85, 0
  %v141 = vsel %vm133, %v86, 0
  %v144 = vsel %vm133, %v87, 0
  %v147 = vsel %vm133, %v88, 0
  %v150 = vsel %vm133, %v89, 0
  %v153 = vsel %vm133, %v90, 0
  %v156 = vsel %vm133, %v91, 0
  %vm158 = vcmask 1045504
  %v160 = vsel %vm158, %v126, 0
  %162 = vmatprep.subr.bf16.mxu0 0
  %163 = vmatpush1.bf16.msra.mxu0 %v120
  %164 = vmatprep.subr.bf16.mxu0 0
  %165 = vmatpush1.bf16.msra.mxu0 %v121
  %166 = vmatprep.subr.bf16.mxu0 0
  %167 = vmatpush1.bf16.msra.mxu0 %v122
  %168 = vmatprep.subr.bf16.mxu0 0
  %169 = vmatpush1.bf16.msra.mxu0 %v123
  %170 = vmatprep.subr.bf16.mxu0 0
  %171 = vmatpush1.bf16.msra.mxu0 %v124
  %172 = vmatprep.subr.bf16.mxu0 0
  %173 = vmatpush1.bf16.msra.mxu0 %v125
  %174 = vmatprep.subr.bf16.mxu0 0
  %175 = vmatpush1.bf16.msra.mxu0 %v160
  %176 = vmatprep.subr.bf16.mxu0 0
  %177 = vmatpush1.bf16.msra.mxu0 0
  %178 = vmatprep.subr.bf16.mxu0 0
  %179 = vmatpush1.bf16.msra.mxu0 0
  %180 = vmatprep.subr.bf16.mxu0 0
  %181 = vmatpush1.bf16.msra.mxu0 0
  %182 = vmatprep.subr.bf16.mxu0 0
  %183 = vmatpush1.bf16.msra.mxu0 0
  %184 = vmatprep.subr.bf16.mxu0 0
  %185 = vmatpush1.bf16.msra.mxu0 0
  %186 = vmatprep.subr.bf16.mxu0 0
  %187 = vmatpush1.bf16.msra.mxu0 0
  %188 = vmatprep.subr.bf16.mxu0 0
  %189 = vmatpush1.bf16.msra.mxu0 0
  %190 = vmatprep.subr.bf16.mxu0 0
  %191 = vmatpush1.bf16.msra.mxu0 0
  %192 = vmatprep.subr.bf16.mxu0 0
  %193 = vmatpush1.bf16.msra.mxu0 0
  %194 = vmatprep.mubr.bf16.mxu0 0
  %195 = vmatmul.mubr.bf16.gmra.mrb[0].mxu0 %v135
  %v196 = vpop.f32.mrb[0].mxu0
  %v197 = vadd.f32 %v50, %v196
  %v198 = vpop.f32.mrb[0].mxu0
  %v199 = vpop.f32.mrb[0].mxu0
  %v200 = vadd.f32 %v50, %v199
  %v201 = vpop.f32.mrb[0].mxu0
  %202 = vmatprep.mubr.bf16.mxu0 0
  %203 = vmatmul.mubr.bf16.gmra.mrb[0].mxu0 %v138
  %v204 = vpop.f32.mrb[0].mxu0
  %v205 = vadd.f32 %v50, %v204
  %v206 = vpop.f32.mrb[0].mxu0
  %v207 = vpop.f32.mrb[0].mxu0
  %v208 = vadd.f32 %v50, %v207
  %v209 = vpop.f32.mrb[0].mxu0
  %210 = vmatprep.mubr.bf16.mxu0 0
  %211 = vmatmul.mubr.bf16.gmra.mrb[0].mxu0 %v141
  %v212 = vpop.f32.mrb[0].mxu0
  %v213 = vadd.f32 %v50, %v212
  %v214 = vpop.f32.mrb[0].mxu0
  %v215 = vpop.f32.mrb[0].mxu0
  %v216 = vadd.f32 %v50, %v215
  %v217 = vpop.f32.mrb[0].mxu0
  %218 = vmatprep.mubr.bf16.mxu0 0
  %219 = vmatmul.mubr.bf16.gmra.mrb[0].mxu0 %v144
  %v220 = vpop.f32.mrb[0].mxu0
  %v221 = vadd.f32 %v50, %v220
  %v222 = vpop.f32.mrb[0].mxu0
  %v223 = vpop.f32.mrb[0].mxu0
  %v224 = vadd.f32 %v50, %v223
  %v225 = vpop.f32.mrb[0].mxu0
  %226 = vmatprep.mubr.bf16.mxu0 0
  %227 = vmatmul.mubr.bf16.gmra.mrb[0].mxu0 %v147
  %v228 = vpop.f32.mrb[0].mxu0
  %v229 = vadd.f32 %v50, %v228
  %v230 = vpop.f32.mrb[0].mxu0
  %v231 = vpop.f32.mrb[0].mxu0
  %v232 = vadd.f32 %v50, %v231
  %v233 = vpop.f32.mrb[0].mxu0
  %234 = vmatprep.mubr.bf16.mxu0 0
  %235 = vmatmul.mubr.bf16.gmra.mrb[0].mxu0 %v150
  %v236 = vpop.f32.mrb[0].mxu0
  %v237 = vadd.f32 %v50, %v236
  %v238 = vpop.f32.mrb[0].mxu0
  %v239 = vpop.f32.mrb[0].mxu0
  %v240 = vadd.f32 %v50, %v239
  %v241 = vpop.f32.mrb[0].mxu0
  %242 = vmatprep.mubr.bf16.mxu0 0
  %243 = vmatmul.mubr.bf16.gmra.mrb[0].mxu0 %v153
  %v244 = vpop.f32.mrb[0].mxu0
  %v245 = vadd.f32 %v50, %v244
  %v246 = vpop.f32.mrb[0].mxu0
  %v247 = vpop.f32.mrb[0].mxu0
  %v248 = vadd.f32 %v50, %v247
  %v249 = vpop.f32.mrb[0].mxu0
  %250 = vmatprep.mubr.bf16.mxu0 0
  %251 = vmatmul.mubr.bf16.gmra.mrb[0].mxu0 %v156
  %v252 = vpop.f32.mrb[0].mxu0
  %v253 = vadd.f32 %v50, %v252
  %v254 = vpop.f32.mrb[0].mxu0
  %v255 = vpop.f32.mrb[0].mxu0
  %v256 = vadd.f32 %v50, %v255
  %v257 = vpop.f32.mrb[0].mxu0
  %258 = vdwg.mxu0
  %v259 = vmax.f32 %v197, 0.0
  %v260 = vmax.f32 %v200, 0.0
  %v261 = vmax.f32 %v205, 0.0
  %v262 = vmax.f32 %v208, 0.0
  %v263 = vmax.f32 %v213, 0.0
  %v264 = vmax.f32 %v216, 0.0
  %v265 = vmax.f32 %v221, 0.0
  %v266 = vmax.f32 %v224, 0.0
  %v267 = vmax.f32 %v229, 0.0
  %v268 = vmax.f32 %v232, 0.0
  %v269 = vmax.f32 %v237, 0.0
  %v270 = vmax.f32 %v240, 0.0
  %v271 = vmax.f32 %v245, 0.0
  %v272 = vmax.f32 %v248, 0.0
  %v273 = vmax.f32 %v253, 0.0
  %v274 = vmax.f32 %v256, 0.0
  %v275 = vpack.c.bf16 %v260, %v259
  %v276 = vpack.c.bf16 %v262, %v261
  %v277 = vpack.c.bf16 %v264, %v263
  %v278 = vpack.c.bf16 %v266, %v265
  %v279 = vpack.c.bf16 %v268, %v267
  %v280 = vpack.c.bf16 %v270, %v269
  %v281 = vpack.c.bf16 %v272, %v271
  %v282 = vpack.c.bf16 %v274, %v273
  %v291 = vunpack.c.l.b16 %v275
  %v292 = vunpack.c.h.b16 %v275
  %v293 = vunpack.c.l.b16 %v276
  %v294 = vunpack.c.h.b16 %v276
  %v295 = vunpack.c.l.b16 %v277
  %v296 = vunpack.c.h.b16 %v277
  %v297 = vunpack.c.l.b16 %v278
  %v298 = vunpack.c.h.b16 %v278
  %v299 = vunpack.c.l.b16 %v279
  %v300 = vunpack.c.h.b16 %v279
  %v301 = vunpack.c.l.b16 %v280
  %v302 = vunpack.c.h.b16 %v280
  %v303 = vunpack.c.l.b16 %v281
  %v304 = vunpack.c.h.b16 %v281
  %v305 = vunpack.c.l.b16 %v282
  %v306 = vunpack.c.h.b16 %v282
  %v307 = vpack.c.b16 %v291, %v291
  %v308 = vpack.c.b16 %v292, %v292
  %v309 = vpack.c.b16 %v293, %v293
  %v310 = vpack.c.b16 %v294, %v294
  %v311 = vpack.c.b16 %v295, %v295
  %v312 = vpack.c.b16 %v296, %v296
  %v313 = vpack.c.b16 %v297, %v297
  %v314 = vpack.c.b16 %v298, %v298
  %v315 = vpack.c.b16 %v299, %v299
  %v316 = vpack.c.b16 %v300, %v300
  %v317 = vpack.c.b16 %v301, %v301
  %v318 = vpack.c.b16 %v302, %v302
  %v319 = vpack.c.b16 %v303, %v303
  %v320 = vpack.c.b16 %v304, %v304
  %v321 = vpack.c.b16 %v305, %v305
  %v322 = vpack.c.b16 %v306, %v306
  %vm339 = vcmask 257024
  %340 = vst.msk [vmem:[%s3] sm:$0xf] %vm339, %v307
  %341 = vst.msk [vmem:[%s3 + $0x4] sm:$0xf] %vm339, %v308
  %342 = vst.msk [vmem:[%s3 + $0x8] sm:$0xf] %vm339, %v309
  %343 = vst.msk [vmem:[%s3 + $0xc] sm:$0xf] %vm339, %v310
  %344 = vst.msk [vmem:[%s3 + $0x10] sm:$0xf] %vm339, %v311
  %345 = vst.msk [vmem:[%s3 + $0x14] sm:$0xf] %vm339, %v312
  %346 = vst.msk [vmem:[%s3 + $0x18] sm:$0xf] %vm339, %v313
  %347 = vst.msk [vmem:[%s3 + $0x1c] sm:$0xf] %vm339, %v314
  %348 = vst.msk [vmem:[%s3 + $0x20] sm:$0xf] %vm339, %v315
  %349 = vst.msk [vmem:[%s3 + $0x24] sm:$0xf] %vm339, %v316
  %350 = vst.msk [vmem:[%s3 + $0x28] sm:$0xf] %vm339, %v317
  %351 = vst.msk [vmem:[%s3 + $0x2c] sm:$0xf] %vm339, %v318
  %352 = vst.msk [vmem:[%s3 + $0x30] sm:$0xf] %vm339, %v319
  %353 = vst.msk [vmem:[%s3 + $0x34] sm:$0xf] %vm339, %v320
  %354 = vst.msk [vmem:[%s3 + $0x38] sm:$0xf] %vm339, %v321
  %355 = vst.msk [vmem:[%s3 + $0x3c] sm:$0xf] %vm339, %v322
  // Predicated region
  $region14: #{policy_forward.2} parent=0 // pred_check
    _
  $region15: #{policy_forward.2} parent=0 // pred_check_branch
    %357 = sbr.rel (0) target = $region17
  $region16: #{policy_forward.2} parent=0 // pred_region
    _
  $region17: #{policy_forward.2} parent=0 // pred_fallthru
    _
  // Predicated region
  $region18: #{policy_forward.2} parent=0 // pred_check
    _
  $region19: #{policy_forward.2} parent=0 // pred_check_branch
    %359 = sbr.rel (0) target = $region21
  $region20: #{policy_forward.2} parent=0 // pred_region
    _
  $region21: #{policy_forward.2} parent=0 // pred_fallthru
    _

// kernel: policy_forward.3
$region0: #{policy_forward.3}
  #allocation0 [shape = 'u32[]', space=smem, size = 0x4, offset = 0x4, fixed_abs, tag = 'smem constant byte address 0x4 - core index']
  #allocation1 [shape = 'u32[144,128]{1,0:T(1,128)}', space=vmem, size = 0x12000, scoped, tag = 'internal scratch']
  %s0 = inlined_call_operand.vmem [shape: bf16[128,288], index: 0, kind: input, shape index: {}]
  %s1 = inlined_call_operand.vmem [shape: bf16[288,64], index: 1, kind: input, shape index: {}]
  %s2 = inlined_call_operand.vmem [shape: f32[1,64], index: 2, kind: input, shape index: {}]
  %s3 = inlined_call_operand.vmem [shape: bf16[1024,512], index: 3, kind: input, shape index: {}]
  %s4 = inlined_call_operand.vmem [shape: f32[1,512], index: 4, kind: input, shape index: {}]
  %s5 = inlined_call_operand.vmem [shape: bf16[512,256], index: 5, kind: input, shape index: {}]
  %s6 = inlined_call_operand.vmem [shape: f32[1,256], index: 6, kind: input, shape index: {}]
  %s7 = inlined_call_operand.vmem [shape: bf16[256,256], index: 7, kind: input, shape index: {}]
  %s8 = inlined_call_operand.vmem [shape: f32[1,256], index: 8, kind: input, shape index: {}]
  %s9 = inlined_call_operand.vmem [shape: bf16[256,3], index: 9, kind: input, shape index: {}]
  %s10 = inlined_call_operand.vmem [shape: f32[1,3], index: 10, kind: input, shape index: {}]
  %s11 = inlined_call_operand.vmem [shape: bf16[512,256], index: 11, kind: input, shape index: {}]
  %s12 = inlined_call_operand.vmem [shape: f32[1,256], index: 12, kind: input, shape index: {}]
  %s13 = inlined_call_operand.vmem [shape: bf16[256,3], index: 13, kind: input, shape index: {}]
  %s14 = inlined_call_operand.vmem [shape: f32[1,3], index: 14, kind: input, shape index: {}]
  %s15 = inlined_call_operand.vmem [shape: f32[8,3], index: 15, kind: output, shape index: {0}]
  %s16 = inlined_call_operand.vmem [shape: f32[8,3], index: 16, kind: output, shape index: {1}]
  %17 = xla_tuple %s15, %s16
  %s18 = sld [smem:[#allocation0]]
  $region78: #{policy_forward.3} parent=0
    _
  %s20 = ssub.s32 1, %s18
  %s21 = scalar_select 0, %s20, %s18
  // Predicated region
  $region2: #{policy_forward.3} parent=0 // pred_check
    _
  $region3: #{policy_forward.3} parent=0 // pred_check_branch
    %23 = sbr.rel (0) target = $region5
  $region4: #{policy_forward.3} parent=0 // pred_region
    _
  $region5: #{policy_forward.3} parent=0 // pred_fallthru
    _
  // Predicated region
  $region6: #{policy_forward.3} parent=0 // pred_check
    _
  $region7: #{policy_forward.3} parent=0 // pred_check_branch
    %25 = sbr.rel (0) target = $region9
  $region8: #{policy_forward.3} parent=0 // pred_region
    _
  $region9: #{policy_forward.3} parent=0 // pred_fallthru
    _
  // Predicated region
  $region10: #{policy_forward.3} parent=0 // pred_check
    _
  $region11: #{policy_forward.3} parent=0 // pred_check_branch
    %27 = sbr.rel (0) target = $region13
  $region12: #{policy_forward.3} parent=0 // pred_region
    _
  $region13: #{policy_forward.3} parent=0 // pred_fallthru
    _
  // Predicated region
  $region14: #{policy_forward.3} parent=0 // pred_check
    _
  $region15: #{policy_forward.3} parent=0 // pred_check_branch
    %29 = sbr.rel (0) target = $region17
  $region16: #{policy_forward.3} parent=0 // pred_region
    _
  $region17: #{policy_forward.3} parent=0 // pred_fallthru
    _
  // Predicated region
  $region18: #{policy_forward.3} parent=0 // pred_check
    _
  $region19: #{policy_forward.3} parent=0 // pred_check_branch
    %31 = sbr.rel (0) target = $region21
  $region20: #{policy_forward.3} parent=0 // pred_region
    _
  $region21: #{policy_forward.3} parent=0 // pred_fallthru
    _
  // Predicated region
  $region22: #{policy_forward.3} parent=0 // pred_check
    _
  $region23: #{policy_forward.3} parent=0 // pred_check_branch
    %33 = sbr.rel (0) target = $region25
  $region24: #{policy_forward.3} parent=0 // pred_region
    _
  $region25: #{policy_forward.3} parent=0 // pred_fallthru
    _
  // Predicated region
  $region26: #{policy_forward.3} parent=0 // pred_check
    _
  $region27: #{policy_forward.3} parent=0 // pred_check_branch
    %35 = sbr.rel (0) target = $region29
  $region28: #{policy_forward.3} parent=0 // pred_region
    _
  $region29: #{policy_forward.3} parent=0 // pred_fallthru
    _
  // Predicated region
  $region30: #{policy_forward.3} parent=0 // pred_check
    _
  $region31: #{policy_forward.3} parent=0 // pred_check_branch
    %37 = sbr.rel (0) target = $region33
  $region32: #{policy_forward.3} parent=0 // pred_region
    _
  $region33: #{policy_forward.3} parent=0 // pred_fallthru
    _
  // Predicated region
  $region34: #{policy_forward.3} parent=0 // pred_check
    _
  $region35: #{policy_forward.3} parent=0 // pred_check_branch
    %39 = sbr.rel (0) target = $region37
  $region36: #{policy_forward.3} parent=0 // pred_region
    _
  $region37: #{policy_forward.3} parent=0 // pred_fallthru
    _
  // Predicated region
  $region38: #{policy_forward.3} parent=0 // pred_check
    _
  $region39: #{policy_forward.3} parent=0 // pred_check_branch
    %41 = sbr.rel (0) target = $region41
  $region40: #{policy_forward.3} parent=0 // pred_region
    _
  $region41: #{policy_forward.3} parent=0 // pred_fallthru
    _
  // Predicated region
  $region42: #{policy_forward.3} parent=0 // pred_check
    _
  $region43: #{policy_forward.3} parent=0 // pred_check_branch
    %43 = sbr.rel (0) target = $region45
  $region44: #{policy_forward.3} parent=0 // pred_region
    _
  $region45: #{policy_forward.3} parent=0 // pred_fallthru
    _
  // Predicated region
  $region46: #{policy_forward.3} parent=0 // pred_check
    _
  $region47: #{policy_forward.3} parent=0 // pred_check_branch
    %45 = sbr.rel (0) target = $region49
  $region48: #{policy_forward.3} parent=0 // pred_region
    _
  $region49: #{policy_forward.3} parent=0 // pred_fallthru
    _
  // Predicated region
  $region50: #{policy_forward.3} parent=0 // pred_check
    _
  $region51: #{policy_forward.3} parent=0 // pred_check_branch
    %47 = sbr.rel (0) target = $region53
  $region52: #{policy_forward.3} parent=0 // pred_region
    _
  $region53: #{policy_forward.3} parent=0 // pred_fallthru
    _
  // Predicated region
  $region54: #{policy_forward.3} parent=0 // pred_check
    _
  $region55: #{policy_forward.3} parent=0 // pred_check_branch
    %49 = sbr.rel (0) target = $region57
  $region56: #{policy_forward.3} parent=0 // pred_region
    _
  $region57: #{policy_forward.3} parent=0 // pred_fallthru
    _
  // Predicated region
  $region58: #{policy_forward.3} parent=0 // pred_check
    _
  $region59: #{policy_forward.3} parent=0 // pred_check_branch
    %51 = sbr.rel (0) target = $region61
  $region60: #{policy_forward.3} parent=0 // pred_region
    _
  $region61: #{policy_forward.3} parent=0 // pred_fallthru
    _
  %v53 = vld [vmem:[%s0] sm:$0xff]
  %v54 = vld [vmem:[%s0 + $0x8] sm:$0xf]
  %v55 = vld [vmem:[%s0 + $0xc] sm:$0xff]
  %v56 = vld [vmem:[%s0 + $0x14] sm:$0xf]
  %v57 = vld [vmem:[%s0 + $0x18] sm:$0xff]
  %v58 = vld [vmem:[%s0 + $0x20] sm:$0xf]
  %v59 = vld [vmem:[%s0 + $0x24] sm:$0xff]
  %v60 = vld [vmem:[%s0 + $0x2c] sm:$0xf]
  %v61 = vld [vmem:[%s0 + $0x30] sm:$0xff]
  %v62 = vld [vmem:[%s0 + $0x38] sm:$0xf]
  %v63 = vld [vmem:[%s0 + $0x3c] sm:$0xff]
  %v64 = vld [vmem:[%s0 + $0x44] sm:$0xf]
  %v65 = vld [vmem:[%s0 + $0x48] sm:$0xff]
  %v66 = vld [vmem:[%s0 + $0x50] sm:$0xf]
  %v67 = vld [vmem:[%s0 + $0x54] sm:$0xff]
  %v68 = vld [vmem:[%s0 + $0x5c] sm:$0xf]
  %v69 = vld [vmem:[%s0 + $0x60] sm:$0xff]
  %v70 = vld [vmem:[%s0 + $0x68] sm:$0xf]
  %v71 = vld [vmem:[%s0 + $0x6c] sm:$0xff]
  %v72 = vld [vmem:[%s0 + $0x74] sm:$0xf]
  %v73 = vld [vmem:[%s0 + $0x78] sm:$0xff]
  %v74 = vld [vmem:[%s0 + $0x80] sm:$0xf]
  %v75 = vld [vmem:[%s0 + $0x84] sm:$0xff]
  %v76 = vld [vmem:[%s0 + $0x8c] sm:$0xf]
  %v77 = vld [vmem:[%s0 + $0x90] sm:$0xff]
  %v78 = vld [vmem:[%s0 + $0x98] sm:$0xf]
  %v79 = vld [vmem:[%s0 + $0x9c] sm:$0xff]
  %v80 = vld [vmem:[%s0 + $0xa4] sm:$0xf]
  %v81 = vld [vmem:[%s0 + $0xa8] sm:$0xff]
  %v82 = vld [vmem:[%s0 + $0xb0] sm:$0xf]
  %v83 = vld [vmem:[%s0 + $0xb4] sm:$0xff]
  %v84 = vld [vmem:[%s0 + $0xbc] sm:$0xf]
  %v85 = vld [vmem:[%s1] sm:$0xf]
  %v86 = vld [vmem:[%s1 + $0x4] sm:$0xf]
  %v87 = vld [vmem:[%s1 + $0x8] sm:$0xf]
  %v88 = vld [vmem:[%s1 + $0xc] sm:$0xf]
  %v89 = vld [vmem:[%s1 + $0x10] sm:$0xf]
  %v90 = vld [vmem:[%s1 + $0x14] sm:$0xf]
  %v91 = vld [vmem:[%s1 + $0x18] sm:$0xf]
  %v92 = vld [vmem:[%s1 + $0x1c] sm:$0xf]
  %v93 = vld [vmem:[%s1 + $0x20] sm:$0xf]
  %v94 = vld [vmem:[%s1 + $0x24] sm:$0xf]
  %v95 = vld [vmem:[%s1 + $0x28] sm:$0xf]
  %v96 = vld [vmem:[%s1 + $0x2c] sm:$0xf]
  %v97 = vld [vmem:[%s1 + $0x30] sm:$0xf]
  %v98 = vld [vmem:[%s1 + $0x34] sm:$0xf]
  %v99 = vld [vmem:[%s1 + $0x38] sm:$0xf]
  %v100 = vld [vmem:[%s1 + $0x3c] sm:$0xf]
  %v101 = vld [vmem:[%s1 + $0x40] sm:$0xf]
  %v102 = vld [vmem:[%s1 + $0x44] sm:$0xf]
  %v103 = vld [vmem:[%s1 + $0x48] sm:$0xf]
  %v104 = vld [vmem:[%s1 + $0x4c] sm:$0xf]
  %v105 = vld [vmem:[%s1 + $0x50] sm:$0xf]
  %v106 = vld [vmem:[%s1 + $0x54] sm:$0xf]
  %v107 = vld [vmem:[%s1 + $0x58] sm:$0xf]
  %v108 = vld [vmem:[%s1 + $0x5c] sm:$0xf]
  %v109 = vld [vmem:[%s1 + $0x60] sm:$0xf]
  %v110 = vld [vmem:[%s1 + $0x64] sm:$0xf]
  %v111 = vld [vmem:[%s1 + $0x68] sm:$0xf]
  %v112 = vld [vmem:[%s1 + $0x6c] sm:$0xf]
  %v113 = vld [vmem:[%s1 + $0x70] sm:$0xf]
  %v114 = vld [vmem:[%s1 + $0x74] sm:$0xf]
  %v115 = vld [vmem:[%s1 + $0x78] sm:$0xf]
  %v116 = vld [vmem:[%s1 + $0x7c] sm:$0xf]
  %v117 = vld [vmem:[%s1 + $0x80] sm:$0xf]
  %v118 = vld [vmem:[%s1 + $0x84] sm:$0xf]
  %v119 = vld [vmem:[%s1 + $0x88] sm:$0xf]
  %v120 = vld [vmem:[%s1 + $0x8c] sm:$0xf]
  %v121 = vld [vmem:[%s2] sm:$0x1]
  %v123 = vlaneseq
  %v124 = vshrl.u32 %v123, 7
  %v125 = vsub.s32 0, %v124
  %v126 = vrot.slane %v121, %v125
  %v160 = vunpack.c.l.b16 %v53
  %v161 = vunpack.c.h.b16 %v53
  %v162 = vunpack.c.l.b16 %v54
  %v163 = vunpack.c.l.b16 %v55
  %v164 = vunpack.c.h.b16 %v55
  %v165 = vunpack.c.l.b16 %v56
  %v166 = vunpack.c.l.b16 %v57
  %v167 = vunpack.c.h.b16 %v57
  %v168 = vunpack.c.l.b16 %v58
  %v169 = vunpack.c.l.b16 %v59
  %v170 = vunpack.c.h.b16 %v59
  %v171 = vunpack.c.l.b16 %v60
  %v172 = vunpack.c.l.b16 %v61
  %v173 = vunpack.c.h.b16 %v61
  %v174 = vunpack.c.l.b16 %v62
  %v175 = vunpack.c.l.b16 %v63
  %v176 = vunpack.c.h.b16 %v63
  %v177 = vunpack.c.l.b16 %v64
  %v178 = vunpack.c.l.b16 %v65
  %v179 = vunpack.c.h.b16 %v65
  %v180 = vunpack.c.l.b16 %v66
  %v181 = vunpack.c.l.b16 %v67
  %v182 = vunpack.c.h.b16 %v67
  %v183 = vunpack.c.l.b16 %v68
  %v184 = vunpack.c.l.b16 %v69
  %v185 = vunpack.c.h.b16 %v69
  %v186 = vunpack.c.l.b16 %v70
  %v187 = vunpack.c.l.b16 %v71
  %v188 = vunpack.c.h.b16 %v71
  %v189 = vunpack.c.l.b16 %v72
  %v190 = vunpack.c.l.b16 %v73
  %v191 = vunpack.c.h.b16 %v73
  %v192 = vunpack.c.l.b16 %v74
  %v193 = vunpack.c.l.b16 %v75
  %v194 = vunpack.c.h.b16 %v75
  %v195 = vunpack.c.l.b16 %v76
  %v196 = vunpack.c.l.b16 %v77
  %v197 = vunpack.c.h.b16 %v77
  %v198 = vunpack.c.l.b16 %v78
  %v199 = vunpack.c.l.b16 %v79
  %v200 = vunpack.c.h.b16 %v79
  %v201 = vunpack.c.l.b16 %v80
  %v202 = vunpack.c.l.b16 %v81
  %v203 = vunpack.c.h.b16 %v81
  %v204 = vunpack.c.l.b16 %v82
  %v205 = vunpack.c.l.b16 %v83
  %v206 = vunpack.c.h.b16 %v83
  %v207 = vunpack.c.l.b16 %v84
  %v208 = vpack.c.b16 %v163, %v160
  %v209 = vpack.c.b16 %v164, %v161
  %v210 = vpack.c.b16 %v165, %v162
  %v211 = vpack.c.b16 %v169, %v166
  %v212 = vpack.c.b16 %v170, %v167
  %v213 = vpack.c.b16 %v171, %v168
  %v214 = vpack.c.b16 %v175, %v172
  %v215 = vpack.c.b16 %v176, %v173
  %v216 = vpack.c.b16 %v177, %v174
  %v217 = vpack.c.b16 %v181, %v178
  %v218 = vpack.c.b16 %v182, %v179
  %v219 = vpack.c.b16 %v183, %v180
  %v220 = vpack.c.b16 %v187, %v184
  %v221 = vpack.c.b16 %v188, %v185
  %v222 = vpack.c.b16 %v189, %v186
  %v223 = vpack.c.b16 %v193, %v190
  %v224 = vpack.c.b16 %v194, %v191
  %v225 = vpack.c.b16 %v195, %v192
  %v226 = vpack.c.b16 %v199, %v196
  %v227 = vpack.c.b16 %v200, %v197
  %v228 = vpack.c.b16 %v201, %v198
  %v229 = vpack.c.b16 %v205, %v202
  %v230 = vpack.c.b16 %v206, %v203
  %v231 = vpack.c.b16 %v207, %v204
  %v284 = vunpack.c.l.b16 %v85
  %v285 = vunpack.c.l.b16 %v86
  %v286 = vunpack.c.l.b16 %v87
  %v287 = vunpack.c.l.b16 %v88
  %v288 = vunpack.c.l.b16 %v89
  %v289 = vunpack.c.l.b16 %v90
  %v290 = vunpack.c.l.b16 %v91
  %v291 = vunpack.c.l.b16 %v92
  %v292 = vunpack.c.l.b16 %v93
  %v293 = vunpack.c.l.b16 %v94
  %v294 = vunpack.c.l.b16 %v95
  %v295 = vunpack.c.l.b16 %v96
  %v296 = vunpack.c.l.b16 %v97
  %v297 = vunpack.c.l.b16 %v98
  %v298 = vunpack.c.l.b16 %v99
  %v299 = vunpack.c.l.b16 %v100
  %v300 = vunpack.c.l.b16 %v101
  %v301 = vunpack.c.l.b16 %v102
  %v302 = vunpack.c.l.b16 %v103
  %v303 = vunpack.c.l.b16 %v104
  %v304 = vunpack.c.l.b16 %v105
  %v305 = vunpack.c.l.b16 %v106
  %v306 = vunpack.c.l.b16 %v107
  %v307 = vunpack.c.l.b16 %v108
  %v308 = vunpack.c.l.b16 %v109
  %v309 = vunpack.c.l.b16 %v110
  %v310 = vunpack.c.l.b16 %v111
  %v311 = vunpack.c.l.b16 %v112
  %v312 = vunpack.c.l.b16 %v113
  %v313 = vunpack.c.l.b16 %v114
  %v314 = vunpack.c.l.b16 %v115
  %v315 = vunpack.c.l.b16 %v116
  %v316 = vunpack.c.l.b16 %v117
  %v317 = vunpack.c.l.b16 %v118
  %v318 = vunpack.c.l.b16 %v119
  %v319 = vunpack.c.l.b16 %v120
  %v320 = vpack.c.b16 %v285, %v284
  %v321 = vpack.c.b16 %v287, %v286
  %v322 = vpack.c.b16 %v289, %v288
  %v323 = vpack.c.b16 %v291, %v290
  %v324 = vpack.c.b16 %v293, %v292
  %v325 = vpack.c.b16 %v295, %v294
  %v326 = vpack.c.b16 %v297, %v296
  %v327 = vpack.c.b16 %v299, %v298
  %v328 = vpack.c.b16 %v301, %v300
  %v329 = vpack.c.b16 %v303, %v302
  %v330 = vpack.c.b16 %v305, %v304
  %v331 = vpack.c.b16 %v307, %v306
  %v332 = vpack.c.b16 %v309, %v308
  %v333 = vpack.c.b16 %v311, %v310
  %v334 = vpack.c.b16 %v313, %v312
  %v335 = vpack.c.b16 %v315, %v314
  %v336 = vpack.c.b16 %v317, %v316
  %v337 = vpack.c.b16 %v319, %v318
  %vm356 = vcmask 261120
  %v358 = vsel %vm356, %v210, 0
  %v361 = vsel %vm356, %v213, 0
  %v364 = vsel %vm356, %v216, 0
  %v367 = vsel %vm356, %v219, 0
  %v370 = vsel %vm356, %v222, 0
  %v373 = vsel %vm356, %v225, 0
  %v376 = vsel %vm356, %v228, 0
  %v379 = vsel %vm356, %v231, 0
  %381 = vmatprep.subr.bf16.mxu0 0
  %382 = vmatpush1.bf16.msra.mxu0 %v320
  %383 = vmatprep.subr.bf16.mxu0 0
  %384 = vmatpush1.bf16.msra.mxu0 %v321
  %385 = vmatprep.subr.bf16.mxu0 0
  %386 = vmatpush1.bf16.msra.mxu0 %v322
  %387 = vmatprep.subr.bf16.mxu0 0
  %388 = vmatpush1.bf16.msra.mxu0 %v323
  %389 = vmatprep.subr.bf16.mxu0 0
  %390 = vmatpush1.bf16.msra.mxu0 %v324
  %391 = vmatprep.subr.bf16.mxu0 0
  %392 = vmatpush1.bf16.msra.mxu0 %v325
  %393 = vmatprep.subr.bf16.mxu0 0
  %394 = vmatpush1.bf16.msra.mxu0 %v326
  %395 = vmatprep.subr.bf16.mxu0 0
  %396 = vmatpush1.bf16.msra.mxu0 %v327
  %397 = vmatprep.subr.bf16.mxu0 0
  %398 = vmatpush1.bf16.msra.mxu0 %v328
  %399 = vmatprep.subr.bf16.mxu0 0
  %400 = vmatpush1.bf16.msra.mxu0 %v329
  %401 = vmatprep.subr.bf16.mxu0 0
  %402 = vmatpush1.bf16.msra.mxu0 %v330
  %403 = vmatprep.subr.bf16.mxu0 0
  %404 = vmatpush1.bf16.msra.mxu0 %v331
  %405 = vmatprep.subr.bf16.mxu0 0
  %406 = vmatpush1.bf16.msra.mxu0 %v332
  %407 = vmatprep.subr.bf16.mxu0 0
  %408 = vmatpush1.bf16.msra.mxu0 %v333
  %409 = vmatprep.subr.bf16.mxu0 0
  %410 = vmatpush1.bf16.msra.mxu0 %v334
  %411 = vmatprep.subr.bf16.mxu0 0
  %412 = vmatpush1.bf16.msra.mxu0 %v335
  %413 = vmatprep.mubr.bf16.mxu0 %v209
  %414 = vmatmul.mubr.bf16.gmra.mrb[0].mxu0 %v208
  %v415 = vpop.f32.mrb[0].mxu0
  %v416 = vadd.f32 %v126, %v415
  %v417 = vpop.f32.mrb[0].mxu0
  %v418 = vpop.f32.mrb[0].mxu0
  %v419 = vadd.f32 %v126, %v418
  %v420 = vpop.f32.mrb[0].mxu0
  %421 = vmatprep.mubr.bf16.mxu0 %v212
  %422 = vmatmul.mubr.bf16.gmra.mrb[0].mxu0 %v211
  %v423 = vpop.f32.mrb[0].mxu0
  %v424 = vadd.f32 %v126, %v423
  %v425 = vpop.f32.mrb[0].mxu0
  %v426 = vpop.f32.mrb[0].mxu0
  %v427 = vadd.f32 %v126, %v426
  %v428 = vpop.f32.mrb[0].mxu0
  %429 = vmatprep.mubr.bf16.mxu0 %v215
  %430 = vmatmul.mubr.bf16.gmra.mrb[0].mxu0 %v214
  %v431 = vpop.f32.mrb[0].mxu0
  %v432 = vadd.f32 %v126, %v431
  %v433 = vpop.f32.mrb[0].mxu0
  %v434 = vpop.f32.mrb[0].mxu0
  %v435 = vadd.f32 %v126, %v434
  %v436 = vpop.f32.mrb[0].mxu0
  %437 = vmatprep.mubr.bf16.mxu0 %v218
  %438 = vmatmul.mubr.bf16.gmra.mrb[0].mxu0 %v217
  %v439 = vpop.f32.mrb[0].mxu0
  %v440 = vadd.f32 %v126, %v439
  %v441 = vpop.f32.mrb[0].mxu0
  %v442 = vpop.f32.mrb[0].mxu0
  %v443 = vadd.f32 %v126, %v442
  %v444 = vpop.f32.mrb[0].mxu0
  %445 = vmatprep.mubr.bf16.mxu0 %v221
  %446 = vmatmul.mubr.bf16.gmra.mrb[0].mxu0 %v220
  %v447 = vpop.f32.mrb[0].mxu0
  %v448 = vadd.f32 %v126, %v447
  %v449 = vpop.f32.mrb[0].mxu0
  %v450 = vpop.f32.mrb[0].mxu0
  %v451 = vadd.f32 %v126, %v450
  %v452 = vpop.f32.mrb[0].mxu0
  %453 = vmatprep.mubr.bf16.mxu0 %v224
  %454 = vmatmul.mubr.bf16.gmra.mrb[0].mxu0 %v223
  %v455 = vpop.f32.mrb[0].mxu0
  %v456 = vadd.f32 %v126, %v455
  %v457 = vpop.f32.mrb[0].mxu0
  %v458 = vpop.f32.mrb[0].mxu0
  %v459 = vadd.f32 %v126, %v458
  %v460 = vpop.f32.mrb[0].mxu0
  %461 = vmatprep.mubr.bf16.mxu0 %v227
  %462 = vmatmul.mubr.bf16.gmra.mrb[0].mxu0 %v226
  %v463 = vpop.f32.mrb[0].mxu0
  %v464 = vadd.f32 %v126, %v463
  %v465 = vpop.f32.mrb[0].mxu0
  %v466 = vpop.f32.mrb[0].mxu0
  %v467 = vadd.f32 %v126, %v466
  %v468 = vpop.f32.mrb[0].mxu0
  %469 = vmatprep.mubr.bf16.mxu0 %v230
  %470 = vmatmul.mubr.bf16.gmra.mrb[0].mxu0 %v229
  %v471 = vpop.f32.mrb[0].mxu0
  %v472 = vadd.f32 %v126, %v471
  %v473 = vpop.f32.mrb[0].mxu0
  %v474 = vpop.f32.mrb[0].mxu0
  %v475 = vadd.f32 %v126, %v474
  %v476 = vpop.f32.mrb[0].mxu0
  %477 = vdwg.mxu0
  %478 = vmatprep.subr.bf16.mxu0 0
  %479 = vmatpush1.bf16.msra.mxu0 %v336
  %480 = vmatprep.subr.bf16.mxu0 0
  %481 = vmatpush1.bf16.msra.mxu0 %v337
  %482 = vmatprep.subr.bf16.mxu0 0
  %483 = vmatpush1.bf16.msra.mxu0 0
  %484 = vmatprep.subr.bf16.mxu0 0
  %485 = vmatpush1.bf16.msra.mxu0 0
  %486 = vmatprep.subr.bf16.mxu0 0
  %487 = vmatpush1.bf16.msra.mxu0 0
  %488 = vmatprep.subr.bf16.mxu0 0
  %489 = vmatpush1.bf16.msra.mxu0 0
  %490 = vmatprep.subr.bf16.mxu0 0
  %491 = vmatpush1.bf16.msra.mxu0 0
  %492 = vmatprep.subr.bf16.mxu0 0
  %493 = vmatpush1.bf16.msra.mxu0 0
  %494 = vmatprep.subr.bf16.mxu0 0
  %495 = vmatpush1.bf16.msra.mxu0 0
  %496 = vmatprep.subr.bf16.mxu0 0
  %497 = vmatpush1.bf16.msra.mxu0 0
  %498 = vmatprep.subr.bf16.mxu0 0
  %499 = vmatpush1.bf16.msra.mxu0 0
  %500 = vmatprep.subr.bf16.mxu0 0
  %501 = vmatpush1.bf16.msra.mxu0 0
  %502 = vmatprep.subr.bf16.mxu0 0
  %503 = vmatpush1.bf16.msra.mxu0 0
  %504 = vmatprep.subr.bf16.mxu0 0
  %505 = vmatpush1.bf16.msra.mxu0 0
  %506 = vmatprep.subr.bf16.mxu0 0
  %507 = vmatpush1.bf16.msra.mxu0 0
  %508 = vmatprep.subr.bf16.mxu0 0
  %509 = vmatpush1.bf16.msra.mxu0 0
  %510 = vmatprep.mubr.bf16.mxu0 0
  %511 = vmatmul.mubr.bf16.gmra.mrb[0].mxu0 %v358
  %v512 = vpop.f32.mrb[0].mxu0
  %v513 = vadd.f32 %v416, %v512
  %v514 = vpop.f32.mrb[0].mxu0
  %v515 = vpop.f32.mrb[0].mxu0
  %v516 = vadd.f32 %v419, %v515
  %v517 = vpop.f32.mrb[0].mxu0
  %518 = vmatprep.mubr.bf16.mxu0 0
  %519 = vmatmul.mubr.bf16.gmra.mrb[0].mxu0 %v361
  %v520 = vpop.f32.mrb[0].mxu0
  %v521 = vadd.f32 %v424, %v520
  %v522 = vpop.f32.mrb[0].mxu0
  %v523 = vpop.f32.mrb[0].mxu0
  %v524 = vadd.f32 %v427, %v523
  %v525 = vpop.f32.mrb[0].mxu0
  %526 = vmatprep.mubr.bf16.mxu0 0
  %527 = vmatmul.mubr.bf16.gmra.mrb[0].mxu0 %v364
  %v528 = vpop.f32.mrb[0].mxu0
  %v529 = vadd.f32 %v432, %v528
  %v530 = vpop.f32.mrb[0].mxu0
  %v531 = vpop.f32.mrb[0].mxu0
  %v532 = vadd.f32 %v435, %v531
  %v533 = vpop.f32.mrb[0].mxu0
  %534 = vmatprep.mubr.bf16.mxu0 0
  %535 = vmatmul.mubr.bf16.gmra.mrb[0].mxu0 %v367
  %v536 = vpop.f32.mrb[0].mxu0
  %v537 = vadd.f32 %v440, %v536
  %v538 = vpop.f32.mrb[0].mxu0
  %v539 = vpop.f32.mrb[0].mxu0
  %v540 = vadd.f32 %v443, %v539
  %v541 = vpop.f32.mrb[0].mxu0
  %542 = vmatprep.mubr.bf16.mxu0 0
  %543 = vmatmul.mubr.bf16.gmra.mrb[0].mxu0 %v370
  %v544 = vpop.f32.mrb[0].mxu0
  %v545 = vadd.f32 %v448, %v544
  %v546 = vpop.f32.mrb[0].mxu0
  %v547 = vpop.f32.mrb[0].mxu0
  %v548 = vadd.f32 %v451, %v547
  %v549 = vpop.f32.mrb[0].mxu0
  %550 = vmatprep.mubr.bf16.mxu0 0
  %551 = vmatmul.mubr.bf16.gmra.mrb[0].mxu0 %v373
  %v552 = vpop.f32.mrb[0].mxu0
  %v553 = vadd.f32 %v456, %v552
  %v554 = vpop.f32.mrb[0].mxu0
  %v555 = vpop.f32.mrb[0].mxu0
  %v556 = vadd.f32 %v459, %v555
  %v557 = vpop.f32.mrb[0].mxu0
  %558 = vmatprep.mubr.bf16.mxu0 0
  %559 = vmatmul.mubr.bf16.gmra.mrb[0].mxu0 %v376
  %v560 = vpop.f32.mrb[0].mxu0
  %v561 = vadd.f32 %v464, %v560
  %v562 = vpop.f32.mrb[0].mxu0
  %v563 = vpop.f32.mrb[0].mxu0
  %v564 = vadd.f32 %v467, %v563
  %v565 = vpop.f32.mrb[0].mxu0
  %566 = vmatprep.mubr.bf16.mxu0 0
  %567 = vmatmul.mubr.bf16.gmra.mrb[0].mxu0 %v379
  %v568 = vpop.f32.mrb[0].mxu0
  %v569 = vadd.f32 %v472, %v568
  %v570 = vpop.f32.mrb[0].mxu0
  %v571 = vpop.f32.mrb[0].mxu0
  %v572 = vadd.f32 %v475, %v571
  %v573 = vpop.f32.mrb[0].mxu0
  %574 = vdwg.mxu0
  %v575 = vmax.f32 %v513, 0.0
  %v576 = vmax.f32 %v516, 0.0
  %v577 = vmax.f32 %v521, 0.0
  %v578 = vmax.f32 %v524, 0.0
  %v579 = vmax.f32 %v529, 0.0
  %v580 = vmax.f32 %v532, 0.0
  %v581 = vmax.f32 %v537, 0.0
  %v582 = vmax.f32 %v540, 0.0
  %v583 = vmax.f32 %v545, 0.0
  %v584 = vmax.f32 %v548, 0.0
  %v585 = vmax.f32 %v553, 0.0
  %v586 = vmax.f32 %v556, 0.0
  %v587 = vmax.f32 %v561, 0.0
  %v588 = vmax.f32 %v564, 0.0
  %v589 = vmax.f32 %v569, 0.0
  %v590 = vmax.f32 %v572, 0.0
  %v591 = vpack.c.bf16 %v575, %v575
  %v592 = vld [vmem:[%s3] sm:$0xff]
  %v593 = vld [vmem:[%s3 + $0x8] sm:$0xff]
  %v594 = vld [vmem:[%s3 + $0x10] sm:$0xff]
  %v595 = vld [vmem:[%s3 + $0x18] sm:$0xff]
  %v596 = vld [vmem:[%s3 + $0x20] sm:$0xff]
  %v597 = vld [vmem:[%s3 + $0x28] sm:$0xff]
  %v598 = vld [vmem:[%s3 + $0x30] sm:$0xff]
  %v599 = vld [vmem:[%s3 + $0x38] sm:$0xff]
  %v600 = vld [vmem:[%s3 + $0x40] sm:$0xff]
  %v601 = vld [vmem:[%s3 + $0x48] sm:$0xff]
  %v602 = vld [vmem:[%s3 + $0x50] sm:$0xff]
  %v603 = vld [vmem:[%s3 + $0x58] sm:$0xff]
  %v604 = vld [vmem:[%s3 + $0x60] sm:$0xff]
  %v605 = vld [vmem:[%s3 + $0x68] sm:$0xff]
  %v606 = vld [vmem:[%s3 + $0x70] sm:$0xff]
  %v607 = vld [vmem:[%s3 + $0x78] sm:$0xff]
  %v608 = vpack.c.bf16 %v576, %v576
  %v609 = vld [vmem:[%s3 + $0x80] sm:$0xff]
  %v610 = vld [vmem:[%s3 + $0x88] sm:$0xff]
  %v611 = vld [vmem:[%s3 + $0x90] sm:$0xff]
  %v612 = vld [vmem:[%s3 + $0x98] sm:$0xff]
  %v613 = vld [vmem:[%s3 + $0xa0] sm:$0xff]
  %v614 = vld [vmem:[%s3 + $0xa8] sm:$0xff]
  %v615 = vld [vmem:[%s3 + $0xb0] sm:$0xff]
  %v616 = vld [vmem:[%s3 + $0xb8] sm:$0xff]
  %v617 = vld [vmem:[%s3 + $0xc0] sm:$0xff]
  %v618 = vld [vmem:[%s3 + $0xc8] sm:$0xff]
  %v619 = vld [vmem:[%s3 + $0xd0] sm:$0xff]
  %v620 = vld [vmem:[%s3 + $0xd8] sm:$0xff]
  %v621 = vld [vmem:[%s3 + $0xe0] sm:$0xff]
  %v622 = vld [vmem:[%s3 + $0xe8] sm:$0xff]
  %v623 = vld [vmem:[%s3 + $0xf0] sm:$0xff]
  %v624 = vld [vmem:[%s3 + $0xf8] sm:$0xff]
  %v641 = vunpack.c.l.b16 %v609
  %v642 = vunpack.c.h.b16 %v609
  %v643 = vunpack.c.l.b16 %v610
  %v644 = vunpack.c.h.b16 %v610
  %v645 = vunpack.c.l.b16 %v611
  %v646 = vunpack.c.h.b16 %v611
  %v647 = vunpack.c.l.b16 %v612
  %v648 = vunpack.c.h.b16 %v612
  %v649 = vunpack.c.l.b16 %v613
  %v650 = vunpack.c.h.b16 %v613
  %v651 = vunpack.c.l.b16 %v614
  %v652 = vunpack.c.h.b16 %v614
  %v653 = vunpack.c.l.b16 %v615
  %v654 = vunpack.c.h.b16 %v615
  %v655 = vunpack.c.l.b16 %v616
  %v656 = vunpack.c.h.b16 %v616
  %v657 = vunpack.c.l.b16 %v617
  %v658 = vunpack.c.h.b16 %v617
  %v659 = vunpack.c.l.b16 %v618
  %v660 = vunpack.c.h.b16 %v618
  %v661 = vunpack.c.l.b16 %v619
  %v662 = vunpack.c.h.b16 %v619
  %v663 = vunpack.c.l.b16 %v620
  %v664 = vunpack.c.h.b16 %v620
  %v665 = vunpack.c.l.b16 %v621
  %v666 = vunpack.c.h.b16 %v621
  %v667 = vunpack.c.l.b16 %v622
  %v668 = vunpack.c.h.b16 %v622
  %v669 = vunpack.c.l.b16 %v623
  %v670 = vunpack.c.h.b16 %v623
  %v671 = vunpack.c.l.b16 %v624
  %v672 = vunpack.c.h.b16 %v624
  %v673 = vpack.c.b16 %v645, %v641
  %v674 = vpack.c.b16 %v646, %v642
  %v675 = vpack.c.b16 %v647, %v643
  %v676 = vpack.c.b16 %v648, %v644
  %v677 = vpack.c.b16 %v653, %v649
  %v678 = vpack.c.b16 %v654, %v650
  %v679 = vpack.c.b16 %v655, %v651
  %v680 = vpack.c.b16 %v656, %v652
  %v681 = vpack.c.b16 %v661, %v657
  %v682 = vpack.c.b16 %v662, %v658
  %v683 = vpack.c.b16 %v663, %v659
  %v684 = vpack.c.b16 %v664, %v660
  %v685 = vpack.c.b16 %v669, %v665
  %v686 = vpack.c.b16 %v670, %v666
  %v687 = vpack.c.b16 %v671, %v667
  %v688 = vpack.c.b16 %v672, %v668
  %vm705 = vcmask 523264
  %v707 = vsel %vm705, %v608, 0
  %709 = vmatprep.subr.bf16.mxu0 %v674
  %710 = vmatpush1.bf16.msra.mxu0 %v673
  %711 = vmatprep.subr.bf16.mxu0 %v678
  %712 = vmatpush1.bf16.msra.mxu0 %v677
  %713 = vmatprep.subr.bf16.mxu0 %v682
  %714 = vmatpush1.bf16.msra.mxu0 %v681
  %715 = vmatprep.subr.bf16.mxu0 %v686
  %716 = vmatpush1.bf16.msra.mxu0 %v685
  %717 = vmatprep.subr.bf16.mxu0 0
  %718 = vmatpush1.bf16.msra.mxu0 0
  %719 = vmatprep.subr.bf16.mxu0 0
  %720 = vmatpush1.bf16.msra.mxu0 0
  %721 = vmatprep.subr.bf16.mxu0 0
  %722 = vmatpush1.bf16.msra.mxu0 0
  %723 = vmatprep.subr.bf16.mxu0 0
  %724 = vmatpush1.bf16.msra.mxu0 0
  %725 = vmatprep.subr.bf16.mxu0 0
  %726 = vmatpush1.bf16.msra.mxu0 0
  %727 = vmatprep.subr.bf16.mxu0 0
  %728 = vmatpush1.bf16.msra.mxu0 0
  %729 = vmatprep.subr.bf16.mxu0 0
  %730 = vmatpush1.bf16.msra.mxu0 0
  %731 = vmatprep.subr.bf16.mxu0 0
  %732 = vmatpush1.bf16.msra.mxu0 0
  %733 = vmatprep.subr.bf16.mxu0 0
  %734 = vmatpush1.bf16.msra.mxu0 0
  %735 = vmatprep.subr.bf16.mxu0 0
  %736 = vmatpush1.bf16.msra.mxu0 0
  %737 = vmatprep.subr.bf16.mxu0 0
  %738 = vmatpush1.bf16.msra.mxu0 0
  %739 = vmatprep.subr.bf16.mxu0 0
  %740 = vmatpush1.bf16.msra.mxu0 0
  %741 = vmatprep.mubr.bf16.mxu0 0
  %742 = vmatmul.mubr.bf16.gmra.mrb[0].mxu0 %v707
  %v743 = vpop.f32.mrb[0].mxu0
  %v744 = vadd.f32 0.0, %v743
  %v745 = vpop.f32.mrb[0].mxu0
  %v746 = vadd.f32 0.0, %v745
  %v747 = vpop.f32.mrb[0].mxu0
  %v748 = vpop.f32.mrb[0].mxu0
  %749 = vdwg.mxu0
  %750 = vmatprep.subr.bf16.mxu0 %v676
  %751 = vmatpush1.bf16.msra.mxu0 %v675
  %752 = vmatprep.subr.bf16.mxu0 %v680
  %753 = vmatpush1.bf16.msra.mxu0 %v679
  %754 = vmatprep.subr.bf16.mxu0 %v684
  %755 = vmatpush1.bf16.msra.mxu0 %v683
  %756 = vmatprep.subr.bf16.mxu0 %v688
  %757 = vmatpush1.bf16.msra.mxu0 %v687
  %758 = vmatprep.subr.bf16.mxu0 0
  %759 = vmatpush1.bf16.msra.mxu0 0
  %760 = vmatprep.subr.bf16.mxu0 0
  %761 = vmatpush1.bf16.msra.mxu0 0
  %762 = vmatprep.subr.bf16.mxu0 0
  %763 = vmatpush1.bf16.msra.mxu0 0
  %764 = vmatprep.subr.bf16.mxu0 0
  %765 = vmatpush1.bf16.msra.mxu0 0
  %766 = vmatprep.subr.bf16.mxu0 0
  %767 = vmatpush1.bf16.msra.mxu0 0
  %768 = vmatprep.subr.bf16.mxu0 0
  %769 = vmatpush1.bf16.msra.mxu0 0
  %770 = vmatprep.subr.bf16.mxu0 0
  %771 = vmatpush1.bf16.msra.mxu0 0
  %772 = vmatprep.subr.bf16.mxu0 0
  %773 = vmatpush1.bf16.msra.mxu0 0
  %774 = vmatprep.subr.bf16.mxu0 0
  %775 = vmatpush1.bf16.msra.mxu0 0
  %776 = vmatprep.subr.bf16.mxu0 0
  %777 = vmatpush1.bf16.msra.mxu0 0
  %778 = vmatprep.subr.bf16.mxu0 0
  %779 = vmatpush1.bf16.msra.mxu0 0
  %780 = vmatprep.subr.bf16.mxu0 0
  %781 = vmatpush1.bf16.msra.mxu0 0
  %782 = vmatprep.mubr.bf16.mxu0 0
  %783 = vmatmul.mubr.bf16.gmra.mrb[0].mxu0 %v707
  %v784 = vpop.f32.mrb[0].mxu0
  %v785 = vadd.f32 0.0, %v784
  %v786 = vpop.f32.mrb[0].mxu0
  %v787 = vadd.f32 0.0, %v786
  %v788 = vpop.f32.mrb[0].mxu0
  %v789 = vpop.f32.mrb[0].mxu0
  %790 = vdwg.mxu0
  %v807 = vunpack.c.l.b16 %v592
  %v808 = vunpack.c.h.b16 %v592
  %v809 = vunpack.c.l.b16 %v593
  %v810 = vunpack.c.h.b16 %v593
  %v811 = vunpack.c.l.b16 %v594
  %v812 = vunpack.c.h.b16 %v594
  %v813 = vunpack.c.l.b16 %v595
  %v814 = vunpack.c.h.b16 %v595
  %v815 = vunpack.c.l.b16 %v596
  %v816 = vunpack.c.h.b16 %v596
  %v817 = vunpack.c.l.b16 %v597
  %v818 = vunpack.c.h.b16 %v597
  %v819 = vunpack.c.l.b16 %v598
  %v820 = vunpack.c.h.b16 %v598
  %v821 = vunpack.c.l.b16 %v599
  %v822 = vunpack.c.h.b16 %v599
  %v823 = vunpack.c.l.b16 %v600
  %v824 = vunpack.c.h.b16 %v600
  %v825 = vunpack.c.l.b16 %v601
  %v826 = vunpack.c.h.b16 %v601
  %v827 = vunpack.c.l.b16 %v602
  %v828 = vunpack.c.h.b16 %v602
  %v829 = vunpack.c.l.b16 %v603
  %v830 = vunpack.c.h.b16 %v603
  %v831 = vunpack.c.l.b16 %v604
  %v832 = vunpack.c.h.b16 %v604
  %v833 = vunpack.c.l.b16 %v605
  %v834 = vunpack.c.h.b16 %v605
  %v835 = vunpack.c.l.b16 %v606
  %v836 = vunpack.c.h.b16 %v606
  %v837 = vunpack.c.l.b16 %v607
  %v838 = vunpack.c.h.b16 %v607
  %v839 = vpack.c.b16 %v811, %v807
  %v840 = vpack.c.b16 %v812, %v808
  %v841 = vpack.c.b16 %v813, %v809
  %v842 = vpack.c.b16 %v814, %v810
  %v843 = vpack.c.b16 %v819, %v815
  %v844 = vpack.c.b16 %v820, %v816
  %v845 = vpack.c.b16 %v821, %v817
  %v846 = vpack.c.b16 %v822, %v818
  %v847 = vpack.c.b16 %v827, %v823
  %v848 = vpack.c.b16 %v828, %v824
  %v849 = vpack.c.b16 %v829, %v825
  %v850 = vpack.c.b16 %v830, %v826
  %v851 = vpack.c.b16 %v835, %v831
  %v852 = vpack.c.b16 %v836, %v832
  %v853 = vpack.c.b16 %v837, %v833
  %v854 = vpack.c.b16 %v838, %v834
  %v872 = vsel %vm705, %v591, 0
  %874 = vmatprep.subr.bf16.mxu0 %v840
  %875 = vmatpush1.bf16.msra.mxu0 %v839
  %876 = vmatprep.subr.bf16.mxu0 %v844
  %877 = vmatpush1.bf16.msra.mxu0 %v843
  %878 = vmatprep.subr.bf16.mxu0 %v848
  %879 = vmatpush1.bf16.msra.mxu0 %v847
  %880 = vmatprep.subr.bf16.mxu0 %v852
  %881 = vmatpush1.bf16.msra.mxu0 %v851
  %882 = vmatprep.subr.bf16.mxu0 0
  %883 = vmatpush1.bf16.msra.mxu0 0
  %884 = vmatprep.subr.bf16.mxu0 0
  %885 = vmatpush1.bf16.msra.mxu0 0
  %886 = vmatprep.subr.bf16.mxu0 0
  %887 = vmatpush1.bf16.msra.mxu0 0
  %888 = vmatprep.subr.bf16.mxu0 0
  %889 = vmatpush1.bf16.msra.mxu0 0
  %890 = vmatprep.subr.bf16.mxu0 0
  %891 = vmatpush1.bf16.msra.mxu0 0
  %892 = vmatprep.subr.bf16.mxu0 0
  %893 = vmatpush1.bf16.msra.mxu0 0
  %894 = vmatprep.subr.bf16.mxu0 0
  %895 = vmatpush1.bf16.msra.mxu0 0
  %896 = vmatprep.subr.bf16.mxu0 0
  %897 = vmatpush1.bf16.msra.mxu0 0
  %898 = vmatprep.subr.bf16.mxu0 0
  %899 = vmatpush1.bf16.msra.mxu0 0
  %900 = vmatprep.subr.bf16.mxu0 0
  %901 = vmatpush1.bf16.msra.mxu0 0
  %902 = vmatprep.subr.bf16.mxu0 0
  %903 = vmatpush1.bf16.msra.mxu0 0
  %904 = vmatprep.subr.bf16.mxu0 0
  %905 = vmatpush1.bf16.msra.mxu0 0
  %906 = vmatprep.mubr.bf16.mxu0 0
  %907 = vmatmul.mubr.bf16.gmra.mrb[0].mxu0 %v872
  %v908 = vpop.f32.mrb[0].mxu0
  %v909 = vadd.f32 %v744, %v908
  %v910 = vpop.f32.mrb[0].mxu0
  %v911 = vadd.f32 %v746, %v910
  %v912 = vpop.f32.mrb[0].mxu0
  %v913 = vpop.f32.mrb[0].mxu0
  %914 = vdwg.mxu0
  %915 = vmatprep.subr.bf16.mxu0 %v842
  %916 = vmatpush1.bf16.msra.mxu0 %v841
  %917 = vmatprep.subr.bf16.mxu0 %v846
  %918 = vmatpush1.bf16.msra.mxu0 %v845
  %919 = vmatprep.subr.bf16.mxu0 %v850
  %920 = vmatpush1.bf16.msra.mxu0 %v849
  %921 = vmatprep.subr.bf16.mxu0 %v854
  %922 = vmatpush1.bf16.msra.mxu0 %v853
  %923 = vmatprep.subr.bf16.mxu0 0
  %924 = vmatpush1.bf16.msra.mxu0 0
  %925 = vmatprep.subr.bf16.mxu0 0
  %926 = vmatpush1.bf16.msra.mxu0 0
  %927 = vmatprep.subr.bf16.mxu0 0
  %928 = vmatpush1.bf16.msra.mxu0 0
  %929 = vmatprep.subr.bf16.mxu0 0
  %930 = vmatpush1.bf16.msra.mxu0 0
  %931 = vmatprep.subr.bf16.mxu0 0
  %932 = vmatpush1.bf16.msra.mxu0 0
  %933 = vmatprep.subr.bf16.mxu0 0
  %934 = vmatpush1.bf16.msra.mxu0 0
  %935 = vmatprep.subr.bf16.mxu0 0
  %936 = vmatpush1.bf16.msra.mxu0 0
  %937 = vmatprep.subr.bf16.mxu0 0
  %938 = vmatpush1.bf16.msra.mxu0 0
  %939 = vmatprep.subr.bf16.mxu0 0
  %940 = vmatpush1.bf16.msra.mxu0 0
  %941 = vmatprep.subr.bf16.mxu0 0
  %942 = vmatpush1.bf16.msra.mxu0 0
  %943 = vmatprep.subr.bf16.mxu0 0
  %944 = vmatpush1.bf16.msra.mxu0 0
  %945 = vmatprep.subr.bf16.mxu0 0
  %946 = vmatpush1.bf16.msra.mxu0 0
  %947 = vmatprep.mubr.bf16.mxu0 0
  %948 = vmatmul.mubr.bf16.gmra.mrb[0].mxu0 %v872
  %v949 = vpop.f32.mrb[0].mxu0
  %v950 = vadd.f32 %v785, %v949
  %v951 = vpop.f32.mrb[0].mxu0
  %v952 = vadd.f32 %v787, %v951
  %v953 = vpop.f32.mrb[0].mxu0
  %v954 = vpop.f32.mrb[0].mxu0
  %955 = vdwg.mxu0
  %v956 = vpack.c.bf16 %v577, %v577
  %v957 = vld [vmem:[%s3 + $0x100] sm:$0xff]
  %v958 = vld [vmem:[%s3 + $0x108] sm:$0xff]
  %v959 = vld [vmem:[%s3 + $0x110] sm:$0xff]
  %v960 = vld [vmem:[%s3 + $0x118] sm:$0xff]
  %v961 = vld [vmem:[%s3 + $0x120] sm:$0xff]
  %v962 = vld [vmem:[%s3 + $0x128] sm:$0xff]
  %v963 = vld [vmem:[%s3 + $0x130] sm:$0xff]
  %v964 = vld [vmem:[%s3 + $0x138] sm:$0xff]
  %v965 = vld [vmem:[%s3 + $0x140] sm:$0xff]
  %v966 = vld [vmem:[%s3 + $0x148] sm:$0xff]
  %v967 = vld [vmem:[%s3 + $0x150] sm:$0xff]
  %v968 = vld [vmem:[%s3 + $0x158] sm:$0xff]
  %v969 = vld [vmem:[%s3 + $0x160] sm:$0xff]
  %v970 = vld [vmem:[%s3 + $0x168] sm:$0xff]
  %v971 = vld [vmem:[%s3 + $0x170] sm:$0xff]
  %v972 = vld [vmem:[%s3 + $0x178] sm:$0xff]
  %v989 = vunpack.c.l.b16 %v957
  %v990 = vunpack.c.h.b16 %v957
  %v991 = vunpack.c.l.b16 %v958
  %v992 = vunpack.c.h.b16 %v958
  %v993 = vunpack.c.l.b16 %v959
  %v994 = vunpack.c.h.b16 %v959
  %v995 = vunpack.c.l.b16 %v960
  %v996 = vunpack.c.h.b16 %v960
  %v997 = vunpack.c.l.b16 %v961
  %v998 = vunpack.c.h.b16 %v961
  %v999 = vunpack.c.l.b16 %v962
  %v1000 = vunpack.c.h.b16 %v962
  %v1001 = vunpack.c.l.b16 %v963
  %v1002 = vunpack.c.h.b16 %v963
  %v1003 = vunpack.c.l.b16 %v964
  %v1004 = vunpack.c.h.b16 %v964
  %v1005 = vunpack.c.l.b16 %v965
  %v1006 = vunpack.c.h.b16 %v965
  %v1007 = vunpack.c.l.b16 %v966
  %v1008 = vunpack.c.h.b16 %v966
  %v1009 = vunpack.c.l.b16 %v967
  %v1010 = vunpack.c.h.b16 %v967
  %v1011 = vunpack.c.l.b16 %v968
  %v1012 = vunpack.c.h.b16 %v968
  %v1013 = vunpack.c.l.b16 %v969
  %v1014 = vunpack.c.h.b16 %v969
  %v1015 = vunpack.c.l.b16 %v970
  %v1016 = vunpack.c.h.b16 %v970
  %v1017 = vunpack.c.l.b16 %v971
  %v1018 = vunpack.c.h.b16 %v971
  %v1019 = vunpack.c.l.b16 %v972
  %v1020 = vunpack.c.h.b16 %v972
  %v1021 = vpack.c.b16 %v993, %v989
  %v1022 = vpack.c.b16 %v994, %v990
  %v1023 = vpack.c.b16 %v995, %v991
  %v1024 = vpack.c.b16 %v996, %v992
  %v1025 = vpack.c.b16 %v1001, %v997
  %v1026 = vpack.c.b16 %v1002, %v998
  %v1027 = vpack.c.b16 %v1003, %v999
  %v1028 = vpack.c.b16 %v1004, %v1000
  %v1029 = vpack.c.b16 %v1009, %v1005
  %v1030 = vpack.c.b16 %v1010, %v1006
  %v1031 = vpack.c.b16 %v1011, %v1007
  %v1032 = vpack.c.b16 %v1012, %v1008
  %v1033 = vpack.c.b16 %v1017, %v1013
  %v1034 = vpack.c.b16 %v1018, %v1014
  %v1035 = vpack.c.b16 %v1019, %v1015
  %v1036 = vpack.c.b16 %v1020, %v1016
  %v1054 = vsel %vm705, %v956, 0
  %1056 = vmatprep.subr.bf16.mxu0 %v1022
  %1057 = vmatpush1.bf16.msra.mxu0 %v1021
  %1058 = vmatprep.subr.bf16.mxu0 %v1026
  %1059 = vmatpush1.bf16.msra.mxu0 %v1025
  %1060 = vmatprep.subr.bf16.mxu0 %v1030
  %1061 = vmatpush1.bf16.msra.mxu0 %v1029
  %1062 = vmatprep.subr.bf16.mxu0 %v1034
  %1063 = vmatpush1.bf16.msra.mxu0 %v1033
  %1064 = vmatprep.subr.bf16.mxu0 0
  %1065 = vmatpush1.bf16.msra.mxu0 0
  %1066 = vmatprep.subr.bf16.mxu0 0
  %1067 = vmatpush1.bf16.msra.mxu0 0
  %1068 = vmatprep.subr.bf16.mxu0 0
  %1069 = vmatpush1.bf16.msra.mxu0 0
  %1070 = vmatprep.subr.bf16.mxu0 0
  %1071 = vmatpush1.bf16.msra.mxu0 0
  %1072 = vmatprep.subr.bf16.mxu0 0
  %1073 = vmatpush1.bf16.msra.mxu0 0
  %1074 = vmatprep.subr.bf16.mxu0 0
  %1075 = vmatpush1.bf16.msra.mxu0 0
  %1076 = vmatprep.subr.bf16.mxu0 0
  %1077 = vmatpush1.bf16.msra.mxu0 0
  %1078 = vmatprep.subr.bf16.mxu0 0
  %1079 = vmatpush1.bf16.msra.mxu0 0
  %1080 = vmatprep.subr.bf16.mxu0 0
  %1081 = vmatpush1.bf16.msra.mxu0 0
  %1082 = vmatprep.subr.bf16.mxu0 0
  %1083 = vmatpush1.bf16.msra.mxu0 0
  %1084 = vmatprep.subr.bf16.mxu0 0
  %1085 = vmatpush1.bf16.msra.mxu0 0
  %1086 = vmatprep.subr.bf16.mxu0 0
  %1087 = vmatpush1.bf16.msra.mxu0 0
  %1088 = vmatprep.mubr.bf16.mxu0 0
  %1089 = vmatmul.mubr.bf16.gmra.mrb[0].mxu0 %v1054
  %v1090 = vpop.f32.mrb[0].mxu0
  %v1091 = vadd.f32 0.0, %v1090
  %v1092 = vpop.f32.mrb[0].mxu0
  %v1093 = vadd.f32 0.0, %v1092
  %v1094 = vpop.f32.mrb[0].mxu0
  %v1095 = vpop.f32.mrb[0].mxu0
  %1096 = vdwg.mxu0
  %1097 = vmatprep.subr.bf16.mxu0 %v1024
  %1098 = vmatpush1.bf16.msra.mxu0 %v1023
  %1099 = vmatprep.subr.bf16.mxu0 %v1028
  %1100 = vmatpush1.bf16.msra.mxu0 %v1027
  %1101 = vmatprep.subr.bf16.mxu0 %v1032
  %1102 = vmatpush1.bf16.msra.mxu0 %v1031
  %1103 = vmatprep.subr.bf16.mxu0 %v1036
  %1104 = vmatpush1.bf16.msra.mxu0 %v1035
  %1105 = vmatprep.subr.bf16.mxu0 0
  %1106 = vmatpush1.bf16.msra.mxu0 0
  %1107 = vmatprep.subr.bf16.mxu0 0
  %1108 = vmatpush1.bf16.msra.mxu0 0
  %1109 = vmatprep.subr.bf16.mxu0 0
  %1110 = vmatpush1.bf16.msra.mxu0 0
  %1111 = vmatprep.subr.bf16.mxu0 0
  %1112 = vmatpush1.bf16.msra.mxu0 0
  %1113 = vmatprep.subr.bf16.mxu0 0
  %1114 = vmatpush1.bf16.msra.mxu0 0
  %1115 = vmatprep.subr.bf16.mxu0 0
  %1116 = vmatpush1.bf16.msra.mxu0 0
  %1117 = vmatprep.subr.bf16.mxu0 0
  %1118 = vmatpush1.bf16.msra.mxu0 0
  %1119 = vmatprep.subr.bf16.mxu0 0
  %1120 = vmatpush1.bf16.msra.mxu0 0
  %1121 = vmatprep.subr.bf16.mxu0 0
  %1122 = vmatpush1.bf16.msra.mxu0 0
  %1123 = vmatprep.subr.bf16.mxu0 0
  %1124 = vmatpush1.bf16.msra.mxu0 0
  %1125 = vmatprep.subr.bf16.mxu0 0
  %1126 = vmatpush1.bf16.msra.mxu0 0
  %1127 = vmatprep.subr.bf16.mxu0 0
  %1128 = vmatpush1.bf16.msra.mxu0 0
  %1129 = vmatprep.mubr.bf16.mxu0 0
  %1130 = vmatmul.mubr.bf16.gmra.mrb[0].mxu0 %v1054
  %v1131 = vpop.f32.mrb[0].mxu0
  %v1132 = vadd.f32 0.0, %v1131
  %v1133 = vpop.f32.mrb[0].mxu0
  %v1134 = vadd.f32 0.0, %v1133
  %v1135 = vpop.f32.mrb[0].mxu0
  %v1136 = vpop.f32.mrb[0].mxu0
  %1137 = vdwg.mxu0
  %v1138 = vadd.f32 %v909, %v1091
  %v1139 = vadd.f32 %v911, %v1093
  %v1140 = vadd.f32 %v950, %v1132
  %v1141 = vadd.f32 %v952, %v1134
  %v1142 = vpack.c.bf16 %v578, %v578
  %v1143 = vld [vmem:[%s3 + $0x180] sm:$0xff]
  %v1144 = vld [vmem:[%s3 + $0x188] sm:$0xff]
  %v1145 = vld [vmem:[%s3 + $0x190] sm:$0xff]
  %v1146 = vld [vmem:[%s3 + $0x198] sm:$0xff]
  %v1147 = vld [vmem:[%s3 + $0x1a0] sm:$0xff]
  %v1148 = vld [vmem:[%s3 + $0x1a8] sm:$0xff]
  %v1149 = vld [vmem:[%s3 + $0x1b0] sm:$0xff]
  %v1150 = vld [vmem:[%s3 + $0x1b8] sm:$0xff]
  %v1151 = vld [vmem:[%s3 + $0x1c0] sm:$0xff]
  %v1152 = vld [vmem:[%s3 + $0x1c8] sm:$0xff]
  %v1153 = vld [vmem:[%s3 + $0x1d0] sm:$0xff]
  %v1154 = vld [vmem:[%s3 + $0x1d8] sm:$0xff]
  %v1155 = vld [vmem:[%s3 + $0x1e0] sm:$0xff]
  %v1156 = vld [vmem:[%s3 + $0x1e8] sm:$0xff]
  %v1157 = vld [vmem:[%s3 + $0x1f0] sm:$0xff]
  %v1158 = vld [vmem:[%s3 + $0x1f8] sm:$0xff]
  %v1175 = vunpack.c.l.b16 %v1143
  %v1176 = vunpack.c.h.b16 %v1143
  %v1177 = vunpack.c.l.b16 %v1144
  %v1178 = vunpack.c.h.b16 %v1144
  %v1179 = vunpack.c.l.b16 %v1145
  %v1180 = vunpack.c.h.b16 %v1145
  %v1181 = vunpack.c.l.b16 %v1146
  %v1182 = vunpack.c.h.b16 %v1146
  %v1183 = vunpack.c.l.b16 %v1147
  %v1184 = vunpack.c.h.b16 %v1147
  %v1185 = vunpack.c.l.b16 %v1148
  %v1186 = vunpack.c.h.b16 %v1148
  %v1187 = vunpack.c.l.b16 %v1149
  %v1188 = vunpack.c.h.b16 %v1149
  %v1189 = vunpack.c.l.b16 %v1150
  %v1190 = vunpack.c.h.b16 %v1150
  %v1191 = vunpack.c.l.b16 %v1151
  %v1192 = vunpack.c.h.b16 %v1151
  %v1193 = vunpack.c.l.b16 %v1152
  %v1194 = vunpack.c.h.b16 %v1152
  %v1195 = vunpack.c.l.b16 %v1153
  %v1196 = vunpack.c.h.b16 %v1153
  %v1197 = vunpack.c.l.b16 %v1154
  %v1198 = vunpack.c.h.b16 %v1154
  %v1199 = vunpack.c.l.b16 %v1155
  %v1200 = vunpack.c.h.b16 %v1155
  %v1201 = vunpack.c.l.b16 %v1156
  %v1202 = vunpack.c.h.b16 %v1156
  %v1203 = vunpack.c.l.b16 %v1157
  %v1204 = vunpack.c.h.b16 %v1157
  %v1205 = vunpack.c.l.b16 %v1158
  %v1206 = vunpack.c.h.b16 %v1158
  %v1207 = vpack.c.b16 %v1179, %v1175
  %v1208 = vpack.c.b16 %v1180, %v1176
  %v1209 = vpack.c.b16 %v1181, %v1177
  %v1210 = vpack.c.b16 %v1182, %v1178
  %v1211 = vpack.c.b16 %v1187, %v1183
  %v1212 = vpack.c.b16 %v1188, %v1184
  %v1213 = vpack.c.b16 %v1189, %v1185
  %v1214 = vpack.c.b16 %v1190, %v1186
  %v1215 = vpack.c.b16 %v1195, %v1191
  %v1216 = vpack.c.b16 %v1196, %v1192
  %v1217 = vpack.c.b16 %v1197, %v1193
  %v1218 = vpack.c.b16 %v1198, %v1194
  %v1219 = vpack.c.b16 %v1203, %v1199
  %v1220 = vpack.c.b16 %v1204, %v1200
  %v1221 = vpack.c.b16 %v1205, %v1201
  %v1222 = vpack.c.b16 %v1206, %v1202
  %v1240 = vsel %vm705, %v1142, 0
  %1242 = vmatprep.subr.bf16.mxu0 %v1208
  %1243 = vmatpush1.bf16.msra.mxu0 %v1207
  %1244 = vmatprep.subr.bf16.mxu0 %v1212
  %1245 = vmatpush1.bf16.msra.mxu0 %v1211
  %1246 = vmatprep.subr.bf16.mxu0 %v1216
  %1247 = vmatpush1.bf16.msra.mxu0 %v1215
  %1248 = vmatprep.subr.bf16.mxu0 %v1220
  %1249 = vmatpush1.bf16.msra.mxu0 %v1219
  %1250 = vmatprep.subr.bf16.mxu0 0
  %1251 = vmatpush1.bf16.msra.mxu0 0
  %1252 = vmatprep.subr.bf16.mxu0 0
  %1253 = vmatpush1.bf16.msra.mxu0 0
  %1254 = vmatprep.subr.bf16.mxu0 0
  %1255 = vmatpush1.bf16.msra.mxu0 0
  %1256 = vmatprep.subr.bf16.mxu0 0
  %1257 = vmatpush1.bf16.msra.mxu0 0
  %1258 = vmatprep.subr.bf16.mxu0 0
  %1259 = vmatpush1.bf16.msra.mxu0 0
  %1260 = vmatprep.subr.bf16.mxu0 0
  %1261 = vmatpush1.bf16.msra.mxu0 0
  %1262 = vmatprep.subr.bf16.mxu0 0
  %1263 = vmatpush1.bf16.msra.mxu0 0
  %1264 = vmatprep.subr.bf16.mxu0 0
  %1265 = vmatpush1.bf16.msra.mxu0 0
  %1266 = vmatprep.subr.bf16.mxu0 0
  %1267 = vmatpush1.bf16.msra.mxu0 0
  %1268 = vmatprep.subr.bf16.mxu0 0
  %1269 = vmatpush1.bf16.msra.mxu0 0
  %1270 = vmatprep.subr.bf16.mxu0 0
  %1271 = vmatpush1.bf16.msra.mxu0 0
  %1272 = vmatprep.subr.bf16.mxu0 0
  %1273 = vmatpush1.bf16.msra.mxu0 0
  %1274 = vmatprep.mubr.bf16.mxu0 0
  %1275 = vmatmul.mubr.bf16.gmra.mrb[0].mxu0 %v1240
  %v1276 = vpop.f32.mrb[0].mxu0
  %v1277 = vadd.f32 0.0, %v1276
  %v1278 = vpop.f32.mrb[0].mxu0
  %v1279 = vadd.f32 0.0, %v1278
  %v1280 = vpop.f32.mrb[0].mxu0
  %v1281 = vpop.f32.mrb[0].mxu0
  %1282 = vdwg.mxu0
  %1283 = vmatprep.subr.bf16.mxu0 %v1210
  %1284 = vmatpush1.bf16.msra.mxu0 %v1209
  %1285 = vmatprep.subr.bf16.mxu0 %v1214
  %1286 = vmatpush1.bf16.msra.mxu0 %v1213
  %1287 = vmatprep.subr.bf16.mxu0 %v1218
  %1288 = vmatpush1.bf16.msra.mxu0 %v1217
  %1289 = vmatprep.subr.bf16.mxu0 %v1222
  %1290 = vmatpush1.bf16.msra.mxu0 %v1221
  %1291 = vmatprep.subr.bf16.mxu0 0
  %1292 = vmatpush1.bf16.msra.mxu0 0
  %1293 = vmatprep.subr.bf16.mxu0 0
  %1294 = vmatpush1.bf16.msra.mxu0 0
  %1295 = vmatprep.subr.bf16.mxu0 0
  %1296 = vmatpush1.bf16.msra.mxu0 0
  %1297 = vmatprep.subr.bf16.mxu0 0
  %1298 = vmatpush1.bf16.msra.mxu0 0
  %1299 = vmatprep.subr.bf16.mxu0 0
  %1300 = vmatpush1.bf16.msra.mxu0 0
  %1301 = vmatprep.subr.bf16.mxu0 0
  %1302 = vmatpush1.bf16.msra.mxu0 0
  %1303 = vmatprep.subr.bf16.mxu0 0
  %1304 = vmatpush1.bf16.msra.mxu0 0
  %1305 = vmatprep.subr.bf16.mxu0 0
  %1306 = vmatpush1.bf16.msra.mxu0 0
  %1307 = vmatprep.subr.bf16.mxu0 0
  %1308 = vmatpush1.bf16.msra.mxu0 0
  %1309 = vmatprep.subr.bf16.mxu0 0
  %1310 = vmatpush1.bf16.msra.mxu0 0
  %1311 = vmatprep.subr.bf16.mxu0 0
  %1312 = vmatpush1.bf16.msra.mxu0 0
  %1313 = vmatprep.subr.bf16.mxu0 0
  %1314 = vmatpush1.bf16.msra.mxu0 0
  %1315 = vmatprep.mubr.bf16.mxu0 0
  %1316 = vmatmul.mubr.bf16.gmra.mrb[0].mxu0 %v1240
  %v1317 = vpop.f32.mrb[0].mxu0
  %v1318 = vadd.f32 0.0, %v1317
  %v1319 = vpop.f32.mrb[0].mxu0
  %v1320 = vadd.f32 0.0, %v1319
  %v1321 = vpop.f32.mrb[0].mxu0
  %v1322 = vpop.f32.mrb[0].mxu0
  %1323 = vdwg.mxu0
  %v1324 = vadd.f32 %v1138, %v1277
  %v1325 = vadd.f32 %v1139, %v1279
  %v1326 = vadd.f32 %v1140, %v1318
  %v1327 = vadd.f32 %v1141, %v1320
  %v1328 = vpack.c.bf16 %v579, %v579
  %v1329 = vld [vmem:[%s3 + $0x200] sm:$0xff]
  %v1330 = vld [vmem:[%s3 + $0x208] sm:$0xff]
  %v1331 = vld [vmem:[%s3 + $0x210] sm:$0xff]
  %v1332 = vld [vmem:[%s3 + $0x218] sm:$0xff]
  %v1333 = vld [vmem:[%s3 + $0x220] sm:$0xff]
  %v1334 = vld [vmem:[%s3 + $0x228] sm:$0xff]
  %v1335 = vld [vmem:[%s3 + $0x230] sm:$0xff]
  %v1336 = vld [vmem:[%s3 + $0x238] sm:$0xff]
  %v1337 = vld [vmem:[%s3 + $0x240] sm:$0xff]
  %v1338 = vld [vmem:[%s3 + $0x248] sm:$0xff]
  %v1339 = vld [vmem:[%s3 + $0x250] sm:$0xff]
  %v1340 = vld [vmem:[%s3 + $0x258] sm:$0xff]
  %v1341 = vld [vmem:[%s3 + $0x260] sm:$0xff]
  %v1342 = vld [vmem:[%s3 + $0x268] sm:$0xff]
  %v1343 = vld [vmem:[%s3 + $0x270] sm:$0xff]
  %v1344 = vld [vmem:[%s3 + $0x278] sm:$0xff]
  %v1361 = vunpack.c.l.b16 %v1329
  %v1362 = vunpack.c.h.b16 %v1329
  %v1363 = vunpack.c.l.b16 %v1330
  %v1364 = vunpack.c.h.b16 %v1330
  %v1365 = vunpack.c.l.b16 %v1331
  %v1366 = vunpack.c.h.b16 %v1331
  %v1367 = vunpack.c.l.b16 %v1332
  %v1368 = vunpack.c.h.b16 %v1332
  %v1369 = vunpack.c.l.b16 %v1333
  %v1370 = vunpack.c.h.b16 %v1333
  %v1371 = vunpack.c.l.b16 %v1334
  %v1372 = vunpack.c.h.b16 %v1334
  %v1373 = vunpack.c.l.b16 %v1335
  %v1374 = vunpack.c.h.b16 %v1335
  %v1375 = vunpack.c.l.b16 %v1336
  %v1376 = vunpack.c.h.b16 %v1336
  %v1377 = vunpack.c.l.b16 %v1337
  %v1378 = vunpack.c.h.b16 %v1337
  %v1379 = vunpack.c.l.b16 %v1338
  %v1380 = vunpack.c.h.b16 %v1338
  %v1381 = vunpack.c.l.b16 %v1339
  %v1382 = vunpack.c.h.b16 %v1339
  %v1383 = vunpack.c.l.b16 %v1340
  %v1384 = vunpack.c.h.b16 %v1340
  %v1385 = vunpack.c.l.b16 %v1341
  %v1386 = vunpack.c.h.b16 %v1341
  %v1387 = vunpack.c.l.b16 %v1342
  %v1388 = vunpack.c.h.b16 %v1342
  %v1389 = vunpack.c.l.b16 %v1343
  %v1390 = vunpack.c.h.b16 %v1343
  %v1391 = vunpack.c.l.b16 %v1344
  %v1392 = vunpack.c.h.b16 %v1344
  %v1393 = vpack.c.b16 %v1365, %v1361
  %v1394 = vpack.c.b16 %v1366, %v1362
  %v1395 = vpack.c.b16 %v1367, %v1363
  %v1396 = vpack.c.b16 %v1368, %v1364
  %v1397 = vpack.c.b16 %v1373, %v1369
  %v1398 = vpack.c.b16 %v1374, %v1370
  %v1399 = vpack.c.b16 %v1375, %v1371
  %v1400 = vpack.c.b16 %v1376, %v1372
  %v1401 = vpack.c.b16 %v1381, %v1377
  %v1402 = vpack.c.b16 %v1382, %v1378
  %v1403 = vpack.c.b16 %v1383, %v1379
  %v1404 = vpack.c.b16 %v1384, %v1380
  %v1405 = vpack.c.b16 %v1389, %v1385
  %v1406 = vpack.c.b16 %v1390, %v1386
  %v1407 = vpack.c.b16 %v1391, %v1387
  %v1408 = vpack.c.b16 %v1392, %v1388
  %v1426 = vsel %vm705, %v1328, 0
  %1428 = vmatprep.subr.bf16.mxu0 %v1394
  %1429 = vmatpush1.bf16.msra.mxu0 %v1393
  %1430 = vmatprep.subr.bf16.mxu0 %v1398
  %1431 = vmatpush1.bf16.msra.mxu0 %v1397
  %1432 = vmatprep.subr.bf16.mxu0 %v1402
  %1433 = vmatpush1.bf16.msra.mxu0 %v1401
  %1434 = vmatprep.subr.bf16.mxu0 %v1406
  %1435 = vmatpush1.bf16.msra.mxu0 %v1405
  %1436 = vmatprep.subr.bf16.mxu0 0
  %1437 = vmatpush1.bf16.msra.mxu0 0
  %1438 = vmatprep.subr.bf16.mxu0 0
  %1439 = vmatpush1.bf16.msra.mxu0 0
  %1440 = vmatprep.subr.bf16.mxu0 0
  %1441 = vmatpush1.bf16.msra.mxu0 0
  %1442 = vmatprep.subr.bf16.mxu0 0
  %1443 = vmatpush1.bf16.msra.mxu0 0
  %1444 = vmatprep.subr.bf16.mxu0 0
  %1445 = vmatpush1.bf16.msra.mxu0 0
  %1446 = vmatprep.subr.bf16.mxu0 0
  %1447 = vmatpush1.bf16.msra.mxu0 0
  %1448 = vmatprep.subr.bf16.mxu0 0
  %1449 = vmatpush1.bf16.msra.mxu0 0
  %1450 = vmatprep.subr.bf16.mxu0 0
  %1451 = vmatpush1.bf16.msra.mxu0 0
  %1452 = vmatprep.subr.bf16.mxu0 0
  %1453 = vmatpush1.bf16.msra.mxu0 0
  %1454 = vmatprep.subr.bf16.mxu0 0
  %1455 = vmatpush1.bf16.msra.mxu0 0
  %1456 = vmatprep.subr.bf16.mxu0 0
  %1457 = vmatpush1.bf16.msra.mxu0 0
  %1458 = vmatprep.subr.bf16.mxu0 0
  %1459 = vmatpush1.bf16.msra.mxu0 0
  %1460 = vmatprep.mubr.bf16.mxu0 0
  %1461 = vmatmul.mubr.bf16.gmra.mrb[0].mxu0 %v1426
  %v1462 = vpop.f32.mrb[0].mxu0
  %v1463 = vadd.f32 0.0, %v1462
  %v1464 = vpop.f32.mrb[0].mxu0
  %v1465 = vadd.f32 0.0, %v1464
  %v1466 = vpop.f32.mrb[0].mxu0
  %v1467 = vpop.f32.mrb[0].mxu0
  %1468 = vdwg.mxu0
  %1469 = vmatprep.subr.bf16.mxu0 %v1396
  %1470 = vmatpush1.bf16.msra.mxu0 %v1395
  %1471 = vmatprep.subr.bf16.mxu0 %v1400
  %1472 = vmatpush1.bf16.msra.mxu0 %v1399
  %1473 = vmatprep.subr.bf16.mxu0 %v1404
  %1474 = vmatpush1.bf16.msra.mxu0 %v1403
  %1475 = vmatprep.subr.bf16.mxu0 %v1408
  %1476 = vmatpush1.bf16.msra.mxu0 %v1407
  %1477 = vmatprep.subr.bf16.mxu0 0
  %1478 = vmatpush1.bf16.msra.mxu0 0
  %1479 = vmatprep.subr.bf16.mxu0 0
  %1480 = vmatpush1.bf16.msra.mxu0 0
  %1481 = vmatprep.subr.bf16.mxu0 0
  %1482 = vmatpush1.bf16.msra.mxu0 0
  %1483 = vmatprep.subr.bf16.mxu0 0
  %1484 = vmatpush1.bf16.msra.mxu0 0
  %1485 = vmatprep.subr.bf16.mxu0 0
  %1486 = vmatpush1.bf16.msra.mxu0 0
  %1487 = vmatprep.subr.bf16.mxu0 0
  %1488 = vmatpush1.bf16.msra.mxu0 0
  %1489 = vmatprep.subr.bf16.mxu0 0
  %1490 = vmatpush1.bf16.msra.mxu0 0
  %1491 = vmatprep.subr.bf16.mxu0 0
  %1492 = vmatpush1.bf16.msra.mxu0 0
  %1493 = vmatprep.subr.bf16.mxu0 0
  %1494 = vmatpush1.bf16.msra.mxu0 0
  %1495 = vmatprep.subr.bf16.mxu0 0
  %1496 = vmatpush1.bf16.msra.mxu0 0
  %1497 = vmatprep.subr.bf16.mxu0 0
  %1498 = vmatpush1.bf16.msra.mxu0 0
  %1499 = vmatprep.subr.bf16.mxu0 0
  %1500 = vmatpush1.bf16.msra.mxu0 0
  %1501 = vmatprep.mubr.bf16.mxu0 0
  %1502 = vmatmul.mubr.bf16.gmra.mrb[0].mxu0 %v1426
  %v1503 = vpop.f32.mrb[0].mxu0
  %v1504 = vadd.f32 0.0, %v1503
  %v1505 = vpop.f32.mrb[0].mxu0
  %v1506 = vadd.f32 0.0, %v1505
  %v1507 = vpop.f32.mrb[0].mxu0
  %v1508 = vpop.f32.mrb[0].mxu0
  %1509 = vdwg.mxu0
  %v1510 = vadd.f32 %v1324, %v1463
  %v1511 = vadd.f32 %v1325, %v1465
  %v1512 = vadd.f32 %v1326, %v1504
  %v1513 = vadd.f32 %v1327, %v1506
  %v1514 = vpack.c.bf16 %v580, %v580
  %v1515 = vld [vmem:[%s3 + $0x280] sm:$0xff]
  %v1516 = vld [vmem:[%s3 + $0x288] sm:$0xff]
  %v1517 = vld [vmem:[%s3 + $0x290] sm:$0xff]
  %v1518 = vld [vmem:[%s3 + $0x298] sm:$0xff]
  %v1519 = vld [vmem:[%s3 + $0x2a0] sm:$0xff]
  %v1520 = vld [vmem:[%s3 + $0x2a8] sm:$0xff]
  %v1521 = vld [vmem:[%s3 + $0x2b0] sm:$0xff]
  %v1522 = vld [vmem:[%s3 + $0x2b8] sm:$0xff]
  %v1523 = vld [vmem:[%s3 + $0x2c0] sm:$0xff]
  %v1524 = vld [vmem:[%s3 + $0x2c8] sm:$0xff]
  %v1525 = vld [vmem:[%s3 + $0x2d0] sm:$0xff]
  %v1526 = vld [vmem:[%s3 + $0x2d8] sm:$0xff]
  %v1527 = vld [vmem:[%s3 + $0x2e0] sm:$0xff]
  %v1528 = vld [vmem:[%s3 + $0x2e8] sm:$0xff]
  %v1529 = vld [vmem:[%s3 + $0x2f0] sm:$0xff]
  %v1530 = vld [vmem:[%s3 + $0x2f8] sm:$0xff]
  %v1547 = vunpack.c.l.b16 %v1515
  %v1548 = vunpack.c.h.b16 %v1515
  %v1549 = vunpack.c.l.b16 %v1516
  %v1550 = vunpack.c.h.b16 %v1516
  %v1551 = vunpack.c.l.b16 %v1517
  %v1552 = vunpack.c.h.b16 %v1517
  %v1553 = vunpack.c.l.b16 %v1518
  %v1554 = vunpack.c.h.b16 %v1518
  %v1555 = vunpack.c.l.b16 %v1519
  %v1556 = vunpack.c.h.b16 %v1519
  %v1557 = vunpack.c.l.b16 %v1520
  %v1558 = vunpack.c.h.b16 %v1520
  %v1559 = vunpack.c.l.b16 %v1521
  %v1560 = vunpack.c.h.b16 %v1521
  %v1561 = vunpack.c.l.b16 %v1522
  %v1562 = vunpack.c.h.b16 %v1522
  %v1563 = vunpack.c.l.b16 %v1523
  %v1564 = vunpack.c.h.b16 %v1523
  %v1565 = vunpack.c.l.b16 %v1524
  %v1566 = vunpack.c.h.b16 %v1524
  %v1567 = vunpack.c.l.b16 %v1525
  %v1568 = vunpack.c.h.b16 %v1525
  %v1569 = vunpack.c.l.b16 %v1526
  %v1570 = vunpack.c.h.b16 %v1526
  %v1571 = vunpack.c.l.b16 %v1527
  %v1572 = vunpack.c.h.b16 %v1527
  %v1573 = vunpack.c.l.b16 %v1528
  %v1574 = vunpack.c.h.b16 %v1528
  %v1575 = vunpack.c.l.b16 %v1529
  %v1576 = vunpack.c.h.b16 %v1529
  %v1577 = vunpack.c.l.b16 %v1530
  %v1578 = vunpack.c.h.b16 %v1530
  %v1579 = vpack.c.b16 %v1551, %v1547
  %v1580 = vpack.c.b16 %v1552, %v1548
  %v1581 = vpack.c.b16 %v1553, %v1549
  %v1582 = vpack.c.b16 %v1554, %v1550
  %v1583 = vpack.c.b16 %v1559, %v1555
  %v1584 = vpack.c.b16 %v1560, %v1556
  %v1585 = vpack.c.b16 %v1561, %v1557
  %v1586 = vpack.c.b16 %v1562, %v1558
  %v1587 = vpack.c.b16 %v1567, %v1563
  %v1588 = vpack.c.b16 %v1568, %v1564
  %v1589 = vpack.c.b16 %v1569, %v1565
  %v1590 = vpack.c.b16 %v1570, %v1566
  %v1591 = vpack.c.b16 %v1575, %v1571
  %v1592 = vpack.c.b16 %v1576, %v1572
  %v1593 = vpack.c.b16 %v1577, %v1573
  %v1594 = vpack.c.b16 %v1578, %v1574
  %v1612 = vsel %vm705, %v1514, 0
  %1614 = vmatprep.subr.bf16.mxu0 %v1580
  %1615 = vmatpush1.bf16.msra.mxu0 %v1579
  %1616 = vmatprep.subr.bf16.mxu0 %v1584
  %1617 = vmatpush1.bf16.msra.mxu0 %v1583
  %1618 = vmatprep.subr.bf16.mxu0 %v1588
  %1619 = vmatpush1.bf16.msra.mxu0 %v1587
  %1620 = vmatprep.subr.bf16.mxu0 %v1592
  %1621 = vmatpush1.bf16.msra.mxu0 %v1591
  %1622 = vmatprep.subr.bf16.mxu0 0
  %1623 = vmatpush1.bf16.msra.mxu0 0
  %1624 = vmatprep.subr.bf16.mxu0 0
  %1625 = vmatpush1.bf16.msra.mxu0 0
  %1626 = vmatprep.subr.bf16.mxu0 0
  %1627 = vmatpush1.bf16.msra.mxu0 0
  %1628 = vmatprep.subr.bf16.mxu0 0
  %1629 = vmatpush1.bf16.msra.mxu0 0
  %1630 = vmatprep.subr.bf16.mxu0 0
  %1631 = vmatpush1.bf16.msra.mxu0 0
  %1632 = vmatprep.subr.bf16.mxu0 0
  %1633 = vmatpush1.bf16.msra.mxu0 0
  %1634 = vmatprep.subr.bf16.mxu0 0
  %1635 = vmatpush1.bf16.msra.mxu0 0
  %1636 = vmatprep.subr.bf16.mxu0 0
  %1637 = vmatpush1.bf16.msra.mxu0 0
  %1638 = vmatprep.subr.bf16.mxu0 0
  %1639 = vmatpush1.bf16.msra.mxu0 0
  %1640 = vmatprep.subr.bf16.mxu0 0
  %1641 = vmatpush1.bf16.msra.mxu0 0
  %1642 = vmatprep.subr.bf16.mxu0 0
  %1643 = vmatpush1.bf16.msra.mxu0 0
  %1644 = vmatprep.subr.bf16.mxu0 0
  %1645 = vmatpush1.bf16.msra.mxu0 0
  %1646 = vmatprep.mubr.bf16.mxu0 0
  %1647 = vmatmul.mubr.bf16.gmra.mrb[0].mxu0 %v1612
  %v1648 = vpop.f32.mrb[0].mxu0
  %v1649 = vadd.f32 0.0, %v1648
  %v1650 = vpop.f32.mrb[0].mxu0
  %v1651 = vadd.f32 0.0, %v1650
  %v1652 = vpop.f32.mrb[0].mxu0
  %v1653 = vpop.f32.mrb[0].mxu0
  %1654 = vdwg.mxu0
  %1655 = vmatprep.subr.bf16.mxu0 %v1582
  %1656 = vmatpush1.bf16.msra.mxu0 %v1581
  %1657 = vmatprep.subr.bf16.mxu0 %v1586
  %1658 = vmatpush1.bf16.msra.mxu0 %v1585
  %1659 = vmatprep.subr.bf16.mxu0 %v1590
  %1660 = vmatpush1.bf16.msra.mxu0 %v1589
  %1661 = vmatprep.subr.bf16.mxu0 %v1594
  %1662 = vmatpush1.bf16.msra.mxu0 %v1593
  %1663 = vmatprep.subr.bf16.mxu0 0
  %1664 = vmatpush1.bf16.msra.mxu0 0
  %1665 = vmatprep.subr.bf16.mxu0 0
  %1666 = vmatpush1.bf16.msra.mxu0 0
  %1667 = vmatprep.subr.bf16.mxu0 0
  %1668 = vmatpush1.bf16.msra.mxu0 0
  %1669 = vmatprep.subr.bf16.mxu0 0
  %1670 = vmatpush1.bf16.msra.mxu0 0
  %1671 = vmatprep.subr.bf16.mxu0 0
  %1672 = vmatpush1.bf16.msra.mxu0 0
  %1673 = vmatprep.subr.bf16.mxu0 0
  %1674 = vmatpush1.bf16.msra.mxu0 0
  %1675 = vmatprep.subr.bf16.mxu0 0
  %1676 = vmatpush1.bf16.msra.mxu0 0
  %1677 = vmatprep.subr.bf16.mxu0 0
  %1678 = vmatpush1.bf16.msra.mxu0 0
  %1679 = vmatprep.subr.bf16.mxu0 0
  %1680 = vmatpush1.bf16.msra.mxu0 0
  %1681 = vmatprep.subr.bf16.mxu0 0
  %1682 = vmatpush1.bf16.msra.mxu0 0
  %1683 = vmatprep.subr.bf16.mxu0 0
  %1684 = vmatpush1.bf16.msra.mxu0 0
  %1685 = vmatprep.subr.bf16.mxu0 0
  %1686 = vmatpush1.bf16.msra.mxu0 0
  %1687 = vmatprep.mubr.bf16.mxu0 0
  %1688 = vmatmul.mubr.bf16.gmra.mrb[0].mxu0 %v1612
  %v1689 = vpop.f32.mrb[0].mxu0
  %v1690 = vadd.f32 0.0, %v1689
  %v1691 = vpop.f32.mrb[0].mxu0
  %v1692 = vadd.f32 0.0, %v1691
  %v1693 = vpop.f32.mrb[0].mxu0
  %v1694 = vpop.f32.mrb[0].mxu0
  %1695 = vdwg.mxu0
  %v1696 = vadd.f32 %v1510, %v1649
  %v1697 = vadd.f32 %v1511, %v1651
  %v1698 = vadd.f32 %v1512, %v1690
  %v1699 = vadd.f32 %v1513, %v1692
  %v1700 = vpack.c.bf16 %v581, %v581
  %v1701 = vld [vmem:[%s3 + $0x300] sm:$0xff]
  %v1702 = vld [vmem:[%s3 + $0x308] sm:$0xff]
  %v1703 = vld [vmem:[%s3 + $0x310] sm:$0xff]
  %v1704 = vld [vmem:[%s3 + $0x318] sm:$0xff]
  %v1705 = vld [vmem:[%s3 + $0x320] sm:$0xff]
  %v1706 = vld [vmem:[%s3 + $0x328] sm:$0xff]
  %v1707 = vld [vmem:[%s3 + $0x330] sm:$0xff]
  %v1708 = vld [vmem:[%s3 + $0x338] sm:$0xff]
  %v1709 = vld [vmem:[%s3 + $0x340] sm:$0xff]
  %v1710 = vld [vmem:[%s3 + $0x348] sm:$0xff]
  %v1711 = vld [vmem:[%s3 + $0x350] sm:$0xff]
  %v1712 = vld [vmem:[%s3 + $0x358] sm:$0xff]
  %v1713 = vld [vmem:[%s3 + $0x360] sm:$0xff]
  %v1714 = vld [vmem:[%s3 + $0x368] sm:$0xff]
  %v1715 = vld [vmem:[%s3 + $0x370] sm:$0xff]
  %v1716 = vld [vmem:[%s3 + $0x378] sm:$0xff]
  %v1733 = vunpack.c.l.b16 %v1701
  %v1734 = vunpack.c.h.b16 %v1701
  %v1735 = vunpack.c.l.b16 %v1702
  %v1736 = vunpack.c.h.b16 %v1702
  %v1737 = vunpack.c.l.b16 %v1703
  %v1738 = vunpack.c.h.b16 %v1703
  %v1739 = vunpack.c.l.b16 %v1704
  %v1740 = vunpack.c.h.b16 %v1704
  %v1741 = vunpack.c.l.b16 %v1705
  %v1742 = vunpack.c.h.b16 %v1705
  %v1743 = vunpack.c.l.b16 %v1706
  %v1744 = vunpack.c.h.b16 %v1706
  %v1745 = vunpack.c.l.b16 %v1707
  %v1746 = vunpack.c.h.b16 %v1707
  %v1747 = vunpack.c.l.b16 %v1708
  %v1748 = vunpack.c.h.b16 %v1708
  %v1749 = vunpack.c.l.b16 %v1709
  %v1750 = vunpack.c.h.b16 %v1709
  %v1751 = vunpack.c.l.b16 %v1710
  %v1752 = vunpack.c.h.b16 %v1710
  %v1753 = vunpack.c.l.b16 %v1711
  %v1754 = vunpack.c.h.b16 %v1711
  %v1755 = vunpack.c.l.b16 %v1712
  %v1756 = vunpack.c.h.b16 %v1712
  %v1757 = vunpack.c.l.b16 %v1713
  %v1758 = vunpack.c.h.b16 %v1713
  %v1759 = vunpack.c.l.b16 %v1714
  %v1760 = vunpack.c.h.b16 %v1714
  %v1761 = vunpack.c.l.b16 %v1715
  %v1762 = vunpack.c.h.b16 %v1715
  %v1763 = vunpack.c.l.b16 %v1716
  %v1764 = vunpack.c.h.b16 %v1716
  %v1765 = vpack.c.b16 %v1737, %v1733
  %v1766 = vpack.c.b16 %v1738, %v1734
  %v1767 = vpack.c.b16 %v1739, %v1735
  %v1768 = vpack.c.b16 %v1740, %v1736
  %v1769 = vpack.c.b16 %v1745, %v1741
  %v1770 = vpack.c.b16 %v1746, %v1742
  %v1771 = vpack.c.b16 %v1747, %v1743
  %v1772 = vpack.c.b16 %v1748, %v1744
  %v1773 = vpack.c.b16 %v1753, %v1749
  %v1774 = vpack.c.b16 %v1754, %v1750
  %v1775 = vpack.c.b16 %v1755, %v1751
  %v1776 = vpack.c.b16 %v1756, %v1752
  %v1777 = vpack.c.b16 %v1761, %v1757
  %v1778 = vpack.c.b16 %v1762, %v1758
  %v1779 = vpack.c.b16 %v1763, %v1759
  %v1780 = vpack.c.b16 %v1764, %v1760
  %v1798 = vsel %vm705, %v1700, 0
  %1800 = vmatprep.subr.bf16.mxu0 %v1766
  %1801 = vmatpush1.bf16.msra.mxu0 %v1765
  %1802 = vmatprep.subr.bf16.mxu0 %v1770
  %1803 = vmatpush1.bf16.msra.mxu0 %v1769
  %1804 = vmatprep.subr.bf16.mxu0 %v1774
  %1805 = vmatpush1.bf16.msra.mxu0 %v1773
  %1806 = vmatprep.subr.bf16.mxu0 %v1778
  %1807 = vmatpush1.bf16.msra.mxu0 %v1777
  %1808 = vmatprep.subr.bf16.mxu0 0
  %1809 = vmatpush1.bf16.msra.mxu0 0
  %1810 = vmatprep.subr.bf16.mxu0 0
  %1811 = vmatpush1.bf16.msra.mxu0 0
  %1812 = vmatprep.subr.bf16.mxu0 0
  %1813 = vmatpush1.bf16.msra.mxu0 0
  %1814 = vmatprep.subr.bf16.mxu0 0
  %1815 = vmatpush1.bf16.msra.mxu0 0
  %1816 = vmatprep.subr.bf16.mxu0 0
  %1817 = vmatpush1.bf16.msra.mxu0 0
  %1818 = vmatprep.subr.bf16.mxu0 0
  %1819 = vmatpush1.bf16.msra.mxu0 0
  %1820 = vmatprep.subr.bf16.mxu0 0
  %1821 = vmatpush1.bf16.msra.mxu0 0
  %1822 = vmatprep.subr.bf16.mxu0 0
  %1823 = vmatpush1.bf16.msra.mxu0 0
  %1824 = vmatprep.subr.bf16.mxu0 0
  %1825 = vmatpush1.bf16.msra.mxu0 0
  %1826 = vmatprep.subr.bf16.mxu0 0
  %1827 = vmatpush1.bf16.msra.mxu0 0
  %1828 = vmatprep.subr.bf16.mxu0 0
  %1829 = vmatpush1.bf16.msra.mxu0 0
  %1830 = vmatprep.subr.bf16.mxu0 0
  %1831 = vmatpush1.bf16.msra.mxu0 0
  %1832 = vmatprep.mubr.bf16.mxu0 0
  %1833 = vmatmul.mubr.bf16.gmra.mrb[0].mxu0 %v1798
  %v1834 = vpop.f32.mrb[0].mxu0
  %v1835 = vadd.f32 0.0, %v1834
  %v1836 = vpop.f32.mrb[0].mxu0
  %v1837 = vadd.f32 0.0, %v1836
  %v1838 = vpop.f32.mrb[0].mxu0
  %v1839 = vpop.f32.mrb[0].mxu0
  %1840 = vdwg.mxu0
  %1841 = vmatprep.subr.bf16.mxu0 %v1768
  %1842 = vmatpush1.bf16.msra.mxu0 %v1767
  %1843 = vmatprep.subr.bf16.mxu0 %v1772
  %1844 = vmatpush1.bf16.msra.mxu0 %v1771
  %1845 = vmatprep.subr.bf16.mxu0 %v1776
  %1846 = vmatpush1.bf16.msra.mxu0 %v1775
  %1847 = vmatprep.subr.bf16.mxu0 %v1780
  %1848 = vmatpush1.bf16.msra.mxu0 %v1779
  %1849 = vmatprep.subr.bf16.mxu0 0
  %1850 = vmatpush1.bf16.msra.mxu0 0
  %1851 = vmatprep.subr.bf16.mxu0 0
  %1852 = vmatpush1.bf16.msra.mxu0 0
  %1853 = vmatprep.subr.bf16.mxu0 0
  %1854 = vmatpush1.bf16.msra.mxu0 0
  %1855 = vmatprep.subr.bf16.mxu0 0
  %1856 = vmatpush1.bf16.msra.mxu0 0
  %1857 = vmatprep.subr.bf16.mxu0 0
  %1858 = vmatpush1.bf16.msra.mxu0 0
  %1859 = vmatprep.subr.bf16.mxu0 0
  %1860 = vmatpush1.bf16.msra.mxu0 0
  %1861 = vmatprep.subr.bf16.mxu0 0
  %1862 = vmatpush1.bf16.msra.mxu0 0
  %1863 = vmatprep.subr.bf16.mxu0 0
  %1864 = vmatpush1.bf16.msra.mxu0 0
  %1865 = vmatprep.subr.bf16.mxu0 0
  %1866 = vmatpush1.bf16.msra.mxu0 0
  %1867 = vmatprep.subr.bf16.mxu0 0
  %1868 = vmatpush1.bf16.msra.mxu0 0
  %1869 = vmatprep.subr.bf16.mxu0 0
  %1870 = vmatpush1.bf16.msra.mxu0 0
  %1871 = vmatprep.subr.bf16.mxu0 0
  %1872 = vmatpush1.bf16.msra.mxu0 0
  %1873 = vmatprep.mubr.bf16.mxu0 0
  %1874 = vmatmul.mubr.bf16.gmra.mrb[0].mxu0 %v1798
  %v1875 = vpop.f32.mrb[0].mxu0
  %v1876 = vadd.f32 0.0, %v1875
  %v1877 = vpop.f32.mrb[0].mxu0
  %v1878 = vadd.f32 0.0, %v1877
  %v1879 = vpop.f32.mrb[0].mxu0
  %v1880 = vpop.f32.mrb[0].mxu0
  %1881 = vdwg.mxu0
  %v1882 = vadd.f32 %v1696, %v1835
  %v1883 = vadd.f32 %v1697, %v1837
  %v1884 = vadd.f32 %v1698, %v1876
  %v1885 = vadd.f32 %v1699, %v1878
  %v1886 = vpack.c.bf16 %v582, %v582
  %v1887 = vld [vmem:[%s3 + $0x380] sm:$0xff]
  %v1888 = vld [vmem:[%s3 + $0x388] sm:$0xff]
  %v1889 = vld [vmem:[%s3 + $0x390] sm:$0xff]
  %v1890 = vld [vmem:[%s3 + $0x398] sm:$0xff]
  %v1891 = vld [vmem:[%s3 + $0x3a0] sm:$0xff]
  %v1892 = vld [vmem:[%s3 + $0x3a8] sm:$0xff]
  %v1893 = vld [vmem:[%s3 + $0x3b0] sm:$0xff]
  %v1894 = vld [vmem:[%s3 + $0x3b8] sm:$0xff]
  %v1895 = vld [vmem:[%s3 + $0x3c0] sm:$0xff]
  %v1896 = vld [vmem:[%s3 + $0x3c8] sm:$0xff]
  %v1897 = vld [vmem:[%s3 + $0x3d0] sm:$0xff]
  %v1898 = vld [vmem:[%s3 + $0x3d8] sm:$0xff]
  %v1899 = vld [vmem:[%s3 + $0x3e0] sm:$0xff]
  %v1900 = vld [vmem:[%s3 + $0x3e8] sm:$0xff]
  %v1901 = vld [vmem:[%s3 + $0x3f0] sm:$0xff]
  %v1902 = vld [vmem:[%s3 + $0x3f8] sm:$0xff]
  %v1919 = vunpack.c.l.b16 %v1887
  %v1920 = vunpack.c.h.b16 %v1887
  %v1921 = vunpack.c.l.b16 %v1888
  %v1922 = vunpack.c.h.b16 %v1888
  %v1923 = vunpack.c.l.b16 %v1889
  %v1924 = vunpack.c.h.b16 %v1889
  %v1925 = vunpack.c.l.b16 %v1890
  %v1926 = vunpack.c.h.b16 %v1890
  %v1927 = vunpack.c.l.b16 %v1891
  %v1928 = vunpack.c.h.b16 %v1891
  %v1929 = vunpack.c.l.b16 %v1892
  %v1930 = vunpack.c.h.b16 %v1892
  %v1931 = vunpack.c.l.b16 %v1893
  %v1932 = vunpack.c.h.b16 %v1893
  %v1933 = vunpack.c.l.b16 %v1894
  %v1934 = vunpack.c.h.b16 %v1894
  %v1935 = vunpack.c.l.b16 %v1895
  %v1936 = vunpack.c.h.b16 %v1895
  %v1937 = vunpack.c.l.b16 %v1896
  %v1938 = vunpack.c.h.b16 %v1896
  %v1939 = vunpack.c.l.b16 %v1897
  %v1940 = vunpack.c.h.b16 %v1897
  %v1941 = vunpack.c.l.b16 %v1898
  %v1942 = vunpack.c.h.b16 %v1898
  %v1943 = vunpack.c.l.b16 %v1899
  %v1944 = vunpack.c.h.b16 %v1899
  %v1945 = vunpack.c.l.b16 %v1900
  %v1946 = vunpack.c.h.b16 %v1900
  %v1947 = vunpack.c.l.b16 %v1901
  %v1948 = vunpack.c.h.b16 %v1901
  %v1949 = vunpack.c.l.b16 %v1902
  %v1950 = vunpack.c.h.b16 %v1902
  %v1951 = vpack.c.b16 %v1923, %v1919
  %v1952 = vpack.c.b16 %v1924, %v1920
  %v1953 = vpack.c.b16 %v1925, %v1921
  %v1954 = vpack.c.b16 %v1926, %v1922
  %v1955 = vpack.c.b16 %v1931, %v1927
  %v1956 = vpack.c.b16 %v1932, %v1928
  %v1957 = vpack.c.b16 %v1933, %v1929
  %v1958 = vpack.c.b16 %v1934, %v1930
  %v1959 = vpack.c.b16 %v1939, %v1935
  %v1960 = vpack.c.b16 %v1940, %v1936
  %v1961 = vpack.c.b16 %v1941, %v1937
  %v1962 = vpack.c.b16 %v1942, %v1938
  %v1963 = vpack.c.b16 %v1947, %v1943
  %v1964 = vpack.c.b16 %v1948, %v1944
  %v1965 = vpack.c.b16 %v1949, %v1945
  %v1966 = vpack.c.b16 %v1950, %v1946
  %v1984 = vsel %vm705, %v1886, 0
  %1986 = vmatprep.subr.bf16.mxu0 %v1952
  %1987 = vmatpush1.bf16.msra.mxu0 %v1951
  %1988 = vmatprep.subr.bf16.mxu0 %v1956
  %1989 = vmatpush1.bf16.msra.mxu0 %v1955
  %1990 = vmatprep.subr.bf16.mxu0 %v1960
  %1991 = vmatpush1.bf16.msra.mxu0 %v1959
  %1992 = vmatprep.subr.bf16.mxu0 %v1964
  %1993 = vmatpush1.bf16.msra.mxu0 %v1963
  %1994 = vmatprep.subr.bf16.mxu0 0
  %1995 = vmatpush1.bf16.msra.mxu0 0
  %1996 = vmatprep.subr.bf16.mxu0 0
  %1997 = vmatpush1.bf16.msra.mxu0 0
  %1998 = vmatprep.subr.bf16.mxu0 0
  %1999 = vmatpush1.bf16.msra.mxu0 0
  %2000 = vmatprep.subr.bf16.mxu0 0
  %2001 = vmatpush1.bf16.msra.mxu0 0
  %2002 = vmatprep.subr.bf16.mxu0 0
  %2003 = vmatpush1.bf16.msra.mxu0 0
  %2004 = vmatprep.subr.bf16.mxu0 0
  %2005 = vmatpush1.bf16.msra.mxu0 0
  %2006 = vmatprep.subr.bf16.mxu0 0
  %2007 = vmatpush1.bf16.msra.mxu0 0
  %2008 = vmatprep.subr.bf16.mxu0 0
  %2009 = vmatpush1.bf16.msra.mxu0 0
  %2010 = vmatprep.subr.bf16.mxu0 0
  %2011 = vmatpush1.bf16.msra.mxu0 0
  %2012 = vmatprep.subr.bf16.mxu0 0
  %2013 = vmatpush1.bf16.msra.mxu0 0
  %2014 = vmatprep.subr.bf16.mxu0 0
  %2015 = vmatpush1.bf16.msra.mxu0 0
  %2016 = vmatprep.subr.bf16.mxu0 0
  %2017 = vmatpush1.bf16.msra.mxu0 0
  %2018 = vmatprep.mubr.bf16.mxu0 0
  %2019 = vmatmul.mubr.bf16.gmra.mrb[0].mxu0 %v1984
  %v2020 = vpop.f32.mrb[0].mxu0
  %v2021 = vadd.f32 0.0, %v2020
  %v2022 = vpop.f32.mrb[0].mxu0
  %v2023 = vadd.f32 0.0, %v2022
  %v2024 = vpop.f32.mrb[0].mxu0
  %v2025 = vpop.f32.mrb[0].mxu0
  %2026 = vdwg.mxu0
  %2027 = vmatprep.subr.bf16.mxu0 %v1954
  %2028 = vmatpush1.bf16.msra.mxu0 %v1953
  %2029 = vmatprep.subr.bf16.mxu0 %v1958
  %2030 = vmatpush1.bf16.msra.mxu0 %v1957
  %2031 = vmatprep.subr.bf16.mxu0 %v1962
  %2032 = vmatpush1.bf16.msra.mxu0 %v1961
  %2033 = vmatprep.subr.bf16.mxu0 %v1966
  %2034 = vmatpush1.bf16.msra.mxu0 %v1965
  %2035 = vmatprep.subr.bf16.mxu0 0
  %2036 = vmatpush1.bf16.msra.mxu0 0
  %2037 = vmatprep.subr.bf16.mxu0 0
  %2038 = vmatpush1.bf16.msra.mxu0 0
  %2039 = vmatprep.subr.bf16.mxu0 0
  %2040 = vmatpush1.bf16.msra.mxu0 0
  %2041 = vmatprep.subr.bf16.mxu0 0
  %2042 = vmatpush1.bf16.msra.mxu0 0
  %2043 = vmatprep.subr.bf16.mxu0 0
  %2044 = vmatpush1.bf16.msra.mxu0 0
  %2045 = vmatprep.subr.bf16.mxu0 0
  %2046 = vmatpush1.bf16.msra.mxu0 0
  %2047 = vmatprep.subr.bf16.mxu0 0
  %2048 = vmatpush1.bf16.msra.mxu0 0
  %2049 = vmatprep.subr.bf16.mxu0 0
  %2050 = vmatpush1.bf16.msra.mxu0 0
  %2051 = vmatprep.subr.bf16.mxu0 0
  %2052 = vmatpush1.bf16.msra.mxu0 0
  %2053 = vmatprep.subr.bf16.mxu0 0
  %2054 = vmatpush1.bf16.msra.mxu0 0
  %2055 = vmatprep.subr.bf16.mxu0 0
  %2056 = vmatpush1.bf16.msra.mxu0 0
  %2057 = vmatprep.subr.bf16.mxu0 0
  %2058 = vmatpush1.bf16.msra.mxu0 0
  %2059 = vmatprep.mubr.bf16.mxu0 0
  %2060 = vmatmul.mubr.bf16.gmra.mrb[0].mxu0 %v1984
  %v2061 = vpop.f32.mrb[0].mxu0
  %v2062 = vadd.f32 0.0, %v2061
  %v2063 = vpop.f32.mrb[0].mxu0
  %v2064 = vadd.f32 0.0, %v2063
  %v2065 = vpop.f32.mrb[0].mxu0
  %v2066 = vpop.f32.mrb[0].mxu0
  %2067 = vdwg.mxu0
  %v2068 = vadd.f32 %v1882, %v2021
  %v2069 = vadd.f32 %v1883, %v2023
  %v2070 = vadd.f32 %v1884, %v2062
  %v2071 = vadd.f32 %v1885, %v2064
  %v2072 = vpack.c.bf16 %v583, %v583
  %v2073 = vld [vmem:[%s3 + $0x400] sm:$0xff]
  %v2074 = vld [vmem:[%s3 + $0x408] sm:$0xff]
  %v2075 = vld [vmem:[%s3 + $0x410] sm:$0xff]
  %v2076 = vld [vmem:[%s3 + $0x418] sm:$0xff]
  %v2077 = vld [vmem:[%s3 + $0x420] sm:$0xff]
  %v2078 = vld [vmem:[%s3 + $0x428] sm:$0xff]
  %v2079 = vld [vmem:[%s3 + $0x430] sm:$0xff]
  %v2080 = vld [vmem:[%s3 + $0x438] sm:$0xff]
  %v2081 = vld [vmem:[%s3 + $0x440] sm:$0xff]
  %v2082 = vld [vmem:[%s3 + $0x448] sm:$0xff]
  %v2083 = vld [vmem:[%s3 + $0x450] sm:$0xff]
  %v2084 = vld [vmem:[%s3 + $0x458] sm:$0xff]
  %v2085 = vld [vmem:[%s3 + $0x460] sm:$0xff]
  %v2086 = vld [vmem:[%s3 + $0x468] sm:$0xff]
  %v2087 = vld [vmem:[%s3 + $0x470] sm:$0xff]
  %v2088 = vld [vmem:[%s3 + $0x478] sm:$0xff]
  %v2105 = vunpack.c.l.b16 %v2073
  %v2106 = vunpack.c.h.b16 %v2073
  %v2107 = vunpack.c.l.b16 %v2074
  %v2108 = vunpack.c.h.b16 %v2074
  %v2109 = vunpack.c.l.b16 %v2075
  %v2110 = vunpack.c.h.b16 %v2075
  %v2111 = vunpack.c.l.b16 %v2076
  %v2112 = vunpack.c.h.b16 %v2076
  %v2113 = vunpack.c.l.b16 %v2077
  %v2114 = vunpack.c.h.b16 %v2077
  %v2115 = vunpack.c.l.b16 %v2078
  %v2116 = vunpack.c.h.b16 %v2078
  %v2117 = vunpack.c.l.b16 %v2079
  %v2118 = vunpack.c.h.b16 %v2079
  %v2119 = vunpack.c.l.b16 %v2080
  %v2120 = vunpack.c.h.b16 %v2080
  %v2121 = vunpack.c.l.b16 %v2081
  %v2122 = vunpack.c.h.b16 %v2081
  %v2123 = vunpack.c.l.b16 %v2082
  %v2124 = vunpack.c.h.b16 %v2082
  %v2125 = vunpack.c.l.b16 %v2083
  %v2126 = vunpack.c.h.b16 %v2083
  %v2127 = vunpack.c.l.b16 %v2084
  %v2128 = vunpack.c.h.b16 %v2084
  %v2129 = vunpack.c.l.b16 %v2085
  %v2130 = vunpack.c.h.b16 %v2085
  %v2131 = vunpack.c.l.b16 %v2086
  %v2132 = vunpack.c.h.b16 %v2086
  %v2133 = vunpack.c.l.b16 %v2087
  %v2134 = vunpack.c.h.b16 %v2087
  %v2135 = vunpack.c.l.b16 %v2088
  %v2136 = vunpack.c.h.b16 %v2088
  %v2137 = vpack.c.b16 %v2109, %v2105
  %v2138 = vpack.c.b16 %v2110, %v2106
  %v2139 = vpack.c.b16 %v2111, %v2107
  %v2140 = vpack.c.b16 %v2112, %v2108
  %v2141 = vpack.c.b16 %v2117, %v2113
  %v2142 = vpack.c.b16 %v2118, %v2114
  %v2143 = vpack.c.b16 %v2119, %v2115
  %v2144 = vpack.c.b16 %v2120, %v2116
  %v2145 = vpack.c.b16 %v2125, %v2121
  %v2146 = vpack.c.b16 %v2126, %v2122
  %v2147 = vpack.c.b16 %v2127, %v2123
  %v2148 = vpack.c.b16 %v2128, %v2124
  %v2149 = vpack.c.b16 %v2133, %v2129
  %v2150 = vpack.c.b16 %v2134, %v2130
  %v2151 = vpack.c.b16 %v2135, %v2131
  %v2152 = vpack.c.b16 %v2136, %v2132
  %v2170 = vsel %vm705, %v2072, 0
  %2172 = vmatprep.subr.bf16.mxu0 %v2138
  %2173 = vmatpush1.bf16.msra.mxu0 %v2137
  %2174 = vmatprep.subr.bf16.mxu0 %v2142
  %2175 = vmatpush1.bf16.msra.mxu0 %v2141
  %2176 = vmatprep.subr.bf16.mxu0 %v2146
  %2177 = vmatpush1.bf16.msra.mxu0 %v2145
  %2178 = vmatprep.subr.bf16.mxu0 %v2150
  %2179 = vmatpush1.bf16.msra.mxu0 %v2149
  %2180 = vmatprep.subr.bf16.mxu0 0
  %2181 = vmatpush1.bf16.msra.mxu0 0
  %2182 = vmatprep.subr.bf16.mxu0 0
  %2183 = vmatpush1.bf16.msra.mxu0 0
  %2184 = vmatprep.subr.bf16.mxu0 0
  %2185 = vmatpush1.bf16.msra.mxu0 0
  %2186 = vmatprep.subr.bf16.mxu0 0
  %2187 = vmatpush1.bf16.msra.mxu0 0
  %2188 = vmatprep.subr.bf16.mxu0 0
  %2189 = vmatpush1.bf16.msra.mxu0 0
  %2190 = vmatprep.subr.bf16.mxu0 0
  %2191 = vmatpush1.bf16.msra.mxu0 0
  %2192 = vmatprep.subr.bf16.mxu0 0
  %2193 = vmatpush1.bf16.msra.mxu0 0
  %2194 = vmatprep.subr.bf16.mxu0 0
  %2195 = vmatpush1.bf16.msra.mxu0 0
  %2196 = vmatprep.subr.bf16.mxu0 0
  %2197 = vmatpush1.bf16.msra.mxu0 0
  %2198 = vmatprep.subr.bf16.mxu0 0
  %2199 = vmatpush1.bf16.msra.mxu0 0
  %2200 = vmatprep.subr.bf16.mxu0 0
  %2201 = vmatpush1.bf16.msra.mxu0 0
  %2202 = vmatprep.subr.bf16.mxu0 0
  %2203 = vmatpush1.bf16.msra.mxu0 0
  %2204 = vmatprep.mubr.bf16.mxu0 0
  %2205 = vmatmul.mubr.bf16.gmra.mrb[0].mxu0 %v2170
  %v2206 = vpop.f32.mrb[0].mxu0
  %v2207 = vadd.f32 0.0, %v2206
  %v2208 = vpop.f32.mrb[0].mxu0
  %v2209 = vadd.f32 0.0, %v2208
  %v2210 = vpop.f32.mrb[0].mxu0
  %v2211 = vpop.f32.mrb[0].mxu0
  %2212 = vdwg.mxu0
  %2213 = vmatprep.subr.bf16.mxu0 %v2140
  %2214 = vmatpush1.bf16.msra.mxu0 %v2139
  %2215 = vmatprep.subr.bf16.mxu0 %v2144
  %2216 = vmatpush1.bf16.msra.mxu0 %v2143
  %2217 = vmatprep.subr.bf16.mxu0 %v2148
  %2218 = vmatpush1.bf16.msra.mxu0 %v2147
  %2219 = vmatprep.subr.bf16.mxu0 %v2152
  %2220 = vmatpush1.bf16.msra.mxu0 %v2151
  %2221 = vmatprep.subr.bf16.mxu0 0
  %2222 = vmatpush1.bf16.msra.mxu0 0
  %2223 = vmatprep.subr.bf16.mxu0 0
  %2224 = vmatpush1.bf16.msra.mxu0 0
  %2225 = vmatprep.subr.bf16.mxu0 0
  %2226 = vmatpush1.bf16.msra.mxu0 0
  %2227 = vmatprep.subr.bf16.mxu0 0
  %2228 = vmatpush1.bf16.msra.mxu0 0
  %2229 = vmatprep.subr.bf16.mxu0 0
  %2230 = vmatpush1.bf16.msra.mxu0 0
  %2231 = vmatprep.subr.bf16.mxu0 0
  %2232 = vmatpush1.bf16.msra.mxu0 0
  %2233 = vmatprep.subr.bf16.mxu0 0
  %2234 = vmatpush1.bf16.msra.mxu0 0
  %2235 = vmatprep.subr.bf16.mxu0 0
  %2236 = vmatpush1.bf16.msra.mxu0 0
  %2237 = vmatprep.subr.bf16.mxu0 0
  %2238 = vmatpush1.bf16.msra.mxu0 0
  %2239 = vmatprep.subr.bf16.mxu0 0
  %2240 = vmatpush1.bf16.msra.mxu0 0
  %2241 = vmatprep.subr.bf16.mxu0 0
  %2242 = vmatpush1.bf16.msra.mxu0 0
  %2243 = vmatprep.subr.bf16.mxu0 0
  %2244 = vmatpush1.bf16.msra.mxu0 0
  %2245 = vmatprep.mubr.bf16.mxu0 0
  %2246 = vmatmul.mubr.bf16.gmra.mrb[0].mxu0 %v2170
  %v2247 = vpop.f32.mrb[0].mxu0
  %v2248 = vadd.f32 0.0, %v2247
  %v2249 = vpop.f32.mrb[0].mxu0
  %v2250 = vadd.f32 0.0, %v2249
  %v2251 = vpop.f32.mrb[0].mxu0
  %v2252 = vpop.f32.mrb[0].mxu0
  %2253 = vdwg.mxu0
  %v2254 = vadd.f32 %v2068, %v2207
  %v2255 = vadd.f32 %v2069, %v2209
  %v2256 = vadd.f32 %v2070, %v2248
  %v2257 = vadd.f32 %v2071, %v2250
  %v2258 = vpack.c.bf16 %v584, %v584
  %v2259 = vld [vmem:[%s3 + $0x480] sm:$0xff]
  %v2260 = vld [vmem:[%s3 + $0x488] sm:$0xff]
  %v2261 = vld [vmem:[%s3 + $0x490] sm:$0xff]
  %v2262 = vld [vmem:[%s3 + $0x498] sm:$0xff]
  %v2263 = vld [vmem:[%s3 + $0x4a0] sm:$0xff]
  %v2264 = vld [vmem:[%s3 + $0x4a8] sm:$0xff]
  %v2265 = vld [vmem:[%s3 + $0x4b0] sm:$0xff]
  %v2266 = vld [vmem:[%s3 + $0x4b8] sm:$0xff]
  %v2267 = vld [vmem:[%s3 + $0x4c0] sm:$0xff]
  %v2268 = vld [vmem:[%s3 + $0x4c8] sm:$0xff]
  %v2269 = vld [vmem:[%s3 + $0x4d0] sm:$0xff]
  %v2270 = vld [vmem:[%s3 + $0x4d8] sm:$0xff]
  %v2271 = vld [vmem:[%s3 + $0x4e0] sm:$0xff]
  %v2272 = vld [vmem:[%s3 + $0x4e8] sm:$0xff]
  %v2273 = vld [vmem:[%s3 + $0x4f0] sm:$0xff]
  %v2274 = vld [vmem:[%s3 + $0x4f8] sm:$0xff]
  %v2291 = vunpack.c.l.b16 %v2259
  %v2292 = vunpack.c.h.b16 %v2259
  %v2293 = vunpack.c.l.b16 %v2260
  %v2294 = vunpack.c.h.b16 %v2260
  %v2295 = vunpack.c.l.b16 %v2261
  %v2296 = vunpack.c.h.b16 %v2261
  %v2297 = vunpack.c.l.b16 %v2262
  %v2298 = vunpack.c.h.b16 %v2262
  %v2299 = vunpack.c.l.b16 %v2263
  %v2300 = vunpack.c.h.b16 %v2263
  %v2301 = vunpack.c.l.b16 %v2264
  %v2302 = vunpack.c.h.b16 %v2264
  %v2303 = vunpack.c.l.b16 %v2265
  %v2304 = vunpack.c.h.b16 %v2265
  %v2305 = vunpack.c.l.b16 %v2266
  %v2306 = vunpack.c.h.b16 %v2266
  %v2307 = vunpack.c.l.b16 %v2267
  %v2308 = vunpack.c.h.b16 %v2267
  %v2309 = vunpack.c.l.b16 %v2268
  %v2310 = vunpack.c.h.b16 %v2268
  %v2311 = vunpack.c.l.b16 %v2269
  %v2312 = vunpack.c.h.b16 %v2269
  %v2313 = vunpack.c.l.b16 %v2270
  %v2314 = vunpack.c.h.b16 %v2270
  %v2315 = vunpack.c.l.b16 %v2271
  %v2316 = vunpack.c.h.b16 %v2271
  %v2317 = vunpack.c.l.b16 %v2272
  %v2318 = vunpack.c.h.b16 %v2272
  %v2319 = vunpack.c.l.b16 %v2273
  %v2320 = vunpack.c.h.b16 %v2273
  %v2321 = vunpack.c.l.b16 %v2274
  %v2322 = vunpack.c.h.b16 %v2274
  %v2323 = vpack.c.b16 %v2295, %v2291
  %v2324 = vpack.c.b16 %v2296, %v2292
  %v2325 = vpack.c.b16 %v2297, %v2293
  %v2326 = vpack.c.b16 %v2298, %v2294
  %v2327 = vpack.c.b16 %v2303, %v2299
  %v2328 = vpack.c.b16 %v2304, %v2300
  %v2329 = vpack.c.b16 %v2305, %v2301
  %v2330 = vpack.c.b16 %v2306, %v2302
  %v2331 = vpack.c.b16 %v2311, %v2307
  %v2332 = vpack.c.b16 %v2312, %v2308
  %v2333 = vpack.c.b16 %v2313, %v2309
  %v2334 = vpack.c.b16 %v2314, %v2310
  %v2335 = vpack.c.b16 %v2319, %v2315
  %v2336 = vpack.c.b16 %v2320, %v2316
  %v2337 = vpack.c.b16 %v2321, %v2317
  %v2338 = vpack.c.b16 %v2322, %v2318
  %v2356 = vsel %vm705, %v2258, 0
  %2358 = vmatprep.subr.bf16.mxu0 %v2324
  %2359 = vmatpush1.bf16.msra.mxu0 %v2323
  %2360 = vmatprep.subr.bf16.mxu0 %v2328
  %2361 = vmatpush1.bf16.msra.mxu0 %v2327
  %2362 = vmatprep.subr.bf16.mxu0 %v2332
  %2363 = vmatpush1.bf16.msra.mxu0 %v2331
  %2364 = vmatprep.subr.bf16.mxu0 %v2336
  %2365 = vmatpush1.bf16.msra.mxu0 %v2335
  %2366 = vmatprep.subr.bf16.mxu0 0
  %2367 = vmatpush1.bf16.msra.mxu0 0
  %2368 = vmatprep.subr.bf16.mxu0 0
  %2369 = vmatpush1.bf16.msra.mxu0 0
  %2370 = vmatprep.subr.bf16.mxu0 0
  %2371 = vmatpush1.bf16.msra.mxu0 0
  %2372 = vmatprep.subr.bf16.mxu0 0
  %2373 = vmatpush1.bf16.msra.mxu0 0
  %2374 = vmatprep.subr.bf16.mxu0 0
  %2375 = vmatpush1.bf16.msra.mxu0 0
  %2376 = vmatprep.subr.bf16.mxu0 0
  %2377 = vmatpush1.bf16.msra.mxu0 0
  %2378 = vmatprep.subr.bf16.mxu0 0
  %2379 = vmatpush1.bf16.msra.mxu0 0
  %2380 = vmatprep.subr.bf16.mxu0 0
  %2381 = vmatpush1.bf16.msra.mxu0 0
  %2382 = vmatprep.subr.bf16.mxu0 0
  %2383 = vmatpush1.bf16.msra.mxu0 0
  %2384 = vmatprep.subr.bf16.mxu0 0
  %2385 = vmatpush1.bf16.msra.mxu0 0
  %2386 = vmatprep.subr.bf16.mxu0 0
  %2387 = vmatpush1.bf16.msra.mxu0 0
  %2388 = vmatprep.subr.bf16.mxu0 0
  %2389 = vmatpush1.bf16.msra.mxu0 0
  %2390 = vmatprep.mubr.bf16.mxu0 0
  %2391 = vmatmul.mubr.bf16.gmra.mrb[0].mxu0 %v2356
  %v2392 = vpop.f32.mrb[0].mxu0
  %v2393 = vadd.f32 0.0, %v2392
  %v2394 = vpop.f32.mrb[0].mxu0
  %v2395 = vadd.f32 0.0, %v2394
  %v2396 = vpop.f32.mrb[0].mxu0
  %v2397 = vpop.f32.mrb[0].mxu0
  %2398 = vdwg.mxu0
  %2399 = vmatprep.subr.bf16.mxu0 %v2326
  %2400 = vmatpush1.bf16.msra.mxu0 %v2325
  %2401 = vmatprep.subr.bf16.mxu0 %v2330
  %2402 = vmatpush1.bf16.msra.mxu0 %v2329
  %2403 = vmatprep.subr.bf16.mxu0 %v2334
  %2404 = vmatpush1.bf16.msra.mxu0 %v2333
  %2405 = vmatprep.subr.bf16.mxu0 %v2338
  %2406 = vmatpush1.bf16.msra.mxu0 %v2337
  %2407 = vmatprep.subr.bf16.mxu0 0
  %2408 = vmatpush1.bf16.msra.mxu0 0
  %2409 = vmatprep.subr.bf16.mxu0 0
  %2410 = vmatpush1.bf16.msra.mxu0 0
  %2411 = vmatprep.subr.bf16.mxu0 0
  %2412 = vmatpush1.bf16.msra.mxu0 0
  %2413 = vmatprep.subr.bf16.mxu0 0
  %2414 = vmatpush1.bf16.msra.mxu0 0
  %2415 = vmatprep.subr.bf16.mxu0 0
  %2416 = vmatpush1.bf16.msra.mxu0 0
  %2417 = vmatprep.subr.bf16.mxu0 0
  %2418 = vmatpush1.bf16.msra.mxu0 0
  %2419 = vmatprep.subr.bf16.mxu0 0
  %2420 = vmatpush1.bf16.msra.mxu0 0
  %2421 = vmatprep.subr.bf16.mxu0 0
  %2422 = vmatpush1.bf16.msra.mxu0 0
  %2423 = vmatprep.subr.bf16.mxu0 0
  %2424 = vmatpush1.bf16.msra.mxu0 0
  %2425 = vmatprep.subr.bf16.mxu0 0
  %2426 = vmatpush1.bf16.msra.mxu0 0
  %2427 = vmatprep.subr.bf16.mxu0 0
  %2428 = vmatpush1.bf16.msra.mxu0 0
  %2429 = vmatprep.subr.bf16.mxu0 0
  %2430 = vmatpush1.bf16.msra.mxu0 0
  %2431 = vmatprep.mubr.bf16.mxu0 0
  %2432 = vmatmul.mubr.bf16.gmra.mrb[0].mxu0 %v2356
  %v2433 = vpop.f32.mrb[0].mxu0
  %v2434 = vadd.f32 0.0, %v2433
  %v2435 = vpop.f32.mrb[0].mxu0
  %v2436 = vadd.f32 0.0, %v2435
  %v2437 = vpop.f32.mrb[0].mxu0
  %v2438 = vpop.f32.mrb[0].mxu0
  %2439 = vdwg.mxu0
  %v2440 = vadd.f32 %v2254, %v2393
  %v2441 = vadd.f32 %v2255, %v2395
  %v2442 = vadd.f32 %v2256, %v2434
  %v2443 = vadd.f32 %v2257, %v2436
  %v2444 = vpack.c.bf16 %v585, %v585
  %v2445 = vld [vmem:[%s3 + $0x500] sm:$0xff]
  %v2446 = vld [vmem:[%s3 + $0x508] sm:$0xff]
  %v2447 = vld [vmem:[%s3 + $0x510] sm:$0xff]
  %v2448 = vld [vmem:[%s3 + $0x518] sm:$0xff]
  %v2449 = vld [vmem:[%s3 + $0x520] sm:$0xff]
  %v2450 = vld [vmem:[%s3 + $0x528] sm:$0xff]
  %v2451 = vld [vmem:[%s3 + $0x530] sm:$0xff]
  %v2452 = vld [vmem:[%s3 + $0x538] sm:$0xff]
  %v2453 = vld [vmem:[%s3 + $0x540] sm:$0xff]
  %v2454 = vld [vmem:[%s3 + $0x548] sm:$0xff]
  %v2455 = vld [vmem:[%s3 + $0x550] sm:$0xff]
  %v2456 = vld [vmem:[%s3 + $0x558] sm:$0xff]
  %v2457 = vld [vmem:[%s3 + $0x560] sm:$0xff]
  %v2458 = vld [vmem:[%s3 + $0x568] sm:$0xff]
  %v2459 = vld [vmem:[%s3 + $0x570] sm:$0xff]
  %v2460 = vld [vmem:[%s3 + $0x578] sm:$0xff]
  %v2477 = vunpack.c.l.b16 %v2445
  %v2478 = vunpack.c.h.b16 %v2445
  %v2479 = vunpack.c.l.b16 %v2446
  %v2480 = vunpack.c.h.b16 %v2446
  %v2481 = vunpack.c.l.b16 %v2447
  %v2482 = vunpack.c.h.b16 %v2447
  %v2483 = vunpack.c.l.b16 %v2448
  %v2484 = vunpack.c.h.b16 %v2448
  %v2485 = vunpack.c.l.b16 %v2449
  %v2486 = vunpack.c.h.b16 %v2449
  %v2487 = vunpack.c.l.b16 %v2450
  %v2488 = vunpack.c.h.b16 %v2450
  %v2489 = vunpack.c.l.b16 %v2451
  %v2490 = vunpack.c.h.b16 %v2451
  %v2491 = vunpack.c.l.b16 %v2452
  %v2492 = vunpack.c.h.b16 %v2452
  %v2493 = vunpack.c.l.b16 %v2453
  %v2494 = vunpack.c.h.b16 %v2453
  %v2495 = vunpack.c.l.b16 %v2454
  %v2496 = vunpack.c.h.b16 %v2454
  %v2497 = vunpack.c.l.b16 %v2455
  %v2498 = vunpack.c.h.b16 %v2455
  %v2499 = vunpack.c.l.b16 %v2456
  %v2500 = vunpack.c.h.b16 %v2456
  %v2501 = vunpack.c.l.b16 %v2457
  %v2502 = vunpack.c.h.b16 %v2457
  %v2503 = vunpack.c.l.b16 %v2458
  %v2504 = vunpack.c.h.b16 %v2458
  %v2505 = vunpack.c.l.b16 %v2459
  %v2506 = vunpack.c.h.b16 %v2459
  %v2507 = vunpack.c.l.b16 %v2460
  %v2508 = vunpack.c.h.b16 %v2460
  %v2509 = vpack.c.b16 %v2481, %v2477
  %v2510 = vpack.c.b16 %v2482, %v2478
  %v2511 = vpack.c.b16 %v2483, %v2479
  %v2512 = vpack.c.b16 %v2484, %v2480
  %v2513 = vpack.c.b16 %v2489, %v2485
  %v2514 = vpack.c.b16 %v2490, %v2486
  %v2515 = vpack.c.b16 %v2491, %v2487
  %v2516 = vpack.c.b16 %v2492, %v2488
  %v2517 = vpack.c.b16 %v2497, %v2493
  %v2518 = vpack.c.b16 %v2498, %v2494
  %v2519 = vpack.c.b16 %v2499, %v2495
  %v2520 = vpack.c.b16 %v2500, %v2496
  %v2521 = vpack.c.b16 %v2505, %v2501
  %v2522 = vpack.c.b16 %v2506, %v2502
  %v2523 = vpack.c.b16 %v2507, %v2503
  %v2524 = vpack.c.b16 %v2508, %v2504
  %v2542 = vsel %vm705, %v2444, 0
  %2544 = vmatprep.subr.bf16.mxu0 %v2510
  %2545 = vmatpush1.bf16.msra.mxu0 %v2509
  %2546 = vmatprep.subr.bf16.mxu0 %v2514
  %2547 = vmatpush1.bf16.msra.mxu0 %v2513
  %2548 = vmatprep.subr.bf16.mxu0 %v2518
  %2549 = vmatpush1.bf16.msra.mxu0 %v2517
  %2550 = vmatprep.subr.bf16.mxu0 %v2522
  %2551 = vmatpush1.bf16.msra.mxu0 %v2521
  %2552 = vmatprep.subr.bf16.mxu0 0
  %2553 = vmatpush1.bf16.msra.mxu0 0
  %2554 = vmatprep.subr.bf16.mxu0 0
  %2555 = vmatpush1.bf16.msra.mxu0 0
  %2556 = vmatprep.subr.bf16.mxu0 0
  %2557 = vmatpush1.bf16.msra.mxu0 0
  %2558 = vmatprep.subr.bf16.mxu0 0
  %2559 = vmatpush1.bf16.msra.mxu0 0
  %2560 = vmatprep.subr.bf16.mxu0 0
  %2561 = vmatpush1.bf16.msra.mxu0 0
  %2562 = vmatprep.subr.bf16.mxu0 0
  %2563 = vmatpush1.bf16.msra.mxu0 0
  %2564 = vmatprep.subr.bf16.mxu0 0
  %2565 = vmatpush1.bf16.msra.mxu0 0
  %2566 = vmatprep.subr.bf16.mxu0 0
  %2567 = vmatpush1.bf16.msra.mxu0 0
  %2568 = vmatprep.subr.bf16.mxu0 0
  %2569 = vmatpush1.bf16.msra.mxu0 0
  %2570 = vmatprep.subr.bf16.mxu0 0
  %2571 = vmatpush1.bf16.msra.mxu0 0
  %2572 = vmatprep.subr.bf16.mxu0 0
  %2573 = vmatpush1.bf16.msra.mxu0 0
  %2574 = vmatprep.subr.bf16.mxu0 0
  %2575 = vmatpush1.bf16.msra.mxu0 0
  %2576 = vmatprep.mubr.bf16.mxu0 0
  %2577 = vmatmul.mubr.bf16.gmra.mrb[0].mxu0 %v2542
  %v2578 = vpop.f32.mrb[0].mxu0
  %v2579 = vadd.f32 0.0, %v2578
  %v2580 = vpop.f32.mrb[0].mxu0
  %v2581 = vadd.f32 0.0, %v2580
  %v2582 = vpop.f32.mrb[0].mxu0
  %v2583 = vpop.f32.mrb[0].mxu0
  %2584 = vdwg.mxu0
  %2585 = vmatprep.subr.bf16.mxu0 %v2512
  %2586 = vmatpush1.bf16.msra.mxu0 %v2511
  %2587 = vmatprep.subr.bf16.mxu0 %v2516
  %2588 = vmatpush1.bf16.msra.mxu0 %v2515
  %2589 = vmatprep.subr.bf16.mxu0 %v2520
  %2590 = vmatpush1.bf16.msra.mxu0 %v2519
  %2591 = vmatprep.subr.bf16.mxu0 %v2524
  %2592 = vmatpush1.bf16.msra.mxu0 %v2523
  %2593 = vmatprep.subr.bf16.mxu0 0
  %2594 = vmatpush1.bf16.msra.mxu0 0
  %2595 = vmatprep.subr.bf16.mxu0 0
  %2596 = vmatpush1.bf16.msra.mxu0 0
  %2597 = vmatprep.subr.bf16.mxu0 0
  %2598 = vmatpush1.bf16.msra.mxu0 0
  %2599 = vmatprep.subr.bf16.mxu0 0
  %2600 = vmatpush1.bf16.msra.mxu0 0
  %2601 = vmatprep.subr.bf16.mxu0 0
  %2602 = vmatpush1.bf16.msra.mxu0 0
  %2603 = vmatprep.subr.bf16.mxu0 0
  %2604 = vmatpush1.bf16.msra.mxu0 0
  %2605 = vmatprep.subr.bf16.mxu0 0
  %2606 = vmatpush1.bf16.msra.mxu0 0
  %2607 = vmatprep.subr.bf16.mxu0 0
  %2608 = vmatpush1.bf16.msra.mxu0 0
  %2609 = vmatprep.subr.bf16.mxu0 0
  %2610 = vmatpush1.bf16.msra.mxu0 0
  %2611 = vmatprep.subr.bf16.mxu0 0
  %2612 = vmatpush1.bf16.msra.mxu0 0
  %2613 = vmatprep.subr.bf16.mxu0 0
  %2614 = vmatpush1.bf16.msra.mxu0 0
  %2615 = vmatprep.subr.bf16.mxu0 0
  %2616 = vmatpush1.bf16.msra.mxu0 0
  %2617 = vmatprep.mubr.bf16.mxu0 0
  %2618 = vmatmul.mubr.bf16.gmra.mrb[0].mxu0 %v2542
  %v2619 = vpop.f32.mrb[0].mxu0
  %v2620 = vadd.f32 0.0, %v2619
  %v2621 = vpop.f32.mrb[0].mxu0
  %v2622 = vadd.f32 0.0, %v2621
  %v2623 = vpop.f32.mrb[0].mxu0
  %v2624 = vpop.f32.mrb[0].mxu0
  %2625 = vdwg.mxu0
  %v2626 = vadd.f32 %v2440, %v2579
  %v2627 = vadd.f32 %v2441, %v2581
  %v2628 = vadd.f32 %v2442, %v2620
  %v2629 = vadd.f32 %v2443, %v2622
  %v2630 = vpack.c.bf16 %v586, %v586
  %v2631 = vld [vmem:[%s3 + $0x580] sm:$0xff]
  %v2632 = vld [vmem:[%s3 + $0x588] sm:$0xff]
  %v2633 = vld [vmem:[%s3 + $0x590] sm:$0xff]
  %v2634 = vld [vmem:[%s3 + $0x598] sm:$0xff]
  %v2635 = vld [vmem:[%s3 + $0x5a0] sm:$0xff]
  %v2636 = vld [vmem:[%s3 + $0x5a8] sm:$0xff]
  %v2637 = vld [vmem:[%s3 + $0x5b0] sm:$0xff]
  %v2638 = vld [vmem:[%s3 + $0x5b8] sm:$0xff]
  %v2639 = vld [vmem:[%s3 + $0x5c0] sm:$0xff]
  %v2640 = vld [vmem:[%s3 + $0x5c8] sm:$0xff]
  %v2641 = vld [vmem:[%s3 + $0x5d0] sm:$0xff]
  %v2642 = vld [vmem:[%s3 + $0x5d8] sm:$0xff]
  %v2643 = vld [vmem:[%s3 + $0x5e0] sm:$0xff]
  %v2644 = vld [vmem:[%s3 + $0x5e8] sm:$0xff]
  %v2645 = vld [vmem:[%s3 + $0x5f0] sm:$0xff]
  %v2646 = vld [vmem:[%s3 + $0x5f8] sm:$0xff]
  %v2663 = vunpack.c.l.b16 %v2631
  %v2664 = vunpack.c.h.b16 %v2631
  %v2665 = vunpack.c.l.b16 %v2632
  %v2666 = vunpack.c.h.b16 %v2632
  %v2667 = vunpack.c.l.b16 %v2633
  %v2668 = vunpack.c.h.b16 %v2633
  %v2669 = vunpack.c.l.b16 %v2634
  %v2670 = vunpack.c.h.b16 %v2634
  %v2671 = vunpack.c.l.b16 %v2635
  %v2672 = vunpack.c.h.b16 %v2635
  %v2673 = vunpack.c.l.b16 %v2636
  %v2674 = vunpack.c.h.b16 %v2636
  %v2675 = vunpack.c.l.b16 %v2637
  %v2676 = vunpack.c.h.b16 %v2637
  %v2677 = vunpack.c.l.b16 %v2638
  %v2678 = vunpack.c.h.b16 %v2638
  %v2679 = vunpack.c.l.b16 %v2639
  %v2680 = vunpack.c.h.b16 %v2639
  %v2681 = vunpack.c.l.b16 %v2640
  %v2682 = vunpack.c.h.b16 %v2640
  %v2683 = vunpack.c.l.b16 %v2641
  %v2684 = vunpack.c.h.b16 %v2641
  %v2685 = vunpack.c.l.b16 %v2642
  %v2686 = vunpack.c.h.b16 %v2642
  %v2687 = vunpack.c.l.b16 %v2643
  %v2688 = vunpack.c.h.b16 %v2643
  %v2689 = vunpack.c.l.b16 %v2644
  %v2690 = vunpack.c.h.b16 %v2644
  %v2691 = vunpack.c.l.b16 %v2645
  %v2692 = vunpack.c.h.b16 %v2645
  %v2693 = vunpack.c.l.b16 %v2646
  %v2694 = vunpack.c.h.b16 %v2646
  %v2695 = vpack.c.b16 %v2667, %v2663
  %v2696 = vpack.c.b16 %v2668, %v2664
  %v2697 = vpack.c.b16 %v2669, %v2665
  %v2698 = vpack.c.b16 %v2670, %v2666
  %v2699 = vpack.c.b16 %v2675, %v2671
  %v2700 = vpack.c.b16 %v2676, %v2672
  %v2701 = vpack.c.b16 %v2677, %v2673
  %v2702 = vpack.c.b16 %v2678, %v2674
  %v2703 = vpack.c.b16 %v2683, %v2679
  %v2704 = vpack.c.b16 %v2684, %v2680
  %v2705 = vpack.c.b16 %v2685, %v2681
  %v2706 = vpack.c.b16 %v2686, %v2682
  %v2707 = vpack.c.b16 %v2691, %v2687
  %v2708 = vpack.c.b16 %v2692, %v2688
  %v2709 = vpack.c.b16 %v2693, %v2689
  %v2710 = vpack.c.b16 %v2694, %v2690
  %v2728 = vsel %vm705, %v2630, 0
  %2730 = vmatprep.subr.bf16.mxu0 %v2696
  %2731 = vmatpush1.bf16.msra.mxu0 %v2695
  %2732 = vmatprep.subr.bf16.mxu0 %v2700
  %2733 = vmatpush1.bf16.msra.mxu0 %v2699
  %2734 = vmatprep.subr.bf16.mxu0 %v2704
  %2735 = vmatpush1.bf16.msra.mxu0 %v2703
  %2736 = vmatprep.subr.bf16.mxu0 %v2708
  %2737 = vmatpush1.bf16.msra.mxu0 %v2707
  %2738 = vmatprep.subr.bf16.mxu0 0
  %2739 = vmatpush1.bf16.msra.mxu0 0
  %2740 = vmatprep.subr.bf16.mxu0 0
  %2741 = vmatpush1.bf16.msra.mxu0 0
  %2742 = vmatprep.subr.bf16.mxu0 0
  %2743 = vmatpush1.bf16.msra.mxu0 0
  %2744 = vmatprep.subr.bf16.mxu0 0
  %2745 = vmatpush1.bf16.msra.mxu0 0
  %2746 = vmatprep.subr.bf16.mxu0 0
  %2747 = vmatpush1.bf16.msra.mxu0 0
  %2748 = vmatprep.subr.bf16.mxu0 0
  %2749 = vmatpush1.bf16.msra.mxu0 0
  %2750 = vmatprep.subr.bf16.mxu0 0
  %2751 = vmatpush1.bf16.msra.mxu0 0
  %2752 = vmatprep.subr.bf16.mxu0 0
  %2753 = vmatpush1.bf16.msra.mxu0 0
  %2754 = vmatprep.subr.bf16.mxu0 0
  %2755 = vmatpush1.bf16.msra.mxu0 0
  %2756 = vmatprep.subr.bf16.mxu0 0
  %2757 = vmatpush1.bf16.msra.mxu0 0
  %2758 = vmatprep.subr.bf16.mxu0 0
  %2759 = vmatpush1.bf16.msra.mxu0 0
  %2760 = vmatprep.subr.bf16.mxu0 0
  %2761 = vmatpush1.bf16.msra.mxu0 0
  %2762 = vmatprep.mubr.bf16.mxu0 0
  %2763 = vmatmul.mubr.bf16.gmra.mrb[0].mxu0 %v2728
  %v2764 = vpop.f32.mrb[0].mxu0
  %v2765 = vadd.f32 0.0, %v2764
  %v2766 = vpop.f32.mrb[0].mxu0
  %v2767 = vadd.f32 0.0, %v2766
  %v2768 = vpop.f32.mrb[0].mxu0
  %v2769 = vpop.f32.mrb[0].mxu0
  %2770 = vdwg.mxu0
  %2771 = vmatprep.subr.bf16.mxu0 %v2698
  %2772 = vmatpush1.bf16.msra.mxu0 %v2697
  %2773 = vmatprep.subr.bf16.mxu0 %v2702
  %2774 = vmatpush1.bf16.msra.mxu0 %v2701
  %2775 = vmatprep.subr.bf16.mxu0 %v2706
  %2776 = vmatpush1.bf16.msra.mxu0 %v2705
  %2777 = vmatprep.subr.bf16.mxu0 %v2710
  %2778 = vmatpush1.bf16.msra.mxu0 %v2709
  %2779 = vmatprep.subr.bf16.mxu0 0
  %2780 = vmatpush1.bf16.msra.mxu0 0
  %2781 = vmatprep.subr.bf16.mxu0 0
  %2782 = vmatpush1.bf16.msra.mxu0 0
  %2783 = vmatprep.subr.bf16.mxu0 0
  %2784 = vmatpush1.bf16.msra.mxu0 0
  %2785 = vmatprep.subr.bf16.mxu0 0
  %2786 = vmatpush1.bf16.msra.mxu0 0
  %2787 = vmatprep.subr.bf16.mxu0 0
  %2788 = vmatpush1.bf16.msra.mxu0 0
  %2789 = vmatprep.subr.bf16.mxu0 0
  %2790 = vmatpush1.bf16.msra.mxu0 0
  %2791 = vmatprep.subr.bf16.mxu0 0
  %2792 = vmatpush1.bf16.msra.mxu0 0
  %2793 = vmatprep.subr.bf16.mxu0 0
  %2794 = vmatpush1.bf16.msra.mxu0 0
  %2795 = vmatprep.subr.bf16.mxu0 0
  %2796 = vmatpush1.bf16.msra.mxu0 0
  %2797 = vmatprep.subr.bf16.mxu0 0
  %2798 = vmatpush1.bf16.msra.mxu0 0
  %2799 = vmatprep.subr.bf16.mxu0 0
  %2800 = vmatpush1.bf16.msra.mxu0 0
  %2801 = vmatprep.subr.bf16.mxu0 0
  %2802 = vmatpush1.bf16.msra.mxu0 0
  %2803 = vmatprep.mubr.bf16.mxu0 0
  %2804 = vmatmul.mubr.bf16.gmra.mrb[0].mxu0 %v2728
  %v2805 = vpop.f32.mrb[0].mxu0
  %v2806 = vadd.f32 0.0, %v2805
  %v2807 = vpop.f32.mrb[0].mxu0
  %v2808 = vadd.f32 0.0, %v2807
  %v2809 = vpop.f32.mrb[0].mxu0
  %v2810 = vpop.f32.mrb[0].mxu0
  %2811 = vdwg.mxu0
  %v2812 = vadd.f32 %v2626, %v2765
  %v2813 = vadd.f32 %v2627, %v2767
  %v2814 = vadd.f32 %v2628, %v2806
  %v2815 = vadd.f32 %v2629, %v2808
  %v2816 = vpack.c.bf16 %v587, %v587
  %v2817 = vld [vmem:[%s3 + $0x600] sm:$0xff]
  %v2818 = vld [vmem:[%s3 + $0x608] sm:$0xff]
  %v2819 = vld [vmem:[%s3 + $0x610] sm:$0xff]
  %v2820 = vld [vmem:[%s3 + $0x618] sm:$0xff]
  %v2821 = vld [vmem:[%s3 + $0x620] sm:$0xff]
  %v2822 = vld [vmem:[%s3 + $0x628] sm:$0xff]
  %v2823 = vld [vmem:[%s3 + $0x630] sm:$0xff]
  %v2824 = vld [vmem:[%s3 + $0x638] sm:$0xff]
  %v2825 = vld [vmem:[%s3 + $0x640] sm:$0xff]
  %v2826 = vld [vmem:[%s3 + $0x648] sm:$0xff]
  %v2827 = vld [vmem:[%s3 + $0x650] sm:$0xff]
  %v2828 = vld [vmem:[%s3 + $0x658] sm:$0xff]
  %v2829 = vld [vmem:[%s3 + $0x660] sm:$0xff]
  %v2830 = vld [vmem:[%s3 + $0x668] sm:$0xff]
  %v2831 = vld [vmem:[%s3 + $0x670] sm:$0xff]
  %v2832 = vld [vmem:[%s3 + $0x678] sm:$0xff]
  %v2849 = vunpack.c.l.b16 %v2817
  %v2850 = vunpack.c.h.b16 %v2817
  %v2851 = vunpack.c.l.b16 %v2818
  %v2852 = vunpack.c.h.b16 %v2818
  %v2853 = vunpack.c.l.b16 %v2819
  %v2854 = vunpack.c.h.b16 %v2819
  %v2855 = vunpack.c.l.b16 %v2820
  %v2856 = vunpack.c.h.b16 %v2820
  %v2857 = vunpack.c.l.b16 %v2821
  %v2858 = vunpack.c.h.b16 %v2821
  %v2859 = vunpack.c.l.b16 %v2822
  %v2860 = vunpack.c.h.b16 %v2822
  %v2861 = vunpack.c.l.b16 %v2823
  %v2862 = vunpack.c.h.b16 %v2823
  %v2863 = vunpack.c.l.b16 %v2824
  %v2864 = vunpack.c.h.b16 %v2824
  %v2865 = vunpack.c.l.b16 %v2825
  %v2866 = vunpack.c.h.b16 %v2825
  %v2867 = vunpack.c.l.b16 %v2826
  %v2868 = vunpack.c.h.b16 %v2826
  %v2869 = vunpack.c.l.b16 %v2827
  %v2870 = vunpack.c.h.b16 %v2827
  %v2871 = vunpack.c.l.b16 %v2828
  %v2872 = vunpack.c.h.b16 %v2828
  %v2873 = vunpack.c.l.b16 %v2829
  %v2874 = vunpack.c.h.b16 %v2829
  %v2875 = vunpack.c.l.b16 %v2830
  %v2876 = vunpack.c.h.b16 %v2830
  %v2877 = vunpack.c.l.b16 %v2831
  %v2878 = vunpack.c.h.b16 %v2831
  %v2879 = vunpack.c.l.b16 %v2832
  %v2880 = vunpack.c.h.b16 %v2832
  %v2881 = vpack.c.b16 %v2853, %v2849
  %v2882 = vpack.c.b16 %v2854, %v2850
  %v2883 = vpack.c.b16 %v2855, %v2851
  %v2884 = vpack.c.b16 %v2856, %v2852
  %v2885 = vpack.c.b16 %v2861, %v2857
  %v2886 = vpack.c.b16 %v2862, %v2858
  %v2887 = vpack.c.b16 %v2863, %v2859
  %v2888 = vpack.c.b16 %v2864, %v2860
  %v2889 = vpack.c.b16 %v2869, %v2865
  %v2890 = vpack.c.b16 %v2870, %v2866
  %v2891 = vpack.c.b16 %v2871, %v2867
  %v2892 = vpack.c.b16 %v2872, %v2868
  %v2893 = vpack.c.b16 %v2877, %v2873
  %v2894 = vpack.c.b16 %v2878, %v2874
  %v2895 = vpack.c.b16 %v2879, %v2875
  %v2896 = vpack.c.b16 %v2880, %v2876
  %v2914 = vsel %vm705, %v2816, 0
  %2916 = vmatprep.subr.bf16.mxu0 %v2882
  %2917 = vmatpush1.bf16.msra.mxu0 %v2881
  %2918 = vmatprep.subr.bf16.mxu0 %v2886
  %2919 = vmatpush1.bf16.msra.mxu0 %v2885
  %2920 = vmatprep.subr.bf16.mxu0 %v2890
  %2921 = vmatpush1.bf16.msra.mxu0 %v2889
  %2922 = vmatprep.subr.bf16.mxu0 %v2894
  %2923 = vmatpush1.bf16.msra.mxu0 %v2893
  %2924 = vmatprep.subr.bf16.mxu0 0
  %2925 = vmatpush1.bf16.msra.mxu0 0
  %2926 = vmatprep.subr.bf16.mxu0 0
  %2927 = vmatpush1.bf16.msra.mxu0 0
  %2928 = vmatprep.subr.bf16.mxu0 0
  %2929 = vmatpush1.bf16.msra.mxu0 0
  %2930 = vmatprep.subr.bf16.mxu0 0
  %2931 = vmatpush1.bf16.msra.mxu0 0
  %2932 = vmatprep.subr.bf16.mxu0 0
  %2933 = vmatpush1.bf16.msra.mxu0 0
  %2934 = vmatprep.subr.bf16.mxu0 0
  %2935 = vmatpush1.bf16.msra.mxu0 0
  %2936 = vmatprep.subr.bf16.mxu0 0
  %2937 = vmatpush1.bf16.msra.mxu0 0
  %2938 = vmatprep.subr.bf16.mxu0 0
  %2939 = vmatpush1.bf16.msra.mxu0 0
  %2940 = vmatprep.subr.bf16.mxu0 0
  %2941 = vmatpush1.bf16.msra.mxu0 0
  %2942 = vmatprep.subr.bf16.mxu0 0
  %2943 = vmatpush1.bf16.msra.mxu0 0
  %2944 = vmatprep.subr.bf16.mxu0 0
  %2945 = vmatpush1.bf16.msra.mxu0 0
  %2946 = vmatprep.subr.bf16.mxu0 0
  %2947 = vmatpush1.bf16.msra.mxu0 0
  %2948 = vmatprep.mubr.bf16.mxu0 0
  %2949 = vmatmul.mubr.bf16.gmra.mrb[0].mxu0 %v2914
  %v2950 = vpop.f32.mrb[0].mxu0
  %v2951 = vadd.f32 0.0, %v2950
  %v2952 = vpop.f32.mrb[0].mxu0
  %v2953 = vadd.f32 0.0, %v2952
  %v2954 = vpop.f32.mrb[0].mxu0
  %v2955 = vpop.f32.mrb[0].mxu0
  %2956 = vdwg.mxu0
  %2957 = vmatprep.subr.bf16.mxu0 %v2884
  %2958 = vmatpush1.bf16.msra.mxu0 %v2883
  %2959 = vmatprep.subr.bf16.mxu0 %v2888
  %2960 = vmatpush1.bf16.msra.mxu0 %v2887
  %2961 = vmatprep.subr.bf16.mxu0 %v2892
  %2962 = vmatpush1.bf16.msra.mxu0 %v2891
  %2963 = vmatprep.subr.bf16.mxu0 %v2896
  %2964 = vmatpush1.bf16.msra.mxu0 %v2895
  %2965 = vmatprep.subr.bf16.mxu0 0
  %2966 = vmatpush1.bf16.msra.mxu0 0
  %2967 = vmatprep.subr.bf16.mxu0 0
  %2968 = vmatpush1.bf16.msra.mxu0 0
  %2969 = vmatprep.subr.bf16.mxu0 0
  %2970 = vmatpush1.bf16.msra.mxu0 0
  %2971 = vmatprep.subr.bf16.mxu0 0
  %2972 = vmatpush1.bf16.msra.mxu0 0
  %2973 = vmatprep.subr.bf16.mxu0 0
  %2974 = vmatpush1.bf16.msra.mxu0 0
  %2975 = vmatprep.subr.bf16.mxu0 0
  %2976 = vmatpush1.bf16.msra.mxu0 0
  %2977 = vmatprep.subr.bf16.mxu0 0
  %2978 = vmatpush1.bf16.msra.mxu0 0
  %2979 = vmatprep.subr.bf16.mxu0 0
  %2980 = vmatpush1.bf16.msra.mxu0 0
  %2981 = vmatprep.subr.bf16.mxu0 0
  %2982 = vmatpush1.bf16.msra.mxu0 0
  %2983 = vmatprep.subr.bf16.mxu0 0
  %2984 = vmatpush1.bf16.msra.mxu0 0
  %2985 = vmatprep.subr.bf16.mxu0 0
  %2986 = vmatpush1.bf16.msra.mxu0 0
  %2987 = vmatprep.subr.bf16.mxu0 0
  %2988 = vmatpush1.bf16.msra.mxu0 0
  %2989 = vmatprep.mubr.bf16.mxu0 0
  %2990 = vmatmul.mubr.bf16.gmra.mrb[0].mxu0 %v2914
  %v2991 = vpop.f32.mrb[0].mxu0
  %v2992 = vadd.f32 0.0, %v2991
  %v2993 = vpop.f32.mrb[0].mxu0
  %v2994 = vadd.f32 0.0, %v2993
  %v2995 = vpop.f32.mrb[0].mxu0
  %v2996 = vpop.f32.mrb[0].mxu0
  %2997 = vdwg.mxu0
  %v2998 = vadd.f32 %v2812, %v2951
  %v2999 = vadd.f32 %v2813, %v2953
  %v3000 = vadd.f32 %v2814, %v2992
  %v3001 = vadd.f32 %v2815, %v2994
  %v3002 = vpack.c.bf16 %v588, %v588
  %v3003 = vld [vmem:[%s3 + $0x680] sm:$0xff]
  %v3004 = vld [vmem:[%s3 + $0x688] sm:$0xff]
  %v3005 = vld [vmem:[%s3 + $0x690] sm:$0xff]
  %v3006 = vld [vmem:[%s3 + $0x698] sm:$0xff]
  %v3007 = vld [vmem:[%s3 + $0x6a0] sm:$0xff]
  %v3008 = vld [vmem:[%s3 + $0x6a8] sm:$0xff]
  %v3009 = vld [vmem:[%s3 + $0x6b0] sm:$0xff]
  %v3010 = vld [vmem:[%s3 + $0x6b8] sm:$0xff]
  %v3011 = vld [vmem:[%s3 + $0x6c0] sm:$0xff]
  %v3012 = vld [vmem:[%s3 + $0x6c8] sm:$0xff]
  %v3013 = vld [vmem:[%s3 + $0x6d0] sm:$0xff]
  %v3014 = vld [vmem:[%s3 + $0x6d8] sm:$0xff]
  %v3015 = vld [vmem:[%s3 + $0x6e0] sm:$0xff]
  %v3016 = vld [vmem:[%s3 + $0x6e8] sm:$0xff]
  %v3017 = vld [vmem:[%s3 + $0x6f0] sm:$0xff]
  %v3018 = vld [vmem:[%s3 + $0x6f8] sm:$0xff]
  %v3035 = vunpack.c.l.b16 %v3003
  %v3036 = vunpack.c.h.b16 %v3003
  %v3037 = vunpack.c.l.b16 %v3004
  %v3038 = vunpack.c.h.b16 %v3004
  %v3039 = vunpack.c.l.b16 %v3005
  %v3040 = vunpack.c.h.b16 %v3005
  %v3041 = vunpack.c.l.b16 %v3006
  %v3042 = vunpack.c.h.b16 %v3006
  %v3043 = vunpack.c.l.b16 %v3007
  %v3044 = vunpack.c.h.b16 %v3007
  %v3045 = vunpack.c.l.b16 %v3008
  %v3046 = vunpack.c.h.b16 %v3008
  %v3047 = vunpack.c.l.b16 %v3009
  %v3048 = vunpack.c.h.b16 %v3009
  %v3049 = vunpack.c.l.b16 %v3010
  %v3050 = vunpack.c.h.b16 %v3010
  %v3051 = vunpack.c.l.b16 %v3011
  %v3052 = vunpack.c.h.b16 %v3011
  %v3053 = vunpack.c.l.b16 %v3012
  %v3054 = vunpack.c.h.b16 %v3012
  %v3055 = vunpack.c.l.b16 %v3013
  %v3056 = vunpack.c.h.b16 %v3013
  %v3057 = vunpack.c.l.b16 %v3014
  %v3058 = vunpack.c.h.b16 %v3014
  %v3059 = vunpack.c.l.b16 %v3015
  %v3060 = vunpack.c.h.b16 %v3015
  %v3061 = vunpack.c.l.b16 %v3016
  %v3062 = vunpack.c.h.b16 %v3016
  %v3063 = vunpack.c.l.b16 %v3017
  %v3064 = vunpack.c.h.b16 %v3017
  %v3065 = vunpack.c.l.b16 %v3018
  %v3066 = vunpack.c.h.b16 %v3018
  %v3067 = vpack.c.b16 %v3039, %v3035
  %v3068 = vpack.c.b16 %v3040, %v3036
  %v3069 = vpack.c.b16 %v3041, %v3037
  %v3070 = vpack.c.b16 %v3042, %v3038
  %v3071 = vpack.c.b16 %v3047, %v3043
  %v3072 = vpack.c.b16 %v3048, %v3044
  %v3073 = vpack.c.b16 %v3049, %v3045
  %v3074 = vpack.c.b16 %v3050, %v3046
  %v3075 = vpack.c.b16 %v3055, %v3051
  %v3076 = vpack.c.b16 %v3056, %v3052
  %v3077 = vpack.c.b16 %v3057, %v3053
  %v3078 = vpack.c.b16 %v3058, %v3054
  %v3079 = vpack.c.b16 %v3063, %v3059
  %v3080 = vpack.c.b16 %v3064, %v3060
  %v3081 = vpack.c.b16 %v3065, %v3061
  %v3082 = vpack.c.b16 %v3066, %v3062
  %v3100 = vsel %vm705, %v3002, 0
  %3102 = vmatprep.subr.bf16.mxu0 %v3068
  %3103 = vmatpush1.bf16.msra.mxu0 %v3067
  %3104 = vmatprep.subr.bf16.mxu0 %v3072
  %3105 = vmatpush1.bf16.msra.mxu0 %v3071
  %3106 = vmatprep.subr.bf16.mxu0 %v3076
  %3107 = vmatpush1.bf16.msra.mxu0 %v3075
  %3108 = vmatprep.subr.bf16.mxu0 %v3080
  %3109 = vmatpush1.bf16.msra.mxu0 %v3079
  %3110 = vmatprep.subr.bf16.mxu0 0
  %3111 = vmatpush1.bf16.msra.mxu0 0
  %3112 = vmatprep.subr.bf16.mxu0 0
  %3113 = vmatpush1.bf16.msra.mxu0 0
  %3114 = vmatprep.subr.bf16.mxu0 0
  %3115 = vmatpush1.bf16.msra.mxu0 0
  %3116 = vmatprep.subr.bf16.mxu0 0
  %3117 = vmatpush1.bf16.msra.mxu0 0
  %3118 = vmatprep.subr.bf16.mxu0 0
  %3119 = vmatpush1.bf16.msra.mxu0 0
  %3120 = vmatprep.subr.bf16.mxu0 0
  %3121 = vmatpush1.bf16.msra.mxu0 0
  %3122 = vmatprep.subr.bf16.mxu0 0
  %3123 = vmatpush1.bf16.msra.mxu0 0
  %3124 = vmatprep.subr.bf16.mxu0 0
  %3125 = vmatpush1.bf16.msra.mxu0 0
  %3126 = vmatprep.subr.bf16.mxu0 0
  %3127 = vmatpush1.bf16.msra.mxu0 0
  %3128 = vmatprep.subr.bf16.mxu0 0
  %3129 = vmatpush1.bf16.msra.mxu0 0
  %3130 = vmatprep.subr.bf16.mxu0 0
  %3131 = vmatpush1.bf16.msra.mxu0 0
  %3132 = vmatprep.subr.bf16.mxu0 0
  %3133 = vmatpush1.bf16.msra.mxu0 0
  %3134 = vmatprep.mubr.bf16.mxu0 0
  %3135 = vmatmul.mubr.bf16.gmra.mrb[0].mxu0 %v3100
  %v3136 = vpop.f32.mrb[0].mxu0
  %v3137 = vadd.f32 0.0, %v3136
  %v3138 = vpop.f32.mrb[0].mxu0
  %v3139 = vadd.f32 0.0, %v3138
  %v3140 = vpop.f32.mrb[0].mxu0
  %v3141 = vpop.f32.mrb[0].mxu0
  %3142 = vdwg.mxu0
  %3143 = vmatprep.subr.bf16.mxu0 %v3070
  %3144 = vmatpush1.bf16.msra.mxu0 %v3069
  %3145 = vmatprep.subr.bf16.mxu0 %v3074
  %3146 = vmatpush1.bf16.msra.mxu0 %v3073
  %3147 = vmatprep.subr.bf16.mxu0 %v3078
  %3148 = vmatpush1.bf16.msra.mxu0 %v3077
  %3149 = vmatprep.subr.bf16.mxu0 %v3082
  %3150 = vmatpush1.bf16.msra.mxu0 %v3081
  %3151 = vmatprep.subr.bf16.mxu0 0
  %3152 = vmatpush1.bf16.msra.mxu0 0
  %3153 = vmatprep.subr.bf16.mxu0 0
  %3154 = vmatpush1.bf16.msra.mxu0 0
  %3155 = vmatprep.subr.bf16.mxu0 0
  %3156 = vmatpush1.bf16.msra.mxu0 0
  %3157 = vmatprep.subr.bf16.mxu0 0
  %3158 = vmatpush1.bf16.msra.mxu0 0
  %3159 = vmatprep.subr.bf16.mxu0 0
  %3160 = vmatpush1.bf16.msra.mxu0 0
  %3161 = vmatprep.subr.bf16.mxu0 0
  %3162 = vmatpush1.bf16.msra.mxu0 0
  %3163 = vmatprep.subr.bf16.mxu0 0
  %3164 = vmatpush1.bf16.msra.mxu0 0
  %3165 = vmatprep.subr.bf16.mxu0 0
  %3166 = vmatpush1.bf16.msra.mxu0 0
  %3167 = vmatprep.subr.bf16.mxu0 0
  %3168 = vmatpush1.bf16.msra.mxu0 0
  %3169 = vmatprep.subr.bf16.mxu0 0
  %3170 = vmatpush1.bf16.msra.mxu0 0
  %3171 = vmatprep.subr.bf16.mxu0 0
  %3172 = vmatpush1.bf16.msra.mxu0 0
  %3173 = vmatprep.subr.bf16.mxu0 0
  %3174 = vmatpush1.bf16.msra.mxu0 0
  %3175 = vmatprep.mubr.bf16.mxu0 0
  %3176 = vmatmul.mubr.bf16.gmra.mrb[0].mxu0 %v3100
  %v3177 = vpop.f32.mrb[0].mxu0
  %v3178 = vadd.f32 0.0, %v3177
  %v3179 = vpop.f32.mrb[0].mxu0
  %v3180 = vadd.f32 0.0, %v3179
  %v3181 = vpop.f32.mrb[0].mxu0
  %v3182 = vpop.f32.mrb[0].mxu0
  %3183 = vdwg.mxu0
  %v3184 = vadd.f32 %v2998, %v3137
  %v3185 = vadd.f32 %v2999, %v3139
  %v3186 = vadd.f32 %v3000, %v3178
  %v3187 = vadd.f32 %v3001, %v3180
  %v3188 = vpack.c.bf16 %v589, %v589
  %v3189 = vld [vmem:[%s3 + $0x700] sm:$0xff]
  %v3190 = vld [vmem:[%s3 + $0x708] sm:$0xff]
  %v3191 = vld [vmem:[%s3 + $0x710] sm:$0xff]
  %v3192 = vld [vmem:[%s3 + $0x718] sm:$0xff]
  %v3193 = vld [vmem:[%s3 + $0x720] sm:$0xff]
  %v3194 = vld [vmem:[%s3 + $0x728] sm:$0xff]
  %v3195 = vld [vmem:[%s3 + $0x730] sm:$0xff]
  %v3196 = vld [vmem:[%s3 + $0x738] sm:$0xff]
  %v3197 = vld [vmem:[%s3 + $0x740] sm:$0xff]
  %v3198 = vld [vmem:[%s3 + $0x748] sm:$0xff]
  %v3199 = vld [vmem:[%s3 + $0x750] sm:$0xff]
  %v3200 = vld [vmem:[%s3 + $0x758] sm:$0xff]
  %v3201 = vld [vmem:[%s3 + $0x760] sm:$0xff]
  %v3202 = vld [vmem:[%s3 + $0x768] sm:$0xff]
  %v3203 = vld [vmem:[%s3 + $0x770] sm:$0xff]
  %v3204 = vld [vmem:[%s3 + $0x778] sm:$0xff]
  %v3221 = vunpack.c.l.b16 %v3189
  %v3222 = vunpack.c.h.b16 %v3189
  %v3223 = vunpack.c.l.b16 %v3190
  %v3224 = vunpack.c.h.b16 %v3190
  %v3225 = vunpack.c.l.b16 %v3191
  %v3226 = vunpack.c.h.b16 %v3191
  %v3227 = vunpack.c.l.b16 %v3192
  %v3228 = vunpack.c.h.b16 %v3192
  %v3229 = vunpack.c.l.b16 %v3193
  %v3230 = vunpack.c.h.b16 %v3193
  %v3231 = vunpack.c.l.b16 %v3194
  %v3232 = vunpack.c.h.b16 %v3194
  %v3233 = vunpack.c.l.b16 %v3195
  %v3234 = vunpack.c.h.b16 %v3195
  %v3235 = vunpack.c.l.b16 %v3196
  %v3236 = vunpack.c.h.b16 %v3196
  %v3237 = vunpack.c.l.b16 %v3197
  %v3238 = vunpack.c.h.b16 %v3197
  %v3239 = vunpack.c.l.b16 %v3198
  %v3240 = vunpack.c.h.b16 %v3198
  %v3241 = vunpack.c.l.b16 %v3199
  %v3242 = vunpack.c.h.b16 %v3199
  %v3243 = vunpack.c.l.b16 %v3200
  %v3244 = vunpack.c.h.b16 %v3200
  %v3245 = vunpack.c.l.b16 %v3201
  %v3246 = vunpack.c.h.b16 %v3201
  %v3247 = vunpack.c.l.b16 %v3202
  %v3248 = vunpack.c.h.b16 %v3202
  %v3249 = vunpack.c.l.b16 %v3203
  %v3250 = vunpack.c.h.b16 %v3203
  %v3251 = vunpack.c.l.b16 %v3204
  %v3252 = vunpack.c.h.b16 %v3204
  %v3253 = vpack.c.b16 %v3225, %v3221
  %v3254 = vpack.c.b16 %v3226, %v3222
  %v3255 = vpack.c.b16 %v3227, %v3223
  %v3256 = vpack.c.b16 %v3228, %v3224
  %v3257 = vpack.c.b16 %v3233, %v3229
  %v3258 = vpack.c.b16 %v3234, %v3230
  %v3259 = vpack.c.b16 %v3235, %v3231
  %v3260 = vpack.c.b16 %v3236, %v3232
  %v3261 = vpack.c.b16 %v3241, %v3237
  %v3262 = vpack.c.b16 %v3242, %v3238
  %v3263 = vpack.c.b16 %v3243, %v3239
  %v3264 = vpack.c.b16 %v3244, %v3240
  %v3265 = vpack.c.b16 %v3249, %v3245
  %v3266 = vpack.c.b16 %v3250, %v3246
  %v3267 = vpack.c.b16 %v3251, %v3247
  %v3268 = vpack.c.b16 %v3252, %v3248
  %v3286 = vsel %vm705, %v3188, 0
  %3288 = vmatprep.subr.bf16.mxu0 %v3254
  %3289 = vmatpush1.bf16.msra.mxu0 %v3253
  %3290 = vmatprep.subr.bf16.mxu0 %v3258
  %3291 = vmatpush1.bf16.msra.mxu0 %v3257
  %3292 = vmatprep.subr.bf16.mxu0 %v3262
  %3293 = vmatpush1.bf16.msra.mxu0 %v3261
  %3294 = vmatprep.subr.bf16.mxu0 %v3266
  %3295 = vmatpush1.bf16.msra.mxu0 %v3265
  %3296 = vmatprep.subr.bf16.mxu0 0
  %3297 = vmatpush1.bf16.msra.mxu0 0
  %3298 = vmatprep.subr.bf16.mxu0 0
  %3299 = vmatpush1.bf16.msra.mxu0 0
  %3300 = vmatprep.subr.bf16.mxu0 0
  %3301 = vmatpush1.bf16.msra.mxu0 0
  %3302 = vmatprep.subr.bf16.mxu0 0
  %3303 = vmatpush1.bf16.msra.mxu0 0
  %3304 = vmatprep.subr.bf16.mxu0 0
  %3305 = vmatpush1.bf16.msra.mxu0 0
  %3306 = vmatprep.subr.bf16.mxu0 0
  %3307 = vmatpush1.bf16.msra.mxu0 0
  %3308 = vmatprep.subr.bf16.mxu0 0
  %3309 = vmatpush1.bf16.msra.mxu0 0
  %3310 = vmatprep.subr.bf16.mxu0 0
  %3311 = vmatpush1.bf16.msra.mxu0 0
  %3312 = vmatprep.subr.bf16.mxu0 0
  %3313 = vmatpush1.bf16.msra.mxu0 0
  %3314 = vmatprep.subr.bf16.mxu0 0
  %3315 = vmatpush1.bf16.msra.mxu0 0
  %3316 = vmatprep.subr.bf16.mxu0 0
  %3317 = vmatpush1.bf16.msra.mxu0 0
  %3318 = vmatprep.subr.bf16.mxu0 0
  %3319 = vmatpush1.bf16.msra.mxu0 0
  %3320 = vmatprep.mubr.bf16.mxu0 0
  %3321 = vmatmul.mubr.bf16.gmra.mrb[0].mxu0 %v3286
  %v3322 = vpop.f32.mrb[0].mxu0
  %v3323 = vadd.f32 0.0, %v3322
  %v3324 = vpop.f32.mrb[0].mxu0
  %v3325 = vadd.f32 0.0, %v3324
  %v3326 = vpop.f32.mrb[0].mxu0
  %v3327 = vpop.f32.mrb[0].mxu0
  %3328 = vdwg.mxu0
  %3329 = vmatprep.subr.bf16.mxu0 %v3256
  %3330 = vmatpush1.bf16.msra.mxu0 %v3255
  %3331 = vmatprep.subr.bf16.mxu0 %v3260
  %3332 = vmatpush1.bf16.msra.mxu0 %v3259
  %3333 = vmatprep.subr.bf16.mxu0 %v3264
  %3334 = vmatpush1.bf16.msra.mxu0 %v3263
  %3335 = vmatprep.subr.bf16.mxu0 %v3268
  %3336 = vmatpush1.bf16.msra.mxu0 %v3267
  %3337 = vmatprep.subr.bf16.mxu0 0
  %3338 = vmatpush1.bf16.msra.mxu0 0
  %3339 = vmatprep.subr.bf16.mxu0 0
  %3340 = vmatpush1.bf16.msra.mxu0 0
  %3341 = vmatprep.subr.bf16.mxu0 0
  %3342 = vmatpush1.bf16.msra.mxu0 0
  %3343 = vmatprep.subr.bf16.mxu0 0
  %3344 = vmatpush1.bf16.msra.mxu0 0
  %3345 = vmatprep.subr.bf16.mxu0 0
  %3346 = vmatpush1.bf16.msra.mxu0 0
  %3347 = vmatprep.subr.bf16.mxu0 0
  %3348 = vmatpush1.bf16.msra.mxu0 0
  %3349 = vmatprep.subr.bf16.mxu0 0
  %3350 = vmatpush1.bf16.msra.mxu0 0
  %3351 = vmatprep.subr.bf16.mxu0 0
  %3352 = vmatpush1.bf16.msra.mxu0 0
  %3353 = vmatprep.subr.bf16.mxu0 0
  %3354 = vmatpush1.bf16.msra.mxu0 0
  %3355 = vmatprep.subr.bf16.mxu0 0
  %3356 = vmatpush1.bf16.msra.mxu0 0
  %3357 = vmatprep.subr.bf16.mxu0 0
  %3358 = vmatpush1.bf16.msra.mxu0 0
  %3359 = vmatprep.subr.bf16.mxu0 0
  %3360 = vmatpush1.bf16.msra.mxu0 0
  %3361 = vmatprep.mubr.bf16.mxu0 0
  %3362 = vmatmul.mubr.bf16.gmra.mrb[0].mxu0 %v3286
  %v3363 = vpop.f32.mrb[0].mxu0
  %v3364 = vadd.f32 0.0, %v3363
  %v3365 = vpop.f32.mrb[0].mxu0
  %v3366 = vadd.f32 0.0, %v3365
  %v3367 = vpop.f32.mrb[0].mxu0
  %v3368 = vpop.f32.mrb[0].mxu0
  %3369 = vdwg.mxu0
  %v3370 = vadd.f32 %v3184, %v3323
  %v3371 = vadd.f32 %v3185, %v3325
  %v3372 = vadd.f32 %v3186, %v3364
  %v3373 = vadd.f32 %v3187, %v3366
  %v3374 = vpack.c.bf16 %v590, %v590
  %v3375 = vld [vmem:[%s3 + $0x780] sm:$0xff]
  %v3376 = vld [vmem:[%s3 + $0x788] sm:$0xff]
  %v3377 = vld [vmem:[%s3 + $0x790] sm:$0xff]
  %v3378 = vld [vmem:[%s3 + $0x798] sm:$0xff]
  %v3379 = vld [vmem:[%s3 + $0x7a0] sm:$0xff]
  %v3380 = vld [vmem:[%s3 + $0x7a8] sm:$0xff]
  %v3381 = vld [vmem:[%s3 + $0x7b0] sm:$0xff]
  %v3382 = vld [vmem:[%s3 + $0x7b8] sm:$0xff]
  %v3383 = vld [vmem:[%s3 + $0x7c0] sm:$0xff]
  %v3384 = vld [vmem:[%s3 + $0x7c8] sm:$0xff]
  %v3385 = vld [vmem:[%s3 + $0x7d0] sm:$0xff]
  %v3386 = vld [vmem:[%s3 + $0x7d8] sm:$0xff]
  %v3387 = vld [vmem:[%s3 + $0x7e0] sm:$0xff]
  %v3388 = vld [vmem:[%s3 + $0x7e8] sm:$0xff]
  %v3389 = vld [vmem:[%s3 + $0x7f0] sm:$0xff]
  %v3390 = vld [vmem:[%s3 + $0x7f8] sm:$0xff]
  %v3407 = vunpack.c.l.b16 %v3375
  %v3408 = vunpack.c.h.b16 %v3375
  %v3409 = vunpack.c.l.b16 %v3376
  %v3410 = vunpack.c.h.b16 %v3376
  %v3411 = vunpack.c.l.b16 %v3377
  %v3412 = vunpack.c.h.b16 %v3377
  %v3413 = vunpack.c.l.b16 %v3378
  %v3414 = vunpack.c.h.b16 %v3378
  %v3415 = vunpack.c.l.b16 %v3379
  %v3416 = vunpack.c.h.b16 %v3379
  %v3417 = vunpack.c.l.b16 %v3380
  %v3418 = vunpack.c.h.b16 %v3380
  %v3419 = vunpack.c.l.b16 %v3381
  %v3420 = vunpack.c.h.b16 %v3381
  %v3421 = vunpack.c.l.b16 %v3382
  %v3422 = vunpack.c.h.b16 %v3382
  %v3423 = vunpack.c.l.b16 %v3383
  %v3424 = vunpack.c.h.b16 %v3383
  %v3425 = vunpack.c.l.b16 %v3384
  %v3426 = vunpack.c.h.b16 %v3384
  %v3427 = vunpack.c.l.b16 %v3385
  %v3428 = vunpack.c.h.b16 %v3385
  %v3429 = vunpack.c.l.b16 %v3386
  %v3430 = vunpack.c.h.b16 %v3386
  %v3431 = vunpack.c.l.b16 %v3387
  %v3432 = vunpack.c.h.b16 %v3387
  %v3433 = vunpack.c.l.b16 %v3388
  %v3434 = vunpack.c.h.b16 %v3388
  %v3435 = vunpack.c.l.b16 %v3389
  %v3436 = vunpack.c.h.b16 %v3389
  %v3437 = vunpack.c.l.b16 %v3390
  %v3438 = vunpack.c.h.b16 %v3390
  %v3439 = vpack.c.b16 %v3411, %v3407
  %v3440 = vpack.c.b16 %v3412, %v3408
  %v3441 = vpack.c.b16 %v3413, %v3409
  %v3442 = vpack.c.b16 %v3414, %v3410
  %v3443 = vpack.c.b16 %v3419, %v3415
  %v3444 = vpack.c.b16 %v3420, %v3416
  %v3445 = vpack.c.b16 %v3421, %v3417
  %v3446 = vpack.c.b16 %v3422, %v3418
  %v3447 = vpack.c.b16 %v3427, %v3423
  %v3448 = vpack.c.b16 %v3428, %v3424
  %v3449 = vpack.c.b16 %v3429, %v3425
  %v3450 = vpack.c.b16 %v3430, %v3426
  %v3451 = vpack.c.b16 %v3435, %v3431
  %v3452 = vpack.c.b16 %v3436, %v3432
  %v3453 = vpack.c.b16 %v3437, %v3433
  %v3454 = vpack.c.b16 %v3438, %v3434
  %v3472 = vsel %vm705, %v3374, 0
  %3474 = vmatprep.subr.bf16.mxu0 %v3440
  %3475 = vmatpush1.bf16.msra.mxu0 %v3439
  %3476 = vmatprep.subr.bf16.mxu0 %v3444
  %3477 = vmatpush1.bf16.msra.mxu0 %v3443
  %3478 = vmatprep.subr.bf16.mxu0 %v3448
  %3479 = vmatpush1.bf16.msra.mxu0 %v3447
  %3480 = vmatprep.subr.bf16.mxu0 %v3452
  %3481 = vmatpush1.bf16.msra.mxu0 %v3451
  %3482 = vmatprep.subr.bf16.mxu0 0
  %3483 = vmatpush1.bf16.msra.mxu0 0
  %3484 = vmatprep.subr.bf16.mxu0 0
  %3485 = vmatpush1.bf16.msra.mxu0 0
  %3486 = vmatprep.subr.bf16.mxu0 0
  %3487 = vmatpush1.bf16.msra.mxu0 0
  %3488 = vmatprep.subr.bf16.mxu0 0
  %3489 = vmatpush1.bf16.msra.mxu0 0
  %3490 = vmatprep.subr.bf16.mxu0 0
  %3491 = vmatpush1.bf16.msra.mxu0 0
  %3492 = vmatprep.subr.bf16.mxu0 0
  %3493 = vmatpush1.bf16.msra.mxu0 0
  %3494 = vmatprep.subr.bf16.mxu0 0
  %3495 = vmatpush1.bf16.msra.mxu0 0
  %3496 = vmatprep.subr.bf16.mxu0 0
  %3497 = vmatpush1.bf16.msra.mxu0 0
  %3498 = vmatprep.subr.bf16.mxu0 0
  %3499 = vmatpush1.bf16.msra.mxu0 0
  %3500 = vmatprep.subr.bf16.mxu0 0
  %3501 = vmatpush1.bf16.msra.mxu0 0
  %3502 = vmatprep.subr.bf16.mxu0 0
  %3503 = vmatpush1.bf16.msra.mxu0 0
  %3504 = vmatprep.subr.bf16.mxu0 0
  %3505 = vmatpush1.bf16.msra.mxu0 0
  %3506 = vmatprep.mubr.bf16.mxu0 0
  %3507 = vmatmul.mubr.bf16.gmra.mrb[0].mxu0 %v3472
  %v3508 = vpop.f32.mrb[0].mxu0
  %v3509 = vadd.f32 0.0, %v3508
  %v3510 = vpop.f32.mrb[0].mxu0
  %v3511 = vadd.f32 0.0, %v3510
  %v3512 = vpop.f32.mrb[0].mxu0
  %v3513 = vpop.f32.mrb[0].mxu0
  %3514 = vdwg.mxu0
  %3515 = vmatprep.subr.bf16.mxu0 %v3442
  %3516 = vmatpush1.bf16.msra.mxu0 %v3441
  %3517 = vmatprep.subr.bf16.mxu0 %v3446
  %3518 = vmatpush1.bf16.msra.mxu0 %v3445
  %3519 = vmatprep.subr.bf16.mxu0 %v3450
  %3520 = vmatpush1.bf16.msra.mxu0 %v3449
  %3521 = vmatprep.subr.bf16.mxu0 %v3454
  %3522 = vmatpush1.bf16.msra.mxu0 %v3453
  %3523 = vmatprep.subr.bf16.mxu0 0
  %3524 = vmatpush1.bf16.msra.mxu0 0
  %3525 = vmatprep.subr.bf16.mxu0 0
  %3526 = vmatpush1.bf16.msra.mxu0 0
  %3527 = vmatprep.subr.bf16.mxu0 0
  %3528 = vmatpush1.bf16.msra.mxu0 0
  %3529 = vmatprep.subr.bf16.mxu0 0
  %3530 = vmatpush1.bf16.msra.mxu0 0
  %3531 = vmatprep.subr.bf16.mxu0 0
  %3532 = vmatpush1.bf16.msra.mxu0 0
  %3533 = vmatprep.subr.bf16.mxu0 0
  %3534 = vmatpush1.bf16.msra.mxu0 0
  %3535 = vmatprep.subr.bf16.mxu0 0
  %3536 = vmatpush1.bf16.msra.mxu0 0
  %3537 = vmatprep.subr.bf16.mxu0 0
  %3538 = vmatpush1.bf16.msra.mxu0 0
  %3539 = vmatprep.subr.bf16.mxu0 0
  %3540 = vmatpush1.bf16.msra.mxu0 0
  %3541 = vmatprep.subr.bf16.mxu0 0
  %3542 = vmatpush1.bf16.msra.mxu0 0
  %3543 = vmatprep.subr.bf16.mxu0 0
  %3544 = vmatpush1.bf16.msra.mxu0 0
  %3545 = vmatprep.subr.bf16.mxu0 0
  %3546 = vmatpush1.bf16.msra.mxu0 0
  %3547 = vmatprep.mubr.bf16.mxu0 0
  %3548 = vmatmul.mubr.bf16.gmra.mrb[0].mxu0 %v3472
  %v3549 = vpop.f32.mrb[0].mxu0
  %v3550 = vadd.f32 0.0, %v3549
  %v3551 = vpop.f32.mrb[0].mxu0
  %v3552 = vadd.f32 0.0, %v3551
  %v3553 = vpop.f32.mrb[0].mxu0
  %v3554 = vpop.f32.mrb[0].mxu0
  %3555 = vdwg.mxu0
  %v3556 = vadd.f32 %v3370, %v3509
  %v3557 = vadd.f32 %v3371, %v3511
  %v3558 = vadd.f32 %v3372, %v3550
  %v3559 = vadd.f32 %v3373, %v3552
  %v3560 = vld [vmem:[%s4] sm:$0xf]
  %v3562 = vlaneseq
  %v3563 = vshrl.u32 %v3562, 7
  %v3564 = vsub.s32 0, %v3563
  %v3565 = vrot.slane %v3560, %v3564
  %v3566 = vlaneseq
  %v3567 = vshrl.u32 %v3566, 7
  %v3568 = vsub.s32 1, %v3567
  %v3569 = vrot.slane %v3560, %v3568
  %v3570 = vlaneseq
  %v3571 = vshrl.u32 %v3570, 7
  %v3572 = vsub.s32 2, %v3571
  %v3573 = vrot.slane %v3560, %v3572
  %v3574 = vlaneseq
  %v3575 = vshrl.u32 %v3574, 7
  %v3576 = vsub.s32 3, %v3575
  %v3577 = vrot.slane %v3560, %v3576
  %v3582 = vadd.f32 %v3556, %v3565
  %v3583 = vadd.f32 %v3557, %v3569
  %v3584 = vadd.f32 %v3558, %v3573
  %v3585 = vadd.f32 %v3559, %v3577
  %v3586 = vmax.f32 %v3582, 0.0
  %v3587 = vmax.f32 %v3583, 0.0
  %v3588 = vmax.f32 %v3584, 0.0
  %v3589 = vmax.f32 %v3585, 0.0
  %v3590 = vpack.c.bf16 %v3586, %v3586
  %v3591 = vpack.c.bf16 %v3587, %v3587
  %v3592 = vpack.c.bf16 %v3588, %v3588
  %v3593 = vpack.c.bf16 %v3589, %v3589
  %v3594 = vld [vmem:[%s5] sm:$0xff]
  %v3595 = vld [vmem:[%s5 + $0x8] sm:$0xff]
  %v3596 = vld [vmem:[%s5 + $0x10] sm:$0xff]
  %v3597 = vld [vmem:[%s5 + $0x18] sm:$0xff]
  %v3598 = vld [vmem:[%s5 + $0x20] sm:$0xff]
  %v3599 = vld [vmem:[%s5 + $0x28] sm:$0xff]
  %v3600 = vld [vmem:[%s5 + $0x30] sm:$0xff]
  %v3601 = vld [vmem:[%s5 + $0x38] sm:$0xff]
  %v3602 = vld [vmem:[%s5 + $0x40] sm:$0xff]
  %v3603 = vld [vmem:[%s5 + $0x48] sm:$0xff]
  %v3604 = vld [vmem:[%s5 + $0x50] sm:$0xff]
  %v3605 = vld [vmem:[%s5 + $0x58] sm:$0xff]
  %v3606 = vld [vmem:[%s5 + $0x60] sm:$0xff]
  %v3607 = vld [vmem:[%s5 + $0x68] sm:$0xff]
  %v3608 = vld [vmem:[%s5 + $0x70] sm:$0xff]
  %v3609 = vld [vmem:[%s5 + $0x78] sm:$0xff]
  %v3610 = vld [vmem:[%s5 + $0x80] sm:$0xff]
  %v3611 = vld [vmem:[%s5 + $0x88] sm:$0xff]
  %v3612 = vld [vmem:[%s5 + $0x90] sm:$0xff]
  %v3613 = vld [vmem:[%s5 + $0x98] sm:$0xff]
  %v3614 = vld [vmem:[%s5 + $0xa0] sm:$0xff]
  %v3615 = vld [vmem:[%s5 + $0xa8] sm:$0xff]
  %v3616 = vld [vmem:[%s5 + $0xb0] sm:$0xff]
  %v3617 = vld [vmem:[%s5 + $0xb8] sm:$0xff]
  %v3618 = vld [vmem:[%s5 + $0xc0] sm:$0xff]
  %v3619 = vld [vmem:[%s5 + $0xc8] sm:$0xff]
  %v3620 = vld [vmem:[%s5 + $0xd0] sm:$0xff]
  %v3621 = vld [vmem:[%s5 + $0xd8] sm:$0xff]
  %v3622 = vld [vmem:[%s5 + $0xe0] sm:$0xff]
  %v3623 = vld [vmem:[%s5 + $0xe8] sm:$0xff]
  %v3624 = vld [vmem:[%s5 + $0xf0] sm:$0xff]
  %v3625 = vld [vmem:[%s5 + $0xf8] sm:$0xff]
  %v3626 = vld [vmem:[%s5 + $0x100] sm:$0xff]
  %v3627 = vld [vmem:[%s5 + $0x108] sm:$0xff]
  %v3628 = vld [vmem:[%s5 + $0x110] sm:$0xff]
  %v3629 = vld [vmem:[%s5 + $0x118] sm:$0xff]
  %v3630 = vld [vmem:[%s5 + $0x120] sm:$0xff]
  %v3631 = vld [vmem:[%s5 + $0x128] sm:$0xff]
  %v3632 = vld [vmem:[%s5 + $0x130] sm:$0xff]
  %v3633 = vld [vmem:[%s5 + $0x138] sm:$0xff]
  %v3634 = vld [vmem:[%s5 + $0x140] sm:$0xff]
  %v3635 = vld [vmem:[%s5 + $0x148] sm:$0xff]
  %v3636 = vld [vmem:[%s5 + $0x150] sm:$0xff]
  %v3637 = vld [vmem:[%s5 + $0x158] sm:$0xff]
  %v3638 = vld [vmem:[%s5 + $0x160] sm:$0xff]
  %v3639 = vld [vmem:[%s5 + $0x168] sm:$0xff]
  %v3640 = vld [vmem:[%s5 + $0x170] sm:$0xff]
  %v3641 = vld [vmem:[%s5 + $0x178] sm:$0xff]
  %v3642 = vld [vmem:[%s5 + $0x180] sm:$0xff]
  %v3643 = vld [vmem:[%s5 + $0x188] sm:$0xff]
  %v3644 = vld [vmem:[%s5 + $0x190] sm:$0xff]
  %v3645 = vld [vmem:[%s5 + $0x198] sm:$0xff]
  %v3646 = vld [vmem:[%s5 + $0x1a0] sm:$0xff]
  %v3647 = vld [vmem:[%s5 + $0x1a8] sm:$0xff]
  %v3648 = vld [vmem:[%s5 + $0x1b0] sm:$0xff]
  %v3649 = vld [vmem:[%s5 + $0x1b8] sm:$0xff]
  %v3650 = vld [vmem:[%s5 + $0x1c0] sm:$0xff]
  %v3651 = vld [vmem:[%s5 + $0x1c8] sm:$0xff]
  %v3652 = vld [vmem:[%s5 + $0x1d0] sm:$0xff]
  %v3653 = vld [vmem:[%s5 + $0x1d8] sm:$0xff]
  %v3654 = vld [vmem:[%s5 + $0x1e0] sm:$0xff]
  %v3655 = vld [vmem:[%s5 + $0x1e8] sm:$0xff]
  %v3656 = vld [vmem:[%s5 + $0x1f0] sm:$0xff]
  %v3657 = vld [vmem:[%s5 + $0x1f8] sm:$0xff]
  %v3658 = vld [vmem:[%s6] sm:$0x3]
  %v3660 = vlaneseq
  %v3661 = vshrl.u32 %v3660, 7
  %v3662 = vsub.s32 0, %v3661
  %v3663 = vrot.slane %v3658, %v3662
  %v3664 = vlaneseq
  %v3665 = vshrl.u32 %v3664, 7
  %v3666 = vsub.s32 1, %v3665
  %v3667 = vrot.slane %v3658, %v3666
  %v3734 = vunpack.c.l.b16 %v3594
  %v3735 = vunpack.c.h.b16 %v3594
  %v3736 = vunpack.c.l.b16 %v3595
  %v3737 = vunpack.c.h.b16 %v3595
  %v3738 = vunpack.c.l.b16 %v3596
  %v3739 = vunpack.c.h.b16 %v3596
  %v3740 = vunpack.c.l.b16 %v3597
  %v3741 = vunpack.c.h.b16 %v3597
  %v3742 = vunpack.c.l.b16 %v3598
  %v3743 = vunpack.c.h.b16 %v3598
  %v3744 = vunpack.c.l.b16 %v3599
  %v3745 = vunpack.c.h.b16 %v3599
  %v3746 = vunpack.c.l.b16 %v3600
  %v3747 = vunpack.c.h.b16 %v3600
  %v3748 = vunpack.c.l.b16 %v3601
  %v3749 = vunpack.c.h.b16 %v3601
  %v3750 = vunpack.c.l.b16 %v3602
  %v3751 = vunpack.c.h.b16 %v3602
  %v3752 = vunpack.c.l.b16 %v3603
  %v3753 = vunpack.c.h.b16 %v3603
  %v3754 = vunpack.c.l.b16 %v3604
  %v3755 = vunpack.c.h.b16 %v3604
  %v3756 = vunpack.c.l.b16 %v3605
  %v3757 = vunpack.c.h.b16 %v3605
  %v3758 = vunpack.c.l.b16 %v3606
  %v3759 = vunpack.c.h.b16 %v3606
  %v3760 = vunpack.c.l.b16 %v3607
  %v3761 = vunpack.c.h.b16 %v3607
  %v3762 = vunpack.c.l.b16 %v3608
  %v3763 = vunpack.c.h.b16 %v3608
  %v3764 = vunpack.c.l.b16 %v3609
  %v3765 = vunpack.c.h.b16 %v3609
  %v3766 = vunpack.c.l.b16 %v3610
  %v3767 = vunpack.c.h.b16 %v3610
  %v3768 = vunpack.c.l.b16 %v3611
  %v3769 = vunpack.c.h.b16 %v3611
  %v3770 = vunpack.c.l.b16 %v3612
  %v3771 = vunpack.c.h.b16 %v3612
  %v3772 = vunpack.c.l.b16 %v3613
  %v3773 = vunpack.c.h.b16 %v3613
  %v3774 = vunpack.c.l.b16 %v3614
  %v3775 = vunpack.c.h.b16 %v3614
  %v3776 = vunpack.c.l.b16 %v3615
  %v3777 = vunpack.c.h.b16 %v3615
  %v3778 = vunpack.c.l.b16 %v3616
  %v3779 = vunpack.c.h.b16 %v3616
  %v3780 = vunpack.c.l.b16 %v3617
  %v3781 = vunpack.c.h.b16 %v3617
  %v3782 = vunpack.c.l.b16 %v3618
  %v3783 = vunpack.c.h.b16 %v3618
  %v3784 = vunpack.c.l.b16 %v3619
  %v3785 = vunpack.c.h.b16 %v3619
  %v3786 = vunpack.c.l.b16 %v3620
  %v3787 = vunpack.c.h.b16 %v3620
  %v3788 = vunpack.c.l.b16 %v3621
  %v3789 = vunpack.c.h.b16 %v3621
  %v3790 = vunpack.c.l.b16 %v3622
  %v3791 = vunpack.c.h.b16 %v3622
  %v3792 = vunpack.c.l.b16 %v3623
  %v3793 = vunpack.c.h.b16 %v3623
  %v3794 = vunpack.c.l.b16 %v3624
  %v3795 = vunpack.c.h.b16 %v3624
  %v3796 = vunpack.c.l.b16 %v3625
  %v3797 = vunpack.c.h.b16 %v3625
  %v3798 = vunpack.c.l.b16 %v3626
  %v3799 = vunpack.c.h.b16 %v3626
  %v3800 = vunpack.c.l.b16 %v3627
  %v3801 = vunpack.c.h.b16 %v3627
  %v3802 = vunpack.c.l.b16 %v3628
  %v3803 = vunpack.c.h.b16 %v3628
  %v3804 = vunpack.c.l.b16 %v3629
  %v3805 = vunpack.c.h.b16 %v3629
  %v3806 = vunpack.c.l.b16 %v3630
  %v3807 = vunpack.c.h.b16 %v3630
  %v3808 = vunpack.c.l.b16 %v3631
  %v3809 = vunpack.c.h.b16 %v3631
  %v3810 = vunpack.c.l.b16 %v3632
  %v3811 = vunpack.c.h.b16 %v3632
  %v3812 = vunpack.c.l.b16 %v3633
  %v3813 = vunpack.c.h.b16 %v3633
  %v3814 = vunpack.c.l.b16 %v3634
  %v3815 = vunpack.c.h.b16 %v3634
  %v3816 = vunpack.c.l.b16 %v3635
  %v3817 = vunpack.c.h.b16 %v3635
  %v3818 = vunpack.c.l.b16 %v3636
  %v3819 = vunpack.c.h.b16 %v3636
  %v3820 = vunpack.c.l.b16 %v3637
  %v3821 = vunpack.c.h.b16 %v3637
  %v3822 = vunpack.c.l.b16 %v3638
  %v3823 = vunpack.c.h.b16 %v3638
  %v3824 = vunpack.c.l.b16 %v3639
  %v3825 = vunpack.c.h.b16 %v3639
  %v3826 = vunpack.c.l.b16 %v3640
  %v3827 = vunpack.c.h.b16 %v3640
  %v3828 = vunpack.c.l.b16 %v3641
  %v3829 = vunpack.c.h.b16 %v3641
  %v3830 = vunpack.c.l.b16 %v3642
  %v3831 = vunpack.c.h.b16 %v3642
  %v3832 = vunpack.c.l.b16 %v3643
  %v3833 = vunpack.c.h.b16 %v3643
  %v3834 = vunpack.c.l.b16 %v3644
  %v3835 = vunpack.c.h.b16 %v3644
  %v3836 = vunpack.c.l.b16 %v3645
  %v3837 = vunpack.c.h.b16 %v3645
  %v3838 = vunpack.c.l.b16 %v3646
  %v3839 = vunpack.c.h.b16 %v3646
  %v3840 = vunpack.c.l.b16 %v3647
  %v3841 = vunpack.c.h.b16 %v3647
  %v3842 = vunpack.c.l.b16 %v3648
  %v3843 = vunpack.c.h.b16 %v3648
  %v3844 = vunpack.c.l.b16 %v3649
  %v3845 = vunpack.c.h.b16 %v3649
  %v3846 = vunpack.c.l.b16 %v3650
  %v3847 = vunpack.c.h.b16 %v3650
  %v3848 = vunpack.c.l.b16 %v3651
  %v3849 = vunpack.c.h.b16 %v3651
  %v3850 = vunpack.c.l.b16 %v3652
  %v3851 = vunpack.c.h.b16 %v3652
  %v3852 = vunpack.c.l.b16 %v3653
  %v3853 = vunpack.c.h.b16 %v3653
  %v3854 = vunpack.c.l.b16 %v3654
  %v3855 = vunpack.c.h.b16 %v3654
  %v3856 = vunpack.c.l.b16 %v3655
  %v3857 = vunpack.c.h.b16 %v3655
  %v3858 = vunpack.c.l.b16 %v3656
  %v3859 = vunpack.c.h.b16 %v3656
  %v3860 = vunpack.c.l.b16 %v3657
  %v3861 = vunpack.c.h.b16 %v3657
  %v3862 = vpack.c.b16 %v3736, %v3734
  %v3863 = vpack.c.b16 %v3737, %v3735
  %v3864 = vpack.c.b16 %v3740, %v3738
  %v3865 = vpack.c.b16 %v3741, %v3739
  %v3866 = vpack.c.b16 %v3744, %v3742
  %v3867 = vpack.c.b16 %v3745, %v3743
  %v3868 = vpack.c.b16 %v3748, %v3746
  %v3869 = vpack.c.b16 %v3749, %v3747
  %v3870 = vpack.c.b16 %v3752, %v3750
  %v3871 = vpack.c.b16 %v3753, %v3751
  %v3872 = vpack.c.b16 %v3756, %v3754
  %v3873 = vpack.c.b16 %v3757, %v3755
  %v3874 = vpack.c.b16 %v3760, %v3758
  %v3875 = vpack.c.b16 %v3761, %v3759
  %v3876 = vpack.c.b16 %v3764, %v3762
  %v3877 = vpack.c.b16 %v3765, %v3763
  %v3878 = vpack.c.b16 %v3768, %v3766
  %v3879 = vpack.c.b16 %v3769, %v3767
  %v3880 = vpack.c.b16 %v3772, %v3770
  %v3881 = vpack.c.b16 %v3773, %v3771
  %v3882 = vpack.c.b16 %v3776, %v3774
  %v3883 = vpack.c.b16 %v3777, %v3775
  %v3884 = vpack.c.b16 %v3780, %v3778
  %v3885 = vpack.c.b16 %v3781, %v3779
  %v3886 = vpack.c.b16 %v3784, %v3782
  %v3887 = vpack.c.b16 %v3785, %v3783
  %v3888 = vpack.c.b16 %v3788, %v3786
  %v3889 = vpack.c.b16 %v3789, %v3787
  %v3890 = vpack.c.b16 %v3792, %v3790
  %v3891 = vpack.c.b16 %v3793, %v3791
  %v3892 = vpack.c.b16 %v3796, %v3794
  %v3893 = vpack.c.b16 %v3797, %v3795
  %v3894 = vpack.c.b16 %v3800, %v3798
  %v3895 = vpack.c.b16 %v3801, %v3799
  %v3896 = vpack.c.b16 %v3804, %v3802
  %v3897 = vpack.c.b16 %v3805, %v3803
  %v3898 = vpack.c.b16 %v3808, %v3806
  %v3899 = vpack.c.b16 %v3809, %v3807
  %v3900 = vpack.c.b16 %v3812, %v3810
  %v3901 = vpack.c.b16 %v3813, %v3811
  %v3902 = vpack.c.b16 %v3816, %v3814
  %v3903 = vpack.c.b16 %v3817, %v3815
  %v3904 = vpack.c.b16 %v3820, %v3818
  %v3905 = vpack.c.b16 %v3821, %v3819
  %v3906 = vpack.c.b16 %v3824, %v3822
  %v3907 = vpack.c.b16 %v3825, %v3823
  %v3908 = vpack.c.b16 %v3828, %v3826
  %v3909 = vpack.c.b16 %v3829, %v3827
  %v3910 = vpack.c.b16 %v3832, %v3830
  %v3911 = vpack.c.b16 %v3833, %v3831
  %v3912 = vpack.c.b16 %v3836, %v3834
  %v3913 = vpack.c.b16 %v3837, %v3835
  %v3914 = vpack.c.b16 %v3840, %v3838
  %v3915 = vpack.c.b16 %v3841, %v3839
  %v3916 = vpack.c.b16 %v3844, %v3842
  %v3917 = vpack.c.b16 %v3845, %v3843
  %v3918 = vpack.c.b16 %v3848, %v3846
  %v3919 = vpack.c.b16 %v3849, %v3847
  %v3920 = vpack.c.b16 %v3852, %v3850
  %v3921 = vpack.c.b16 %v3853, %v3851
  %v3922 = vpack.c.b16 %v3856, %v3854
  %v3923 = vpack.c.b16 %v3857, %v3855
  %v3924 = vpack.c.b16 %v3860, %v3858
  %v3925 = vpack.c.b16 %v3861, %v3859
  %3990 = vmatprep.subr.bf16.mxu0 %v3863
  %3991 = vmatpush1.bf16.msra.mxu0 %v3862
  %3992 = vmatprep.subr.bf16.mxu0 %v3865
  %3993 = vmatpush1.bf16.msra.mxu0 %v3864
  %3994 = vmatprep.subr.bf16.mxu0 %v3867
  %3995 = vmatpush1.bf16.msra.mxu0 %v3866
  %3996 = vmatprep.subr.bf16.mxu0 %v3869
  %3997 = vmatpush1.bf16.msra.mxu0 %v3868
  %3998 = vmatprep.subr.bf16.mxu0 %v3871
  %3999 = vmatpush1.bf16.msra.mxu0 %v3870
  %4000 = vmatprep.subr.bf16.mxu0 %v3873
  %4001 = vmatpush1.bf16.msra.mxu0 %v3872
  %4002 = vmatprep.subr.bf16.mxu0 %v3875
  %4003 = vmatpush1.bf16.msra.mxu0 %v3874
  %4004 = vmatprep.subr.bf16.mxu0 %v3877
  %4005 = vmatpush1.bf16.msra.mxu0 %v3876
  %4006 = vmatprep.subr.bf16.mxu0 %v3879
  %4007 = vmatpush1.bf16.msra.mxu0 %v3878
  %4008 = vmatprep.subr.bf16.mxu0 %v3881
  %4009 = vmatpush1.bf16.msra.mxu0 %v3880
  %4010 = vmatprep.subr.bf16.mxu0 %v3883
  %4011 = vmatpush1.bf16.msra.mxu0 %v3882
  %4012 = vmatprep.subr.bf16.mxu0 %v3885
  %4013 = vmatpush1.bf16.msra.mxu0 %v3884
  %4014 = vmatprep.subr.bf16.mxu0 %v3887
  %4015 = vmatpush1.bf16.msra.mxu0 %v3886
  %4016 = vmatprep.subr.bf16.mxu0 %v3889
  %4017 = vmatpush1.bf16.msra.mxu0 %v3888
  %4018 = vmatprep.subr.bf16.mxu0 %v3891
  %4019 = vmatpush1.bf16.msra.mxu0 %v3890
  %4020 = vmatprep.subr.bf16.mxu0 %v3893
  %4021 = vmatpush1.bf16.msra.mxu0 %v3892
  %4022 = vmatprep.mubr.bf16.mxu0 %v3591
  %4023 = vmatmul.mubr.bf16.gmra.mrb[0].mxu0 %v3590
  %v4024 = vpop.f32.mrb[0].mxu0
  %v4025 = vadd.f32 %v3663, %v4024
  %v4026 = vpop.f32.mrb[0].mxu0
  %v4027 = vadd.f32 %v3667, %v4026
  %v4028 = vpop.f32.mrb[0].mxu0
  %v4029 = vpop.f32.mrb[0].mxu0
  %4030 = vdwg.mxu0
  %4031 = vmatprep.subr.bf16.mxu0 %v3895
  %4032 = vmatpush1.bf16.msra.mxu0 %v3894
  %4033 = vmatprep.subr.bf16.mxu0 %v3897
  %4034 = vmatpush1.bf16.msra.mxu0 %v3896
  %4035 = vmatprep.subr.bf16.mxu0 %v3899
  %4036 = vmatpush1.bf16.msra.mxu0 %v3898
  %4037 = vmatprep.subr.bf16.mxu0 %v3901
  %4038 = vmatpush1.bf16.msra.mxu0 %v3900
  %4039 = vmatprep.subr.bf16.mxu0 %v3903
  %4040 = vmatpush1.bf16.msra.mxu0 %v3902
  %4041 = vmatprep.subr.bf16.mxu0 %v3905
  %4042 = vmatpush1.bf16.msra.mxu0 %v3904
  %4043 = vmatprep.subr.bf16.mxu0 %v3907
  %4044 = vmatpush1.bf16.msra.mxu0 %v3906
  %4045 = vmatprep.subr.bf16.mxu0 %v3909
  %4046 = vmatpush1.bf16.msra.mxu0 %v3908
  %4047 = vmatprep.subr.bf16.mxu0 %v3911
  %4048 = vmatpush1.bf16.msra.mxu0 %v3910
  %4049 = vmatprep.subr.bf16.mxu0 %v3913
  %4050 = vmatpush1.bf16.msra.mxu0 %v3912
  %4051 = vmatprep.subr.bf16.mxu0 %v3915
  %4052 = vmatpush1.bf16.msra.mxu0 %v3914
  %4053 = vmatprep.subr.bf16.mxu0 %v3917
  %4054 = vmatpush1.bf16.msra.mxu0 %v3916
  %4055 = vmatprep.subr.bf16.mxu0 %v3919
  %4056 = vmatpush1.bf16.msra.mxu0 %v3918
  %4057 = vmatprep.subr.bf16.mxu0 %v3921
  %4058 = vmatpush1.bf16.msra.mxu0 %v3920
  %4059 = vmatprep.subr.bf16.mxu0 %v3923
  %4060 = vmatpush1.bf16.msra.mxu0 %v3922
  %4061 = vmatprep.subr.bf16.mxu0 %v3925
  %4062 = vmatpush1.bf16.msra.mxu0 %v3924
  %4063 = vmatprep.mubr.bf16.mxu0 %v3593
  %4064 = vmatmul.mubr.bf16.gmra.mrb[0].mxu0 %v3592
  %v4065 = vpop.f32.mrb[0].mxu0
  %v4066 = vadd.f32 %v4025, %v4065
  %v4067 = vpop.f32.mrb[0].mxu0
  %v4068 = vadd.f32 %v4027, %v4067
  %v4069 = vpop.f32.mrb[0].mxu0
  %v4070 = vpop.f32.mrb[0].mxu0
  %4071 = vdwg.mxu0
  %v4072 = vmax.f32 %v4066, 0.0
  %v4073 = vmax.f32 %v4068, 0.0
  %v4074 = vpack.c.bf16 %v4072, %v4072
  %v4075 = vpack.c.bf16 %v4073, %v4073
  %v4076 = vld [vmem:[%s7] sm:$0xff]
  %v4077 = vld [vmem:[%s7 + $0x8] sm:$0xff]
  %v4078 = vld [vmem:[%s7 + $0x10] sm:$0xff]
  %v4079 = vld [vmem:[%s7 + $0x18] sm:$0xff]
  %v4080 = vld [vmem:[%s7 + $0x20] sm:$0xff]
  %v4081 = vld [vmem:[%s7 + $0x28] sm:$0xff]
  %v4082 = vld [vmem:[%s7 + $0x30] sm:$0xff]
  %v4083 = vld [vmem:[%s7 + $0x38] sm:$0xff]
  %v4084 = vld [vmem:[%s7 + $0x40] sm:$0xff]
  %v4085 = vld [vmem:[%s7 + $0x48] sm:$0xff]
  %v4086 = vld [vmem:[%s7 + $0x50] sm:$0xff]
  %v4087 = vld [vmem:[%s7 + $0x58] sm:$0xff]
  %v4088 = vld [vmem:[%s7 + $0x60] sm:$0xff]
  %v4089 = vld [vmem:[%s7 + $0x68] sm:$0xff]
  %v4090 = vld [vmem:[%s7 + $0x70] sm:$0xff]
  %v4091 = vld [vmem:[%s7 + $0x78] sm:$0xff]
  %v4092 = vld [vmem:[%s7 + $0x80] sm:$0xff]
  %v4093 = vld [vmem:[%s7 + $0x88] sm:$0xff]
  %v4094 = vld [vmem:[%s7 + $0x90] sm:$0xff]
  %v4095 = vld [vmem:[%s7 + $0x98] sm:$0xff]
  %v4096 = vld [vmem:[%s7 + $0xa0] sm:$0xff]
  %v4097 = vld [vmem:[%s7 + $0xa8] sm:$0xff]
  %v4098 = vld [vmem:[%s7 + $0xb0] sm:$0xff]
  %v4099 = vld [vmem:[%s7 + $0xb8] sm:$0xff]
  %v4100 = vld [vmem:[%s7 + $0xc0] sm:$0xff]
  %v4101 = vld [vmem:[%s7 + $0xc8] sm:$0xff]
  %v4102 = vld [vmem:[%s7 + $0xd0] sm:$0xff]
  %v4103 = vld [vmem:[%s7 + $0xd8] sm:$0xff]
  %v4104 = vld [vmem:[%s7 + $0xe0] sm:$0xff]
  %v4105 = vld [vmem:[%s7 + $0xe8] sm:$0xff]
  %v4106 = vld [vmem:[%s7 + $0xf0] sm:$0xff]
  %v4107 = vld [vmem:[%s7 + $0xf8] sm:$0xff]
  %v4108 = vld [vmem:[%s8] sm:$0x3]
  %v4110 = vlaneseq
  %v4111 = vshrl.u32 %v4110, 7
  %v4112 = vsub.s32 0, %v4111
  %v4113 = vrot.slane %v4108, %v4112
  %v4114 = vlaneseq
  %v4115 = vshrl.u32 %v4114, 7
  %v4116 = vsub.s32 1, %v4115
  %v4117 = vrot.slane %v4108, %v4116
  %v4152 = vunpack.c.l.b16 %v4076
  %v4153 = vunpack.c.h.b16 %v4076
  %v4154 = vunpack.c.l.b16 %v4077
  %v4155 = vunpack.c.h.b16 %v4077
  %v4156 = vunpack.c.l.b16 %v4078
  %v4157 = vunpack.c.h.b16 %v4078
  %v4158 = vunpack.c.l.b16 %v4079
  %v4159 = vunpack.c.h.b16 %v4079
  %v4160 = vunpack.c.l.b16 %v4080
  %v4161 = vunpack.c.h.b16 %v4080
  %v4162 = vunpack.c.l.b16 %v4081
  %v4163 = vunpack.c.h.b16 %v4081
  %v4164 = vunpack.c.l.b16 %v4082
  %v4165 = vunpack.c.h.b16 %v4082
  %v4166 = vunpack.c.l.b16 %v4083
  %v4167 = vunpack.c.h.b16 %v4083
  %v4168 = vunpack.c.l.b16 %v4084
  %v4169 = vunpack.c.h.b16 %v4084
  %v4170 = vunpack.c.l.b16 %v4085
  %v4171 = vunpack.c.h.b16 %v4085
  %v4172 = vunpack.c.l.b16 %v4086
  %v4173 = vunpack.c.h.b16 %v4086
  %v4174 = vunpack.c.l.b16 %v4087
  %v4175 = vunpack.c.h.b16 %v4087
  %v4176 = vunpack.c.l.b16 %v4088
  %v4177 = vunpack.c.h.b16 %v4088
  %v4178 = vunpack.c.l.b16 %v4089
  %v4179 = vunpack.c.h.b16 %v4089
  %v4180 = vunpack.c.l.b16 %v4090
  %v4181 = vunpack.c.h.b16 %v4090
  %v4182 = vunpack.c.l.b16 %v4091
  %v4183 = vunpack.c.h.b16 %v4091
  %v4184 = vunpack.c.l.b16 %v4092
  %v4185 = vunpack.c.h.b16 %v4092
  %v4186 = vunpack.c.l.b16 %v4093
  %v4187 = vunpack.c.h.b16 %v4093
  %v4188 = vunpack.c.l.b16 %v4094
  %v4189 = vunpack.c.h.b16 %v4094
  %v4190 = vunpack.c.l.b16 %v4095
  %v4191 = vunpack.c.h.b16 %v4095
  %v4192 = vunpack.c.l.b16 %v4096
  %v4193 = vunpack.c.h.b16 %v4096
  %v4194 = vunpack.c.l.b16 %v4097
  %v4195 = vunpack.c.h.b16 %v4097
  %v4196 = vunpack.c.l.b16 %v4098
  %v4197 = vunpack.c.h.b16 %v4098
  %v4198 = vunpack.c.l.b16 %v4099
  %v4199 = vunpack.c.h.b16 %v4099
  %v4200 = vunpack.c.l.b16 %v4100
  %v4201 = vunpack.c.h.b16 %v4100
  %v4202 = vunpack.c.l.b16 %v4101
  %v4203 = vunpack.c.h.b16 %v4101
  %v4204 = vunpack.c.l.b16 %v4102
  %v4205 = vunpack.c.h.b16 %v4102
  %v4206 = vunpack.c.l.b16 %v4103
  %v4207 = vunpack.c.h.b16 %v4103
  %v4208 = vunpack.c.l.b16 %v4104
  %v4209 = vunpack.c.h.b16 %v4104
  %v4210 = vunpack.c.l.b16 %v4105
  %v4211 = vunpack.c.h.b16 %v4105
  %v4212 = vunpack.c.l.b16 %v4106
  %v4213 = vunpack.c.h.b16 %v4106
  %v4214 = vunpack.c.l.b16 %v4107
  %v4215 = vunpack.c.h.b16 %v4107
  %v4216 = vpack.c.b16 %v4154, %v4152
  %v4217 = vpack.c.b16 %v4155, %v4153
  %v4218 = vpack.c.b16 %v4158, %v4156
  %v4219 = vpack.c.b16 %v4159, %v4157
  %v4220 = vpack.c.b16 %v4162, %v4160
  %v4221 = vpack.c.b16 %v4163, %v4161
  %v4222 = vpack.c.b16 %v4166, %v4164
  %v4223 = vpack.c.b16 %v4167, %v4165
  %v4224 = vpack.c.b16 %v4170, %v4168
  %v4225 = vpack.c.b16 %v4171, %v4169
  %v4226 = vpack.c.b16 %v4174, %v4172
  %v4227 = vpack.c.b16 %v4175, %v4173
  %v4228 = vpack.c.b16 %v4178, %v4176
  %v4229 = vpack.c.b16 %v4179, %v4177
  %v4230 = vpack.c.b16 %v4182, %v4180
  %v4231 = vpack.c.b16 %v4183, %v4181
  %v4232 = vpack.c.b16 %v4186, %v4184
  %v4233 = vpack.c.b16 %v4187, %v4185
  %v4234 = vpack.c.b16 %v4190, %v4188
  %v4235 = vpack.c.b16 %v4191, %v4189
  %v4236 = vpack.c.b16 %v4194, %v4192
  %v4237 = vpack.c.b16 %v4195, %v4193
  %v4238 = vpack.c.b16 %v4198, %v4196
  %v4239 = vpack.c.b16 %v4199, %v4197
  %v4240 = vpack.c.b16 %v4202, %v4200
  %v4241 = vpack.c.b16 %v4203, %v4201
  %v4242 = vpack.c.b16 %v4206, %v4204
  %v4243 = vpack.c.b16 %v4207, %v4205
  %v4244 = vpack.c.b16 %v4210, %v4208
  %v4245 = vpack.c.b16 %v4211, %v4209
  %v4246 = vpack.c.b16 %v4214, %v4212
  %v4247 = vpack.c.b16 %v4215, %v4213
  %4280 = vmatprep.subr.bf16.mxu0 %v4217
  %4281 = vmatpush1.bf16.msra.mxu0 %v4216
  %4282 = vmatprep.subr.bf16.mxu0 %v4219
  %4283 = vmatpush1.bf16.msra.mxu0 %v4218
  %4284 = vmatprep.subr.bf16.mxu0 %v4221
  %4285 = vmatpush1.bf16.msra.mxu0 %v4220
  %4286 = vmatprep.subr.bf16.mxu0 %v4223
  %4287 = vmatpush1.bf16.msra.mxu0 %v4222
  %4288 = vmatprep.subr.bf16.mxu0 %v4225
  %4289 = vmatpush1.bf16.msra.mxu0 %v4224
  %4290 = vmatprep.subr.bf16.mxu0 %v4227
  %4291 = vmatpush1.bf16.msra.mxu0 %v4226
  %4292 = vmatprep.subr.bf16.mxu0 %v4229
  %4293 = vmatpush1.bf16.msra.mxu0 %v4228
  %4294 = vmatprep.subr.bf16.mxu0 %v4231
  %4295 = vmatpush1.bf16.msra.mxu0 %v4230
  %4296 = vmatprep.subr.bf16.mxu0 %v4233
  %4297 = vmatpush1.bf16.msra.mxu0 %v4232
  %4298 = vmatprep.subr.bf16.mxu0 %v4235
  %4299 = vmatpush1.bf16.msra.mxu0 %v4234
  %4300 = vmatprep.subr.bf16.mxu0 %v4237
  %4301 = vmatpush1.bf16.msra.mxu0 %v4236
  %4302 = vmatprep.subr.bf16.mxu0 %v4239
  %4303 = vmatpush1.bf16.msra.mxu0 %v4238
  %4304 = vmatprep.subr.bf16.mxu0 %v4241
  %4305 = vmatpush1.bf16.msra.mxu0 %v4240
  %4306 = vmatprep.subr.bf16.mxu0 %v4243
  %4307 = vmatpush1.bf16.msra.mxu0 %v4242
  %4308 = vmatprep.subr.bf16.mxu0 %v4245
  %4309 = vmatpush1.bf16.msra.mxu0 %v4244
  %4310 = vmatprep.subr.bf16.mxu0 %v4247
  %4311 = vmatpush1.bf16.msra.mxu0 %v4246
  %4312 = vmatprep.mubr.bf16.mxu0 %v4075
  %4313 = vmatmul.mubr.bf16.gmra.mrb[0].mxu0 %v4074
  %v4314 = vpop.f32.mrb[0].mxu0
  %v4315 = vadd.f32 %v4113, %v4314
  %v4316 = vpop.f32.mrb[0].mxu0
  %v4317 = vadd.f32 %v4117, %v4316
  %v4318 = vpop.f32.mrb[0].mxu0
  %v4319 = vpop.f32.mrb[0].mxu0
  %4320 = vdwg.mxu0
  %v4321 = vmax.f32 %v4315, 0.0
  %v4322 = vmax.f32 %v4317, 0.0
  %v4323 = vpack.c.bf16 %v4321, %v4321
  %v4324 = vpack.c.bf16 %v4322, %v4322
  %v4325 = vld [vmem:[%s9] sm:$0xf]
  %v4326 = vld [vmem:[%s9 + $0x4] sm:$0xf]
  %v4327 = vld [vmem:[%s9 + $0x8] sm:$0xf]
  %v4328 = vld [vmem:[%s9 + $0xc] sm:$0xf]
  %v4329 = vld [vmem:[%s9 + $0x10] sm:$0xf]
  %v4330 = vld [vmem:[%s9 + $0x14] sm:$0xf]
  %v4331 = vld [vmem:[%s9 + $0x18] sm:$0xf]
  %v4332 = vld [vmem:[%s9 + $0x1c] sm:$0xf]
  %v4333 = vld [vmem:[%s9 + $0x20] sm:$0xf]
  %v4334 = vld [vmem:[%s9 + $0x24] sm:$0xf]
  %v4335 = vld [vmem:[%s9 + $0x28] sm:$0xf]
  %v4336 = vld [vmem:[%s9 + $0x2c] sm:$0xf]
  %v4337 = vld [vmem:[%s9 + $0x30] sm:$0xf]
  %v4338 = vld [vmem:[%s9 + $0x34] sm:$0xf]
  %v4339 = vld [vmem:[%s9 + $0x38] sm:$0xf]
  %v4340 = vld [vmem:[%s9 + $0x3c] sm:$0xf]
  %v4341 = vld [vmem:[%s9 + $0x40] sm:$0xf]
  %v4342 = vld [vmem:[%s9 + $0x44] sm:$0xf]
  %v4343 = vld [vmem:[%s9 + $0x48] sm:$0xf]
  %v4344 = vld [vmem:[%s9 + $0x4c] sm:$0xf]
  %v4345 = vld [vmem:[%s9 + $0x50] sm:$0xf]
  %v4346 = vld [vmem:[%s9 + $0x54] sm:$0xf]
  %v4347 = vld [vmem:[%s9 + $0x58] sm:$0xf]
  %v4348 = vld [vmem:[%s9 + $0x5c] sm:$0xf]
  %v4349 = vld [vmem:[%s9 + $0x60] sm:$0xf]
  %v4350 = vld [vmem:[%s9 + $0x64] sm:$0xf]
  %v4351 = vld [vmem:[%s9 + $0x68] sm:$0xf]
  %v4352 = vld [vmem:[%s9 + $0x6c] sm:$0xf]
  %v4353 = vld [vmem:[%s9 + $0x70] sm:$0xf]
  %v4354 = vld [vmem:[%s9 + $0x74] sm:$0xf]
  %v4355 = vld [vmem:[%s9 + $0x78] sm:$0xf]
  %v4356 = vld [vmem:[%s9 + $0x7c] sm:$0xf]
  %v4357 = vld [vmem:[%s10] sm:$0x1]
  %v4359 = vlaneseq
  %v4360 = vshrl.u32 %v4359, 7
  %v4361 = vsub.s32 0, %v4360
  %v4362 = vrot.slane %v4357, %v4361
  %v4396 = vunpack.c.l.b16 %v4325
  %v4397 = vunpack.c.l.b16 %v4326
  %v4398 = vunpack.c.l.b16 %v4327
  %v4399 = vunpack.c.l.b16 %v4328
  %v4400 = vunpack.c.l.b16 %v4329
  %v4401 = vunpack.c.l.b16 %v4330
  %v4402 = vunpack.c.l.b16 %v4331
  %v4403 = vunpack.c.l.b16 %v4332
  %v4404 = vunpack.c.l.b16 %v4333
  %v4405 = vunpack.c.l.b16 %v4334
  %v4406 = vunpack.c.l.b16 %v4335
  %v4407 = vunpack.c.l.b16 %v4336
  %v4408 = vunpack.c.l.b16 %v4337
  %v4409 = vunpack.c.l.b16 %v4338
  %v4410 = vunpack.c.l.b16 %v4339
  %v4411 = vunpack.c.l.b16 %v4340
  %v4412 = vunpack.c.l.b16 %v4341
  %v4413 = vunpack.c.l.b16 %v4342
  %v4414 = vunpack.c.l.b16 %v4343
  %v4415 = vunpack.c.l.b16 %v4344
  %v4416 = vunpack.c.l.b16 %v4345
  %v4417 = vunpack.c.l.b16 %v4346
  %v4418 = vunpack.c.l.b16 %v4347
  %v4419 = vunpack.c.l.b16 %v4348
  %v4420 = vunpack.c.l.b16 %v4349
  %v4421 = vunpack.c.l.b16 %v4350
  %v4422 = vunpack.c.l.b16 %v4351
  %v4423 = vunpack.c.l.b16 %v4352
  %v4424 = vunpack.c.l.b16 %v4353
  %v4425 = vunpack.c.l.b16 %v4354
  %v4426 = vunpack.c.l.b16 %v4355
  %v4427 = vunpack.c.l.b16 %v4356
  %v4428 = vpack.c.b16 %v4397, %v4396
  %v4429 = vpack.c.b16 %v4399, %v4398
  %v4430 = vpack.c.b16 %v4401, %v4400
  %v4431 = vpack.c.b16 %v4403, %v4402
  %v4432 = vpack.c.b16 %v4405, %v4404
  %v4433 = vpack.c.b16 %v4407, %v4406
  %v4434 = vpack.c.b16 %v4409, %v4408
  %v4435 = vpack.c.b16 %v4411, %v4410
  %v4436 = vpack.c.b16 %v4413, %v4412
  %v4437 = vpack.c.b16 %v4415, %v4414
  %v4438 = vpack.c.b16 %v4417, %v4416
  %v4439 = vpack.c.b16 %v4419, %v4418
  %v4440 = vpack.c.b16 %v4421, %v4420
  %v4441 = vpack.c.b16 %v4423, %v4422
  %v4442 = vpack.c.b16 %v4425, %v4424
  %v4443 = vpack.c.b16 %v4427, %v4426
  %4460 = vmatprep.subr.bf16.mxu0 0
  %4461 = vmatpush1.bf16.msra.mxu0 %v4428
  %4462 = vmatprep.subr.bf16.mxu0 0
  %4463 = vmatpush1.bf16.msra.mxu0 %v4429
  %4464 = vmatprep.subr.bf16.mxu0 0
  %4465 = vmatpush1.bf16.msra.mxu0 %v4430
  %4466 = vmatprep.subr.bf16.mxu0 0
  %4467 = vmatpush1.bf16.msra.mxu0 %v4431
  %4468 = vmatprep.subr.bf16.mxu0 0
  %4469 = vmatpush1.bf16.msra.mxu0 %v4432
  %4470 = vmatprep.subr.bf16.mxu0 0
  %4471 = vmatpush1.bf16.msra.mxu0 %v4433
  %4472 = vmatprep.subr.bf16.mxu0 0
  %4473 = vmatpush1.bf16.msra.mxu0 %v4434
  %4474 = vmatprep.subr.bf16.mxu0 0
  %4475 = vmatpush1.bf16.msra.mxu0 %v4435
  %4476 = vmatprep.subr.bf16.mxu0 0
  %4477 = vmatpush1.bf16.msra.mxu0 %v4436
  %4478 = vmatprep.subr.bf16.mxu0 0
  %4479 = vmatpush1.bf16.msra.mxu0 %v4437
  %4480 = vmatprep.subr.bf16.mxu0 0
  %4481 = vmatpush1.bf16.msra.mxu0 %v4438
  %4482 = vmatprep.subr.bf16.mxu0 0
  %4483 = vmatpush1.bf16.msra.mxu0 %v4439
  %4484 = vmatprep.subr.bf16.mxu0 0
  %4485 = vmatpush1.bf16.msra.mxu0 %v4440
  %4486 = vmatprep.subr.bf16.mxu0 0
  %4487 = vmatpush1.bf16.msra.mxu0 %v4441
  %4488 = vmatprep.subr.bf16.mxu0 0
  %4489 = vmatpush1.bf16.msra.mxu0 %v4442
  %4490 = vmatprep.subr.bf16.mxu0 0
  %4491 = vmatpush1.bf16.msra.mxu0 %v4443
  %4492 = vmatprep.mubr.bf16.mxu0 %v4324
  %4493 = vmatmul.mubr.bf16.gmra.mrb[0].mxu0 %v4323
  %v4494 = vpop.f32.mrb[0].mxu0
  %v4495 = vadd.f32 %v4362, %v4494
  %v4496 = vpop.f32.mrb[0].mxu0
  %v4497 = vpop.f32.mrb[0].mxu0
  %v4498 = vpop.f32.mrb[0].mxu0
  %4499 = vdwg.mxu0
  %v4500 = vmax.f32 %v4495, 0.0
  %v4501 = vld [vmem:[%s11] sm:$0xff]
  %v4502 = vld [vmem:[%s11 + $0x8] sm:$0xff]
  %v4503 = vld [vmem:[%s11 + $0x10] sm:$0xff]
  %v4504 = vld [vmem:[%s11 + $0x18] sm:$0xff]
  %v4505 = vld [vmem:[%s11 + $0x20] sm:$0xff]
  %v4506 = vld [vmem:[%s11 + $0x28] sm:$0xff]
  %v4507 = vld [vmem:[%s11 + $0x30] sm:$0xff]
  %v4508 = vld [vmem:[%s11 + $0x38] sm:$0xff]
  %v4509 = vld [vmem:[%s11 + $0x40] sm:$0xff]
  %v4510 = vld [vmem:[%s11 + $0x48] sm:$0xff]
  %v4511 = vld [vmem:[%s11 + $0x50] sm:$0xff]
  %v4512 = vld [vmem:[%s11 + $0x58] sm:$0xff]
  %v4513 = vld [vmem:[%s11 + $0x60] sm:$0xff]
  %v4514 = vld [vmem:[%s11 + $0x68] sm:$0xff]
  %v4515 = vld [vmem:[%s11 + $0x70] sm:$0xff]
  %v4516 = vld [vmem:[%s11 + $0x78] sm:$0xff]
  %v4517 = vld [vmem:[%s11 + $0x80] sm:$0xff]
  %v4518 = vld [vmem:[%s11 + $0x88] sm:$0xff]
  %v4519 = vld [vmem:[%s11 + $0x90] sm:$0xff]
  %v4520 = vld [vmem:[%s11 + $0x98] sm:$0xff]
  %v4521 = vld [vmem:[%s11 + $0xa0] sm:$0xff]
  %v4522 = vld [vmem:[%s11 + $0xa8] sm:$0xff]
  %v4523 = vld [vmem:[%s11 + $0xb0] sm:$0xff]
  %v4524 = vld [vmem:[%s11 + $0xb8] sm:$0xff]
  %v4525 = vld [vmem:[%s11 + $0xc0] sm:$0xff]
  %v4526 = vld [vmem:[%s11 + $0xc8] sm:$0xff]
  %v4527 = vld [vmem:[%s11 + $0xd0] sm:$0xff]
  %v4528 = vld [vmem:[%s11 + $0xd8] sm:$0xff]
  %v4529 = vld [vmem:[%s11 + $0xe0] sm:$0xff]
  %v4530 = vld [vmem:[%s11 + $0xe8] sm:$0xff]
  %v4531 = vld [vmem:[%s11 + $0xf0] sm:$0xff]
  %v4532 = vld [vmem:[%s11 + $0xf8] sm:$0xff]
  %v4533 = vld [vmem:[%s11 + $0x100] sm:$0xff]
  %v4534 = vld [vmem:[%s11 + $0x108] sm:$0xff]
  %v4535 = vld [vmem:[%s11 + $0x110] sm:$0xff]
  %v4536 = vld [vmem:[%s11 + $0x118] sm:$0xff]
  %v4537 = vld [vmem:[%s11 + $0x120] sm:$0xff]
  %v4538 = vld [vmem:[%s11 + $0x128] sm:$0xff]
  %v4539 = vld [vmem:[%s11 + $0x130] sm:$0xff]
  %v4540 = vld [vmem:[%s11 + $0x138] sm:$0xff]
  %v4541 = vld [vmem:[%s11 + $0x140] sm:$0xff]
  %v4542 = vld [vmem:[%s11 + $0x148] sm:$0xff]
  %v4543 = vld [vmem:[%s11 + $0x150] sm:$0xff]
  %v4544 = vld [vmem:[%s11 + $0x158] sm:$0xff]
  %v4545 = vld [vmem:[%s11 + $0x160] sm:$0xff]
  %v4546 = vld [vmem:[%s11 + $0x168] sm:$0xff]
  %v4547 = vld [vmem:[%s11 + $0x170] sm:$0xff]
  %v4548 = vld [vmem:[%s11 + $0x178] sm:$0xff]
  %v4549 = vld [vmem:[%s11 + $0x180] sm:$0xff]
  %v4550 = vld [vmem:[%s11 + $0x188] sm:$0xff]
  %v4551 = vld [vmem:[%s11 + $0x190] sm:$0xff]
  %v4552 = vld [vmem:[%s11 + $0x198] sm:$0xff]
  %v4553 = vld [vmem:[%s11 + $0x1a0] sm:$0xff]
  %v4554 = vld [vmem:[%s11 + $0x1a8] sm:$0xff]
  %v4555 = vld [vmem:[%s11 + $0x1b0] sm:$0xff]
  %v4556 = vld [vmem:[%s11 + $0x1b8] sm:$0xff]
  %v4557 = vld [vmem:[%s11 + $0x1c0] sm:$0xff]
  %v4558 = vld [vmem:[%s11 + $0x1c8] sm:$0xff]
  %v4559 = vld [vmem:[%s11 + $0x1d0] sm:$0xff]
  %v4560 = vld [vmem:[%s11 + $0x1d8] sm:$0xff]
  %v4561 = vld [vmem:[%s11 + $0x1e0] sm:$0xff]
  %v4562 = vld [vmem:[%s11 + $0x1e8] sm:$0xff]
  %v4563 = vld [vmem:[%s11 + $0x1f0] sm:$0xff]
  %v4564 = vld [vmem:[%s11 + $0x1f8] sm:$0xff]
  %v4565 = vld [vmem:[%s12] sm:$0x3]
  %v4567 = vlaneseq
  %v4568 = vshrl.u32 %v4567, 7
  %v4569 = vsub.s32 0, %v4568
  %v4570 = vrot.slane %v4565, %v4569
  %v4571 = vlaneseq
  %v4572 = vshrl.u32 %v4571, 7
  %v4573 = vsub.s32 1, %v4572
  %v4574 = vrot.slane %v4565, %v4573
  %v4641 = vunpack.c.l.b16 %v4501
  %v4642 = vunpack.c.h.b16 %v4501
  %v4643 = vunpack.c.l.b16 %v4502
  %v4644 = vunpack.c.h.b16 %v4502
  %v4645 = vunpack.c.l.b16 %v4503
  %v4646 = vunpack.c.h.b16 %v4503
  %v4647 = vunpack.c.l.b16 %v4504
  %v4648 = vunpack.c.h.b16 %v4504
  %v4649 = vunpack.c.l.b16 %v4505
  %v4650 = vunpack.c.h.b16 %v4505
  %v4651 = vunpack.c.l.b16 %v4506
  %v4652 = vunpack.c.h.b16 %v4506
  %v4653 = vunpack.c.l.b16 %v4507
  %v4654 = vunpack.c.h.b16 %v4507
  %v4655 = vunpack.c.l.b16 %v4508
  %v4656 = vunpack.c.h.b16 %v4508
  %v4657 = vunpack.c.l.b16 %v4509
  %v4658 = vunpack.c.h.b16 %v4509
  %v4659 = vunpack.c.l.b16 %v4510
  %v4660 = vunpack.c.h.b16 %v4510
  %v4661 = vunpack.c.l.b16 %v4511
  %v4662 = vunpack.c.h.b16 %v4511
  %v4663 = vunpack.c.l.b16 %v4512
  %v4664 = vunpack.c.h.b16 %v4512
  %v4665 = vunpack.c.l.b16 %v4513
  %v4666 = vunpack.c.h.b16 %v4513
  %v4667 = vunpack.c.l.b16 %v4514
  %v4668 = vunpack.c.h.b16 %v4514
  %v4669 = vunpack.c.l.b16 %v4515
  %v4670 = vunpack.c.h.b16 %v4515
  %v4671 = vunpack.c.l.b16 %v4516
  %v4672 = vunpack.c.h.b16 %v4516
  %v4673 = vunpack.c.l.b16 %v4517
  %v4674 = vunpack.c.h.b16 %v4517
  %v4675 = vunpack.c.l.b16 %v4518
  %v4676 = vunpack.c.h.b16 %v4518
  %v4677 = vunpack.c.l.b16 %v4519
  %v4678 = vunpack.c.h.b16 %v4519
  %v4679 = vunpack.c.l.b16 %v4520
  %v4680 = vunpack.c.h.b16 %v4520
  %v4681 = vunpack.c.l.b16 %v4521
  %v4682 = vunpack.c.h.b16 %v4521
  %v4683 = vunpack.c.l.b16 %v4522
  %v4684 = vunpack.c.h.b16 %v4522
  %v4685 = vunpack.c.l.b16 %v4523
  %v4686 = vunpack.c.h.b16 %v4523
  %v4687 = vunpack.c.l.b16 %v4524
  %v4688 = vunpack.c.h.b16 %v4524
  %v4689 = vunpack.c.l.b16 %v4525
  %v4690 = vunpack.c.h.b16 %v4525
  %v4691 = vunpack.c.l.b16 %v4526
  %v4692 = vunpack.c.h.b16 %v4526
  %v4693 = vunpack.c.l.b16 %v4527
  %v4694 = vunpack.c.h.b16 %v4527
  %v4695 = vunpack.c.l.b16 %v4528
  %v4696 = vunpack.c.h.b16 %v4528
  %v4697 = vunpack.c.l.b16 %v4529
  %v4698 = vunpack.c.h.b16 %v4529
  %v4699 = vunpack.c.l.b16 %v4530
  %v4700 = vunpack.c.h.b16 %v4530
  %v4701 = vunpack.c.l.b16 %v4531
  %v4702 = vunpack.c.h.b16 %v4531
  %v4703 = vunpack.c.l.b16 %v4532
  %v4704 = vunpack.c.h.b16 %v4532
  %v4705 = vunpack.c.l.b16 %v4533
  %v4706 = vunpack.c.h.b16 %v4533
  %v4707 = vunpack.c.l.b16 %v4534
  %v4708 = vunpack.c.h.b16 %v4534
  %v4709 = vunpack.c.l.b16 %v4535
  %v4710 = vunpack.c.h.b16 %v4535
  %v4711 = vunpack.c.l.b16 %v4536
  %v4712 = vunpack.c.h.b16 %v4536
  %v4713 = vunpack.c.l.b16 %v4537
  %v4714 = vunpack.c.h.b16 %v4537
  %v4715 = vunpack.c.l.b16 %v4538
  %v4716 = vunpack.c.h.b16 %v4538
  %v4717 = vunpack.c.l.b16 %v4539
  %v4718 = vunpack.c.h.b16 %v4539
  %v4719 = vunpack.c.l.b16 %v4540
  %v4720 = vunpack.c.h.b16 %v4540
  %v4721 = vunpack.c.l.b16 %v4541
  %v4722 = vunpack.c.h.b16 %v4541
  %v4723 = vunpack.c.l.b16 %v4542
  %v4724 = vunpack.c.h.b16 %v4542
  %v4725 = vunpack.c.l.b16 %v4543
  %v4726 = vunpack.c.h.b16 %v4543
  %v4727 = vunpack.c.l.b16 %v4544
  %v4728 = vunpack.c.h.b16 %v4544
  %v4729 = vunpack.c.l.b16 %v4545
  %v4730 = vunpack.c.h.b16 %v4545
  %v4731 = vunpack.c.l.b16 %v4546
  %v4732 = vunpack.c.h.b16 %v4546
  %v4733 = vunpack.c.l.b16 %v4547
  %v4734 = vunpack.c.h.b16 %v4547
  %v4735 = vunpack.c.l.b16 %v4548
  %v4736 = vunpack.c.h.b16 %v4548
  %v4737 = vunpack.c.l.b16 %v4549
  %v4738 = vunpack.c.h.b16 %v4549
  %v4739 = vunpack.c.l.b16 %v4550
  %v4740 = vunpack.c.h.b16 %v4550
  %v4741 = vunpack.c.l.b16 %v4551
  %v4742 = vunpack.c.h.b16 %v4551
  %v4743 = vunpack.c.l.b16 %v4552
  %v4744 = vunpack.c.h.b16 %v4552
  %v4745 = vunpack.c.l.b16 %v4553
  %v4746 = vunpack.c.h.b16 %v4553
  %v4747 = vunpack.c.l.b16 %v4554
  %v4748 = vunpack.c.h.b16 %v4554
  %v4749 = vunpack.c.l.b16 %v4555
  %v4750 = vunpack.c.h.b16 %v4555
  %v4751 = vunpack.c.l.b16 %v4556
  %v4752 = vunpack.c.h.b16 %v4556
  %v4753 = vunpack.c.l.b16 %v4557
  %v4754 = vunpack.c.h.b16 %v4557
  %v4755 = vunpack.c.l.b16 %v4558
  %v4756 = vunpack.c.h.b16 %v4558
  %v4757 = vunpack.c.l.b16 %v4559
  %v4758 = vunpack.c.h.b16 %v4559
  %v4759 = vunpack.c.l.b16 %v4560
  %v4760 = vunpack.c.h.b16 %v4560
  %v4761 = vunpack.c.l.b16 %v4561
  %v4762 = vunpack.c.h.b16 %v4561
  %v4763 = vunpack.c.l.b16 %v4562
  %v4764 = vunpack.c.h.b16 %v4562
  %v4765 = vunpack.c.l.b16 %v4563
  %v4766 = vunpack.c.h.b16 %v4563
  %v4767 = vunpack.c.l.b16 %v4564
  %v4768 = vunpack.c.h.b16 %v4564
  %v4769 = vpack.c.b16 %v4643, %v4641
  %v4770 = vpack.c.b16 %v4644, %v4642
  %v4771 = vpack.c.b16 %v4647, %v4645
  %v4772 = vpack.c.b16 %v4648, %v4646
  %v4773 = vpack.c.b16 %v4651, %v4649
  %v4774 = vpack.c.b16 %v4652, %v4650
  %v4775 = vpack.c.b16 %v4655, %v4653
  %v4776 = vpack.c.b16 %v4656, %v4654
  %v4777 = vpack.c.b16 %v4659, %v4657
  %v4778 = vpack.c.b16 %v4660, %v4658
  %v4779 = vpack.c.b16 %v4663, %v4661
  %v4780 = vpack.c.b16 %v4664, %v4662
  %v4781 = vpack.c.b16 %v4667, %v4665
  %v4782 = vpack.c.b16 %v4668, %v4666
  %v4783 = vpack.c.b16 %v4671, %v4669
  %v4784 = vpack.c.b16 %v4672, %v4670
  %v4785 = vpack.c.b16 %v4675, %v4673
  %v4786 = vpack.c.b16 %v4676, %v4674
  %v4787 = vpack.c.b16 %v4679, %v4677
  %v4788 = vpack.c.b16 %v4680, %v4678
  %v4789 = vpack.c.b16 %v4683, %v4681
  %v4790 = vpack.c.b16 %v4684, %v4682
  %v4791 = vpack.c.b16 %v4687, %v4685
  %v4792 = vpack.c.b16 %v4688, %v4686
  %v4793 = vpack.c.b16 %v4691, %v4689
  %v4794 = vpack.c.b16 %v4692, %v4690
  %v4795 = vpack.c.b16 %v4695, %v4693
  %v4796 = vpack.c.b16 %v4696, %v4694
  %v4797 = vpack.c.b16 %v4699, %v4697
  %v4798 = vpack.c.b16 %v4700, %v4698
  %v4799 = vpack.c.b16 %v4703, %v4701
  %v4800 = vpack.c.b16 %v4704, %v4702
  %v4801 = vpack.c.b16 %v4707, %v4705
  %v4802 = vpack.c.b16 %v4708, %v4706
  %v4803 = vpack.c.b16 %v4711, %v4709
  %v4804 = vpack.c.b16 %v4712, %v4710
  %v4805 = vpack.c.b16 %v4715, %v4713
  %v4806 = vpack.c.b16 %v4716, %v4714
  %v4807 = vpack.c.b16 %v4719, %v4717
  %v4808 = vpack.c.b16 %v4720, %v4718
  %v4809 = vpack.c.b16 %v4723, %v4721
  %v4810 = vpack.c.b16 %v4724, %v4722
  %v4811 = vpack.c.b16 %v4727, %v4725
  %v4812 = vpack.c.b16 %v4728, %v4726
  %v4813 = vpack.c.b16 %v4731, %v4729
  %v4814 = vpack.c.b16 %v4732, %v4730
  %v4815 = vpack.c.b16 %v4735, %v4733
  %v4816 = vpack.c.b16 %v4736, %v4734
  %v4817 = vpack.c.b16 %v4739, %v4737
  %v4818 = vpack.c.b16 %v4740, %v4738
  %v4819 = vpack.c.b16 %v4743, %v4741
  %v4820 = vpack.c.b16 %v4744, %v4742
  %v4821 = vpack.c.b16 %v4747, %v4745
  %v4822 = vpack.c.b16 %v4748, %v4746
  %v4823 = vpack.c.b16 %v4751, %v4749
  %v4824 = vpack.c.b16 %v4752, %v4750
  %v4825 = vpack.c.b16 %v4755, %v4753
  %v4826 = vpack.c.b16 %v4756, %v4754
  %v4827 = vpack.c.b16 %v4759, %v4757
  %v4828 = vpack.c.b16 %v4760, %v4758
  %v4829 = vpack.c.b16 %v4763, %v4761
  %v4830 = vpack.c.b16 %v4764, %v4762
  %v4831 = vpack.c.b16 %v4767, %v4765
  %v4832 = vpack.c.b16 %v4768, %v4766
  %4897 = vmatprep.subr.bf16.mxu0 %v4770
  %4898 = vmatpush1.bf16.msra.mxu0 %v4769
  %4899 = vmatprep.subr.bf16.mxu0 %v4772
  %4900 = vmatpush1.bf16.msra.mxu0 %v4771
  %4901 = vmatprep.subr.bf16.mxu0 %v4774
  %4902 = vmatpush1.bf16.msra.mxu0 %v4773
  %4903 = vmatprep.subr.bf16.mxu0 %v4776
  %4904 = vmatpush1.bf16.msra.mxu0 %v4775
  %4905 = vmatprep.subr.bf16.mxu0 %v4778
  %4906 = vmatpush1.bf16.msra.mxu0 %v4777
  %4907 = vmatprep.subr.bf16.mxu0 %v4780
  %4908 = vmatpush1.bf16.msra.mxu0 %v4779
  %4909 = vmatprep.subr.bf16.mxu0 %v4782
  %4910 = vmatpush1.bf16.msra.mxu0 %v4781
  %4911 = vmatprep.subr.bf16.mxu0 %v4784
  %4912 = vmatpush1.bf16.msra.mxu0 %v4783
  %4913 = vmatprep.subr.bf16.mxu0 %v4786
  %4914 = vmatpush1.bf16.msra.mxu0 %v4785
  %4915 = vmatprep.subr.bf16.mxu0 %v4788
  %4916 = vmatpush1.bf16.msra.mxu0 %v4787
  %4917 = vmatprep.subr.bf16.mxu0 %v4790
  %4918 = vmatpush1.bf16.msra.mxu0 %v4789
  %4919 = vmatprep.subr.bf16.mxu0 %v4792
  %4920 = vmatpush1.bf16.msra.mxu0 %v4791
  %4921 = vmatprep.subr.bf16.mxu0 %v4794
  %4922 = vmatpush1.bf16.msra.mxu0 %v4793
  %4923 = vmatprep.subr.bf16.mxu0 %v4796
  %4924 = vmatpush1.bf16.msra.mxu0 %v4795
  %4925 = vmatprep.subr.bf16.mxu0 %v4798
  %4926 = vmatpush1.bf16.msra.mxu0 %v4797
  %4927 = vmatprep.subr.bf16.mxu0 %v4800
  %4928 = vmatpush1.bf16.msra.mxu0 %v4799
  %4929 = vmatprep.mubr.bf16.mxu0 %v3591
  %4930 = vmatmul.mubr.bf16.gmra.mrb[0].mxu0 %v3590
  %v4931 = vpop.f32.mrb[0].mxu0
  %v4932 = vadd.f32 %v4570, %v4931
  %v4933 = vpop.f32.mrb[0].mxu0
  %v4934 = vadd.f32 %v4574, %v4933
  %v4935 = vpop.f32.mrb[0].mxu0
  %v4936 = vpop.f32.mrb[0].mxu0
  %4937 = vdwg.mxu0
  %4938 = vmatprep.subr.bf16.mxu0 %v4802
  %4939 = vmatpush1.bf16.msra.mxu0 %v4801
  %4940 = vmatprep.subr.bf16.mxu0 %v4804
  %4941 = vmatpush1.bf16.msra.mxu0 %v4803
  %4942 = vmatprep.subr.bf16.mxu0 %v4806
  %4943 = vmatpush1.bf16.msra.mxu0 %v4805
  %4944 = vmatprep.subr.bf16.mxu0 %v4808
  %4945 = vmatpush1.bf16.msra.mxu0 %v4807
  %4946 = vmatprep.subr.bf16.mxu0 %v4810
  %4947 = vmatpush1.bf16.msra.mxu0 %v4809
  %4948 = vmatprep.subr.bf16.mxu0 %v4812
  %4949 = vmatpush1.bf16.msra.mxu0 %v4811
  %4950 = vmatprep.subr.bf16.mxu0 %v4814
  %4951 = vmatpush1.bf16.msra.mxu0 %v4813
  %4952 = vmatprep.subr.bf16.mxu0 %v4816
  %4953 = vmatpush1.bf16.msra.mxu0 %v4815
  %4954 = vmatprep.subr.bf16.mxu0 %v4818
  %4955 = vmatpush1.bf16.msra.mxu0 %v4817
  %4956 = vmatprep.subr.bf16.mxu0 %v4820
  %4957 = vmatpush1.bf16.msra.mxu0 %v4819
  %4958 = vmatprep.subr.bf16.mxu0 %v4822
  %4959 = vmatpush1.bf16.msra.mxu0 %v4821
  %4960 = vmatprep.subr.bf16.mxu0 %v4824
  %4961 = vmatpush1.bf16.msra.mxu0 %v4823
  %4962 = vmatprep.subr.bf16.mxu0 %v4826
  %4963 = vmatpush1.bf16.msra.mxu0 %v4825
  %4964 = vmatprep.subr.bf16.mxu0 %v4828
  %4965 = vmatpush1.bf16.msra.mxu0 %v4827
  %4966 = vmatprep.subr.bf16.mxu0 %v4830
  %4967 = vmatpush1.bf16.msra.mxu0 %v4829
  %4968 = vmatprep.subr.bf16.mxu0 %v4832
  %4969 = vmatpush1.bf16.msra.mxu0 %v4831
  %4970 = vmatprep.mubr.bf16.mxu0 %v3593
  %4971 = vmatmul.mubr.bf16.gmra.mrb[0].mxu0 %v3592
  %v4972 = vpop.f32.mrb[0].mxu0
  %v4973 = vadd.f32 %v4932, %v4972
  %v4974 = vpop.f32.mrb[0].mxu0
  %v4975 = vadd.f32 %v4934, %v4974
  %v4976 = vpop.f32.mrb[0].mxu0
  %v4977 = vpop.f32.mrb[0].mxu0
  %4978 = vdwg.mxu0
  %v4979 = vmax.f32 %v4973, 0.0
  %v4980 = vmax.f32 %v4975, 0.0
  %v4981 = vpack.c.bf16 %v4979, %v4979
  %v4982 = vpack.c.bf16 %v4980, %v4980
  %v4983 = vld [vmem:[%s13] sm:$0xf]
  %v4984 = vld [vmem:[%s13 + $0x4] sm:$0xf]
  %v4985 = vld [vmem:[%s13 + $0x8] sm:$0xf]
  %v4986 = vld [vmem:[%s13 + $0xc] sm:$0xf]
  %v4987 = vld [vmem:[%s13 + $0x10] sm:$0xf]
  %v4988 = vld [vmem:[%s13 + $0x14] sm:$0xf]
  %v4989 = vld [vmem:[%s13 + $0x18] sm:$0xf]
  %v4990 = vld [vmem:[%s13 + $0x1c] sm:$0xf]
  %v4991 = vld [vmem:[%s13 + $0x20] sm:$0xf]
  %v4992 = vld [vmem:[%s13 + $0x24] sm:$0xf]
  %v4993 = vld [vmem:[%s13 + $0x28] sm:$0xf]
  %v4994 = vld [vmem:[%s13 + $0x2c] sm:$0xf]
  %v4995 = vld [vmem:[%s13 + $0x30] sm:$0xf]
  %v4996 = vld [vmem:[%s13 + $0x34] sm:$0xf]
  %v4997 = vld [vmem:[%s13 + $0x38] sm:$0xf]
  %v4998 = vld [vmem:[%s13 + $0x3c] sm:$0xf]
  %v4999 = vld [vmem:[%s13 + $0x40] sm:$0xf]
  %v5000 = vld [vmem:[%s13 + $0x44] sm:$0xf]
  %v5001 = vld [vmem:[%s13 + $0x48] sm:$0xf]
  %v5002 = vld [vmem:[%s13 + $0x4c] sm:$0xf]
  %v5003 = vld [vmem:[%s13 + $0x50] sm:$0xf]
  %v5004 = vld [vmem:[%s13 + $0x54] sm:$0xf]
  %v5005 = vld [vmem:[%s13 + $0x58] sm:$0xf]
  %v5006 = vld [vmem:[%s13 + $0x5c] sm:$0xf]
  %v5007 = vld [vmem:[%s13 + $0x60] sm:$0xf]
  %v5008 = vld [vmem:[%s13 + $0x64] sm:$0xf]
  %v5009 = vld [vmem:[%s13 + $0x68] sm:$0xf]
  %v5010 = vld [vmem:[%s13 + $0x6c] sm:$0xf]
  %v5011 = vld [vmem:[%s13 + $0x70] sm:$0xf]
  %v5012 = vld [vmem:[%s13 + $0x74] sm:$0xf]
  %v5013 = vld [vmem:[%s13 + $0x78] sm:$0xf]
  %v5014 = vld [vmem:[%s13 + $0x7c] sm:$0xf]
  %v5015 = vld [vmem:[%s14] sm:$0x1]
  %v5017 = vlaneseq
  %v5018 = vshrl.u32 %v5017, 7
  %v5019 = vsub.s32 0, %v5018
  %v5020 = vrot.slane %v5015, %v5019
  %v5054 = vunpack.c.l.b16 %v4983
  %v5055 = vunpack.c.l.b16 %v4984
  %v5056 = vunpack.c.l.b16 %v4985
  %v5057 = vunpack.c.l.b16 %v4986
  %v5058 = vunpack.c.l.b16 %v4987
  %v5059 = vunpack.c.l.b16 %v4988
  %v5060 = vunpack.c.l.b16 %v4989
  %v5061 = vunpack.c.l.b16 %v4990
  %v5062 = vunpack.c.l.b16 %v4991
  %v5063 = vunpack.c.l.b16 %v4992
  %v5064 = vunpack.c.l.b16 %v4993
  %v5065 = vunpack.c.l.b16 %v4994
  %v5066 = vunpack.c.l.b16 %v4995
  %v5067 = vunpack.c.l.b16 %v4996
  %v5068 = vunpack.c.l.b16 %v4997
  %v5069 = vunpack.c.l.b16 %v4998
  %v5070 = vunpack.c.l.b16 %v4999
  %v5071 = vunpack.c.l.b16 %v5000
  %v5072 = vunpack.c.l.b16 %v5001
  %v5073 = vunpack.c.l.b16 %v5002
  %v5074 = vunpack.c.l.b16 %v5003
  %v5075 = vunpack.c.l.b16 %v5004
  %v5076 = vunpack.c.l.b16 %v5005
  %v5077 = vunpack.c.l.b16 %v5006
  %v5078 = vunpack.c.l.b16 %v5007
  %v5079 = vunpack.c.l.b16 %v5008
  %v5080 = vunpack.c.l.b16 %v5009
  %v5081 = vunpack.c.l.b16 %v5010
  %v5082 = vunpack.c.l.b16 %v5011
  %v5083 = vunpack.c.l.b16 %v5012
  %v5084 = vunpack.c.l.b16 %v5013
  %v5085 = vunpack.c.l.b16 %v5014
  %v5086 = vpack.c.b16 %v5055, %v5054
  %v5087 = vpack.c.b16 %v5057, %v5056
  %v5088 = vpack.c.b16 %v5059, %v5058
  %v5089 = vpack.c.b16 %v5061, %v5060
  %v5090 = vpack.c.b16 %v5063, %v5062
  %v5091 = vpack.c.b16 %v5065, %v5064
  %v5092 = vpack.c.b16 %v5067, %v5066
  %v5093 = vpack.c.b16 %v5069, %v5068
  %v5094 = vpack.c.b16 %v5071, %v5070
  %v5095 = vpack.c.b16 %v5073, %v5072
  %v5096 = vpack.c.b16 %v5075, %v5074
  %v5097 = vpack.c.b16 %v5077, %v5076
  %v5098 = vpack.c.b16 %v5079, %v5078
  %v5099 = vpack.c.b16 %v5081, %v5080
  %v5100 = vpack.c.b16 %v5083, %v5082
  %v5101 = vpack.c.b16 %v5085, %v5084
  %5118 = vmatprep.subr.bf16.mxu0 0
  %5119 = vmatpush1.bf16.msra.mxu0 %v5086
  %5120 = vmatprep.subr.bf16.mxu0 0
  %5121 = vmatpush1.bf16.msra.mxu0 %v5087
  %5122 = vmatprep.subr.bf16.mxu0 0
  %5123 = vmatpush1.bf16.msra.mxu0 %v5088
  %5124 = vmatprep.subr.bf16.mxu0 0
  %5125 = vmatpush1.bf16.msra.mxu0 %v5089
  %5126 = vmatprep.subr.bf16.mxu0 0
  %5127 = vmatpush1.bf16.msra.mxu0 %v5090
  %5128 = vmatprep.subr.bf16.mxu0 0
  %5129 = vmatpush1.bf16.msra.mxu0 %v5091
  %5130 = vmatprep.subr.bf16.mxu0 0
  %5131 = vmatpush1.bf16.msra.mxu0 %v5092
  %5132 = vmatprep.subr.bf16.mxu0 0
  %5133 = vmatpush1.bf16.msra.mxu0 %v5093
  %5134 = vmatprep.subr.bf16.mxu0 0
  %5135 = vmatpush1.bf16.msra.mxu0 %v5094
  %5136 = vmatprep.subr.bf16.mxu0 0
  %5137 = vmatpush1.bf16.msra.mxu0 %v5095
  %5138 = vmatprep.subr.bf16.mxu0 0
  %5139 = vmatpush1.bf16.msra.mxu0 %v5096
  %5140 = vmatprep.subr.bf16.mxu0 0
  %5141 = vmatpush1.bf16.msra.mxu0 %v5097
  %5142 = vmatprep.subr.bf16.mxu0 0
  %5143 = vmatpush1.bf16.msra.mxu0 %v5098
  %5144 = vmatprep.subr.bf16.mxu0 0
  %5145 = vmatpush1.bf16.msra.mxu0 %v5099
  %5146 = vmatprep.subr.bf16.mxu0 0
  %5147 = vmatpush1.bf16.msra.mxu0 %v5100
  %5148 = vmatprep.subr.bf16.mxu0 0
  %5149 = vmatpush1.bf16.msra.mxu0 %v5101
  %5150 = vmatprep.mubr.bf16.mxu0 %v4982
  %5151 = vmatmul.mubr.bf16.gmra.mrb[0].mxu0 %v4981
  %v5152 = vpop.f32.mrb[0].mxu0
  %v5153 = vadd.f32 %v5020, %v5152
  %v5154 = vpop.f32.mrb[0].mxu0
  %v5155 = vpop.f32.mrb[0].mxu0
  %v5156 = vpop.f32.mrb[0].mxu0
  %5157 = vdwg.mxu0
  %v5158 = vlaneseq
  %v5159 = vand.u32 %v5158, 127
  %vm5160 = vcmp.eq.s32.totalorder %v5159, 0
  %v5161 = vtanh.pop %v4500
  %v5162 = vxor.u32 %v4500, 2147483648
  %v5163 = vmul.f32 %v5162, 1.442695
  %v5164 = vpow.pop %v5163
  %v5165 = vadd.f32 %v5164, 1.0
  %v5166 = vrcp.pop %v5165
  %v5167 = vmul.f32 1.0, %v5166
  %v5168 = vsel %vm5160, %v5161, %v5167
  %vm5169 = vcmask 23552
  %5170 = vst.msk [vmem:[%s15] sm:$0xff] %vm5169, %v5168
  %v5171 = vmax.f32 %v5153, -20.0
  %v5172 = vmin.f32 %v5171, 2.0
  %v5173 = vmul.f32 %v5172, 1.442695
  %v5174 = vpow.pop %v5173
  %5175 = vst.msk [vmem:[%s16] sm:$0xff] %vm5169, %v5174
  // Predicated region
  $region62: #{policy_forward.3} parent=0 // pred_check
    _
  $region63: #{policy_forward.3} parent=0 // pred_check_branch
    %5177 = sbr.rel (0) target = $region65
  $region64: #{policy_forward.3} parent=0 // pred_region
    _
  $region65: #{policy_forward.3} parent=0 // pred_fallthru
    _
  // Predicated region
  $region66: #{policy_forward.3} parent=0 // pred_check
    _
  $region67: #{policy_forward.3} parent=0 // pred_check_branch
    %5179 = sbr.rel (0) target = $region69
  $region68: #{policy_forward.3} parent=0 // pred_region
    _
  $region69: #{policy_forward.3} parent=0 // pred_fallthru
    _
  // Predicated region
  $region70: #{policy_forward.3} parent=0 // pred_check
    _
  $region71: #{policy_forward.3} parent=0 // pred_check_branch
    %5181 = sbr.rel (0) target = $region73
  $region72: #{policy_forward.3} parent=0 // pred_region
    _
  $region73: #{policy_forward.3} parent=0 // pred_fallthru
    _
  // Predicated region
  $region74: #{policy_forward.3} parent=0 // pred_check
    _
  $region75: #{policy_forward.3} parent=0 // pred_check_branch
    %5183 = sbr.rel (0) target = $region77
  $region76: #{policy_forward.3} parent=0 // pred_region
    _
  $region77: #{policy_forward.3} parent=0 // pred_fallthru
    _

</llo_original>
